<compile_context>
chip_gen: v7x
topology: tpu7x:2x2x1
jax: 0.10.0
libtpu: 0.0.40
codegen_flags: <defaults>
</compile_context>

<pallas_src>
import functools

import jax
import jax.numpy as jnp
from jax.experimental import pallas as pl
from jax.experimental.pallas import tpu as pltpu


# ----------------------------------------------------------------------------
# Small, TPU-friendly config (same structure as the PyTorch Config, scaled down)
# ----------------------------------------------------------------------------
class Config:
    img_size = 32
    patch_size = 16
    num_patches = (img_size // patch_size) ** 2   # 4
    num_classes = 16
    embed_dim = 128
    num_heads = 4
    num_layers = 2
    hidden_dim = 256
    dropout_rate = 0.1                            # identity at inference


def _round_up(x, m):
    return (x + m - 1) // m * m


# ----------------------------------------------------------------------------
# The fused ViT kernel (one grid step == one image)
# ----------------------------------------------------------------------------
def _vit_kernel(xp_ref, base_ref, patch_w_ref,
                ln1_g_ref, ln1_b_ref, qkv_w_ref, qkv_b_ref,
                ln2_g_ref, ln2_b_ref, fc1_w_ref, fc1_b_ref,
                fc2_w_ref, fc2_b_ref,
                norm_g_ref, norm_b_ref, head_w_ref, head_b_ref,
                out_ref,
                *, num_layers, num_heads, seq_pad, seq_real, scale):
    f32 = jnp.float32
    bf16 = jnp.bfloat16

    def mm(a, w, b=None):
        # bf16 MXU operands, f32 accumulation.
        y = jnp.dot(a.astype(bf16), w.astype(bf16), preferred_element_type=f32)
        return y if b is None else y + b.astype(f32)

    def layer_norm(x, g, b):
        mu = jnp.mean(x, axis=-1, keepdims=True)
        var = jnp.mean(jnp.square(x - mu), axis=-1, keepdims=True)
        return (x - mu) * jax.lax.rsqrt(var + 1e-5) * g.astype(f32) + b.astype(f32)

    def gelu_tanh(x):
        # TODO(synk): PyTorch nn.GELU() is exact-erf; tanh approximation used
        # in-kernel (erf has no guaranteed Mosaic lowering), |diff| ~ 1e-3.
        c = 0.7978845608028654  # sqrt(2/pi)
        return 0.5 * x * (1.0 + jnp.tanh(c * (x + 0.044715 * x * x * x)))

    # ---- patch embedding; cls token, pos embedding and patch bias are
    #      pre-folded into `base` (padded rows of xp are zero).
    xp = xp_ref[0]                                              # (seq_pad, 3*P*P)
    x = base_ref[...] + mm(xp, patch_w_ref[...])                # (seq_pad, D) f32

    # key mask hiding the padded sequence positions
    col = jax.lax.broadcasted_iota(jnp.int32, (seq_pad, seq_pad), 1)
    key_mask = jnp.where(col < seq_real, 0.0, -1e30).astype(f32)

    D = x.shape[-1]
    dh = D // num_heads

    for l in range(num_layers):
        # ---------------- multi-head self attention ----------------
        x2 = layer_norm(x, ln1_g_ref[l], ln1_b_ref[l])
        qkv = mm(x2, qkv_w_ref[l], qkv_b_ref[l])                # (seq_pad, 3D)
        heads = []
        for h in range(num_heads):
            qh = qkv[:, h * dh:(h + 1) * dh]
            kh = qkv[:, D + h * dh:D + (h + 1) * dh]
            vh = qkv[:, 2 * D + h * dh:2 * D + (h + 1) * dh]
            # q @ k^T without an explicit transpose
            s = jax.lax.dot_general(
                qh.astype(bf16), kh.astype(bf16),
                dimension_numbers=(((1,), (1,)), ((), ())),
                preferred_element_type=f32) * scale
            s = s + key_mask
            s = s - jnp.max(s, axis=-1, keepdims=True)
            p = jnp.exp(s)
            p = p * pl.reciprocal(jnp.sum(p, axis=-1, keepdims=True), approx=True)
            heads.append(jnp.dot(p.astype(bf16), vh.astype(bf16),
                                 preferred_element_type=f32))
        x = x + jnp.concatenate(heads, axis=-1)                 # residual

        # ---------------- feed-forward network ----------------
        x2 = layer_norm(x, ln2_g_ref[l], ln2_b_ref[l])
        h1 = gelu_tanh(mm(x2, fc1_w_ref[l], fc1_b_ref[l]))
        x = x + mm(h1, fc2_w_ref[l], fc2_b_ref[l])              # residual

    # ---------------- final layer norm + classifier (cls row only) ----------
    xf = layer_norm(x, norm_g_ref[...], norm_b_ref[...])
    logits = mm(xf[0:1, :], head_w_ref[...], head_b_ref[...])   # (1, ncls_pad)
    out_ref[0] = logits.astype(out_ref.dtype)


# ----------------------------------------------------------------------------
# Forward pass: pure-layout glue + one pallas_call
# ----------------------------------------------------------------------------
def vit_forward(params, x, cfg):
    B = x.shape[0]
    P = cfg.patch_size
    Hp = cfg.img_size // P
    D = cfg.embed_dim
    NP = cfg.num_patches
    Hd = cfg.hidden_dim
    L = cfg.num_layers
    seq = 1 + NP
    seq_pad = _round_up(seq, 8)                     # sublane-aligned rows
    ncls_pad = _round_up(cfg.num_classes, 128)      # lane-dense head output
    bf16 = jnp.bfloat16
    PF = 3 * P * P

    # ---- patch extraction (matches Conv2d(k=P, s=P): patch vector ordered (C, kh, kw))
    xp = x.reshape(B, 3, Hp, P, Hp, P).transpose(0, 2, 4, 1, 3, 5)
    xp = xp.reshape(B, NP, PF).astype(jnp.float32)
    xp_pad = jnp.zeros((B, seq_pad, PF), jnp.float32).at[:, 1:1 + NP, :].set(xp)

    # ---- fold cls token, pos embedding and patch bias into "base" tokens
    pos = params['pos_embedding']                               # (seq, D)
    base = jnp.zeros((seq_pad, D), jnp.float32)
    base = base.at[0, :].set(params['cls_token'] + pos[0])
    base = base.at[1:1 + NP, :].set(pos[1:1 + NP] + params['patch_b'])
    # dropout after pos-embedding add -> identity (inference)

    # ---- stack per-layer weights; fuse q/k/v into one (D, 3D) GEMM weight
    blocks = params['blocks']
    stk = lambda k: jnp.stack([b[k] for b in blocks], axis=0)
    ln1_g = stk('ln1_g')[:, None, :]
    ln1_b = stk('ln1_b')[:, None, :]
    ln2_g = stk('ln2_g')[:, None, :]
    ln2_b = stk('ln2_b')[:, None, :]
    qkv_w = jnp.stack([jnp.concatenate([b['q_w'], b['k_w'], b['v_w']], axis=1)
                       for b in blocks], axis=0).astype(bf16)   # (L, D, 3D)
    qkv_b = jnp.stack([jnp.concatenate([b['q_b'], b['k_b'], b['v_b']], axis=0)
                       for b in blocks], axis=0)[:, None, :]    # (L, 1, 3D)
    fc1_w = stk('fc1_w').astype(bf16)                           # (L, D, Hd)
    fc1_b = stk('fc1_b')[:, None, :]
    fc2_w = stk('fc2_w').astype(bf16)                           # (L, Hd, D)
    fc2_b = stk('fc2_b')[:, None, :]

    patch_w = params['patch_w'].astype(bf16)                    # (3*P*P, D)
    norm_g = params['norm_g'][None, :]
    norm_b = params['norm_b'][None, :]
    head_w = jnp.zeros((D, ncls_pad), bf16).at[:, :cfg.num_classes].set(
        params['head_w'].astype(bf16))
    head_b = jnp.zeros((1, ncls_pad), jnp.float32).at[0, :cfg.num_classes].set(
        params['head_b'])

    kernel = functools.partial(
        _vit_kernel,
        num_layers=L, num_heads=cfg.num_heads,
        seq_pad=seq_pad, seq_real=seq,
        scale=float(D) ** -0.5,   # reference scales by embed_dim**-0.5 (not head_dim)
    )

    in_specs = [
        pl.BlockSpec((1, seq_pad, PF), lambda b: (b, 0, 0)),    # xp_pad (per image)
        pl.BlockSpec((seq_pad, D), lambda b: (0, 0)),           # base
        pl.BlockSpec((PF, D), lambda b: (0, 0)),                # patch_w
        pl.BlockSpec((L, 1, D), lambda b: (0, 0, 0)),           # ln1_g
        pl.BlockSpec((L, 1, D), lambda b: (0, 0, 0)),           # ln1_b
        pl.BlockSpec((L, D, 3 * D), lambda b: (0, 0, 0)),       # qkv_w
        pl.BlockSpec((L, 1, 3 * D), lambda b: (0, 0, 0)),       # qkv_b
        pl.BlockSpec((L, 1, D), lambda b: (0, 0, 0)),           # ln2_g
        pl.BlockSpec((L, 1, D), lambda b: (0, 0, 0)),           # ln2_b
        pl.BlockSpec((L, D, Hd), lambda b: (0, 0, 0)),          # fc1_w
        pl.BlockSpec((L, 1, Hd), lambda b: (0, 0, 0)),          # fc1_b
        pl.BlockSpec((L, Hd, D), lambda b: (0, 0, 0)),          # fc2_w
        pl.BlockSpec((L, 1, D), lambda b: (0, 0, 0)),           # fc2_b
        pl.BlockSpec((1, D), lambda b: (0, 0)),                 # norm_g
        pl.BlockSpec((1, D), lambda b: (0, 0)),                 # norm_b
        pl.BlockSpec((D, ncls_pad), lambda b: (0, 0)),          # head_w (padded)
        pl.BlockSpec((1, ncls_pad), lambda b: (0, 0)),          # head_b (padded)
    ]
    out_spec = pl.BlockSpec((1, 1, ncls_pad), lambda b: (b, 0, 0))

    logits_pad = pl.pallas_call(
        kernel,
        out_shape=jax.ShapeDtypeStruct((B, 1, ncls_pad), jnp.float32),
        grid=(B,),
        in_specs=in_specs,
        out_specs=out_spec,
        compiler_params=pltpu.CompilerParams(
            dimension_semantics=("parallel",)),    # batch axis -> both TCs on v7x
    )(xp_pad, base, patch_w,
      ln1_g, ln1_b, qkv_w, qkv_b, ln2_g, ln2_b,
      fc1_w, fc1_b, fc2_w, fc2_b,
      norm_g, norm_b, head_w, head_b)

    return logits_pad[:, 0, :cfg.num_classes]


# ----------------------------------------------------------------------------
# Deterministic parameter init (PyTorch-module-like structure)
# ----------------------------------------------------------------------------
def init_params(cfg, key):
    keys = iter(jax.random.split(key, 64))

    def w(shape, scale=0.02):
        return jax.random.normal(next(keys), shape, jnp.float32) * scale

    D, Hd, P = cfg.embed_dim, cfg.hidden_dim, cfg.patch_size
    params = {
        'patch_w': w((3 * P * P, D)),
        'patch_b': jnp.zeros((D,), jnp.float32),
        'cls_token': jnp.zeros((D,), jnp.float32),
        'pos_embedding': jax.random.normal(next(keys), (1 + cfg.num_patches, D),
                                           jnp.float32),
        'norm_g': jnp.ones((D,), jnp.float32),
        'norm_b': jnp.zeros((D,), jnp.float32),
        'head_w': w((D, cfg.num_classes)),
        'head_b': jnp.zeros((cfg.num_classes,), jnp.float32),
        'blocks': [],
    }
    for _ in range(cfg.num_layers):
        params['blocks'].append({
            'ln1_g': jnp.ones((D,), jnp.float32), 'ln1_b': jnp.zeros((D,), jnp.float32),
            'q_w': w((D, D)), 'q_b': jnp.zeros((D,), jnp.float32),
            'k_w': w((D, D)), 'k_b': jnp.zeros((D,), jnp.float32),
            'v_w': w((D, D)), 'v_b': jnp.zeros((D,), jnp.float32),
            'ln2_g': jnp.ones((D,), jnp.float32), 'ln2_b': jnp.zeros((D,), jnp.float32),
            'fc1_w': w((D, Hd)), 'fc1_b': jnp.zeros((Hd,), jnp.float32),
            'fc2_w': w((Hd, D)), 'fc2_b': jnp.zeros((D,), jnp.float32),
        })
    return params


# ----------------------------------------------------------------------------
if __name__ == "__main__":
    cfg = Config()
    key = jax.random.PRNGKey(0)
    k_param, k_x = jax.random.split(key)

    params = init_params(cfg, k_param)
    x = jax.random.normal(k_x, (2, 3, cfg.img_size, cfg.img_size), jnp.float32)

    fwd = jax.jit(functools.partial(vit_forward, cfg=cfg))
    logits = jax.block_until_ready(fwd(params, x))

    assert logits.shape == (2, cfg.num_classes), logits.shape
    assert bool(jnp.all(jnp.isfinite(logits)))
    print("KERNEL_OK")
</pallas_src>

<mosaic_0001>
module attributes {stable_mosaic.version = 11 : i64} {
  func.func @_vit_kernel(%arg0: i32, %arg1: memref<1x8x768xf32, #tpu.memory_space<vmem>>, %arg2: memref<8x128xf32, #tpu.memory_space<vmem>>, %arg3: memref<768x128xbf16, #tpu.memory_space<vmem>>, %arg4: memref<2x1x128xf32, #tpu.memory_space<vmem>>, %arg5: memref<2x1x128xf32, #tpu.memory_space<vmem>>, %arg6: memref<2x128x384xbf16, #tpu.memory_space<vmem>>, %arg7: memref<2x1x384xf32, #tpu.memory_space<vmem>>, %arg8: memref<2x1x128xf32, #tpu.memory_space<vmem>>, %arg9: memref<2x1x128xf32, #tpu.memory_space<vmem>>, %arg10: memref<2x128x256xbf16, #tpu.memory_space<vmem>>, %arg11: memref<2x1x256xf32, #tpu.memory_space<vmem>>, %arg12: memref<2x256x128xbf16, #tpu.memory_space<vmem>>, %arg13: memref<2x1x128xf32, #tpu.memory_space<vmem>>, %arg14: memref<1x128xf32, #tpu.memory_space<vmem>>, %arg15: memref<1x128xf32, #tpu.memory_space<vmem>>, %arg16: memref<128x128xbf16, #tpu.memory_space<vmem>>, %arg17: memref<1x128xf32, #tpu.memory_space<vmem>>, %arg18: memref<1x1x128xf32, #tpu.memory_space<vmem>>) attributes {dimension_semantics = [#tpu.dimension_semantics<parallel>], iteration_bounds = array<i64: 2>, scalar_prefetch = 0 : i64, scratch_operands = 0 : i64, tpu.core_type = #tpu.core_type<tc>, window_params = [{transform_indices = @transform_0, window_bounds = array<i64: 1, 8, 768>}, {pipeline_mode = #tpu.pipeline_mode<synchronous>, transform_indices = @transform_1, window_bounds = array<i64: 8, 128>}, {pipeline_mode = #tpu.pipeline_mode<synchronous>, transform_indices = @transform_2, window_bounds = array<i64: 768, 128>}, {pipeline_mode = #tpu.pipeline_mode<synchronous>, transform_indices = @transform_3, window_bounds = array<i64: 2, 1, 128>}, {pipeline_mode = #tpu.pipeline_mode<synchronous>, transform_indices = @transform_4, window_bounds = array<i64: 2, 1, 128>}, {pipeline_mode = #tpu.pipeline_mode<synchronous>, transform_indices = @transform_5, window_bounds = array<i64: 2, 128, 384>}, {pipeline_mode = #tpu.pipeline_mode<synchronous>, transform_indices = @transform_6, window_bounds = array<i64: 2, 1, 384>}, {pipeline_mode = #tpu.pipeline_mode<synchronous>, transform_indices = @transform_7, window_bounds = array<i64: 2, 1, 128>}, {pipeline_mode = #tpu.pipeline_mode<synchronous>, transform_indices = @transform_8, window_bounds = array<i64: 2, 1, 128>}, {pipeline_mode = #tpu.pipeline_mode<synchronous>, transform_indices = @transform_9, window_bounds = array<i64: 2, 128, 256>}, {pipeline_mode = #tpu.pipeline_mode<synchronous>, transform_indices = @transform_10, window_bounds = array<i64: 2, 1, 256>}, {pipeline_mode = #tpu.pipeline_mode<synchronous>, transform_indices = @transform_11, window_bounds = array<i64: 2, 256, 128>}, {pipeline_mode = #tpu.pipeline_mode<synchronous>, transform_indices = @transform_12, window_bounds = array<i64: 2, 1, 128>}, {pipeline_mode = #tpu.pipeline_mode<synchronous>, transform_indices = @transform_13, window_bounds = array<i64: 1, 128>}, {pipeline_mode = #tpu.pipeline_mode<synchronous>, transform_indices = @transform_14, window_bounds = array<i64: 1, 128>}, {pipeline_mode = #tpu.pipeline_mode<synchronous>, transform_indices = @transform_15, window_bounds = array<i64: 128, 128>}, {pipeline_mode = #tpu.pipeline_mode<synchronous>, transform_indices = @transform_16, window_bounds = array<i64: 1, 128>}, {transform_indices = @transform_17, window_bounds = array<i64: 1, 1, 128>}]} {
    %c0 = arith.constant 0 : index
    %c0_0 = arith.constant 0 : index
    %c0_1 = arith.constant 0 : index
    %0 = vector.load %arg1[%c0, %c0_0, %c0_1] : memref<1x8x768xf32, #tpu.memory_space<vmem>>, vector<1x8x768xf32>
    %1 = vector.shape_cast %0 : vector<1x8x768xf32> to vector<8x768xf32>
    %c0_2 = arith.constant 0 : index
    %c0_3 = arith.constant 0 : index
    %2 = vector.load %arg2[%c0_2, %c0_3] : memref<8x128xf32, #tpu.memory_space<vmem>>, vector<8x128xf32>
    %c0_4 = arith.constant 0 : index
    %c0_5 = arith.constant 0 : index
    %3 = vector.load %arg3[%c0_4, %c0_5] : memref<768x128xbf16, #tpu.memory_space<vmem>>, vector<768x128xbf16>
    %4 = arith.truncf %1 : vector<8x768xf32> to vector<8x768xbf16>
    %cst = arith.constant dense<0.000000e+00> : vector<8x128xf32>
    %5 = tpu.matmul %4, %3, %cst {dimension_numbers = #tpu.dot_dimension_numbers<[1], [0], [0], [1], [0, 0, 1, 1], [], []>} : vector<8x768xbf16>, vector<768x128xbf16>, vector<8x128xf32> -> vector<8x128xf32>
    %6 = arith.addf %2, %5 : vector<8x128xf32>
    %7 = tpu.iota {dimensions = array<i32: 1>} : vector<8x8xi32>
    %c5_i32 = arith.constant 5 : i32
    %8 = vector.broadcast %c5_i32 : i32 to vector<8x8xi32>
    %9 = arith.cmpi slt, %7, %8 : vector<8x8xi32>
    %cst_6 = arith.constant 0.000000e+00 : f32
    %cst_7 = arith.constant -1.000000e+30 : f32
    %10 = vector.broadcast %cst_6 : f32 to vector<8x8xf32>
    %11 = vector.broadcast %cst_7 : f32 to vector<8x8xf32>
    %12 = arith.select %9, %10, %11 : vector<8x8xi1>, vector<8x8xf32>
    %c0_8 = arith.constant 0 : index
    %c0_9 = arith.constant 0 : index
    %c0_10 = arith.constant 0 : index
    %13 = vector.load %arg4[%c0_8, %c0_9, %c0_10] : memref<2x1x128xf32, #tpu.memory_space<vmem>>, vector<1x1x128xf32>
    %14 = vector.shape_cast %13 : vector<1x1x128xf32> to vector<1x128xf32>
    %c0_11 = arith.constant 0 : index
    %c0_12 = arith.constant 0 : index
    %c0_13 = arith.constant 0 : index
    %15 = vector.load %arg5[%c0_11, %c0_12, %c0_13] : memref<2x1x128xf32, #tpu.memory_space<vmem>>, vector<1x1x128xf32>
    %16 = vector.shape_cast %15 : vector<1x1x128xf32> to vector<1x128xf32>
    %cst_14 = arith.constant dense<0.000000e+00> : vector<8xf32>
    %17 = vector.multi_reduction <add>, %6, %cst_14 [1] : vector<8x128xf32> to vector<8xf32>
    %18 = vector.shape_cast %17 : vector<8xf32> to vector<8x1xf32>
    %cst_15 = arith.constant 1.280000e+02 : f32
    %19 = vector.broadcast %cst_15 : f32 to vector<8x1xf32>
    %20 = arith.divf %18, %19 : vector<8x1xf32>
    %21 = vector.broadcast %20 : vector<8x1xf32> to vector<8x128xf32>
    %22 = arith.subf %6, %21 : vector<8x128xf32>
    %23 = arith.mulf %22, %22 : vector<8x128xf32>
    %cst_16 = arith.constant dense<0.000000e+00> : vector<8xf32>
    %24 = vector.multi_reduction <add>, %23, %cst_16 [1] : vector<8x128xf32> to vector<8xf32>
    %25 = vector.shape_cast %24 : vector<8xf32> to vector<8x1xf32>
    %cst_17 = arith.constant 1.280000e+02 : f32
    %26 = vector.broadcast %cst_17 : f32 to vector<8x1xf32>
    %27 = arith.divf %25, %26 : vector<8x1xf32>
    %28 = vector.broadcast %20 : vector<8x1xf32> to vector<8x128xf32>
    %29 = arith.subf %6, %28 : vector<8x128xf32>
    %cst_18 = arith.constant 9.99999974E-6 : f32
    %30 = vector.broadcast %cst_18 : f32 to vector<8x1xf32>
    %31 = arith.addf %27, %30 : vector<8x1xf32>
    %32 = math.rsqrt %31 : vector<8x1xf32>
    %33 = vector.broadcast %32 : vector<8x1xf32> to vector<8x128xf32>
    %34 = arith.mulf %29, %33 : vector<8x128xf32>
    %35 = vector.broadcast %14 : vector<1x128xf32> to vector<8x128xf32>
    %36 = arith.mulf %34, %35 : vector<8x128xf32>
    %37 = vector.broadcast %16 : vector<1x128xf32> to vector<8x128xf32>
    %38 = arith.addf %36, %37 : vector<8x128xf32>
    %c0_19 = arith.constant 0 : index
    %c0_20 = arith.constant 0 : index
    %c0_21 = arith.constant 0 : index
    %39 = vector.load %arg6[%c0_19, %c0_20, %c0_21] : memref<2x128x384xbf16, #tpu.memory_space<vmem>>, vector<1x128x384xbf16>
    %40 = vector.shape_cast %39 : vector<1x128x384xbf16> to vector<128x384xbf16>
    %c0_22 = arith.constant 0 : index
    %c0_23 = arith.constant 0 : index
    %c0_24 = arith.constant 0 : index
    %41 = vector.load %arg7[%c0_22, %c0_23, %c0_24] : memref<2x1x384xf32, #tpu.memory_space<vmem>>, vector<1x1x384xf32>
    %42 = vector.shape_cast %41 : vector<1x1x384xf32> to vector<1x384xf32>
    %43 = arith.truncf %38 : vector<8x128xf32> to vector<8x128xbf16>
    %cst_25 = arith.constant dense<0.000000e+00> : vector<8x384xf32>
    %44 = tpu.matmul %43, %40, %cst_25 {dimension_numbers = #tpu.dot_dimension_numbers<[1], [0], [0], [1], [0, 0, 1, 1], [], []>} : vector<8x128xbf16>, vector<128x384xbf16>, vector<8x384xf32> -> vector<8x384xf32>
    %45 = vector.broadcast %42 : vector<1x384xf32> to vector<8x384xf32>
    %46 = arith.addf %44, %45 : vector<8x384xf32>
    %47 = vector.extract_strided_slice %46 {offsets = [0, 0], sizes = [8, 32], strides = [1, 1]} : vector<8x384xf32> to vector<8x32xf32>
    %48 = vector.extract_strided_slice %46 {offsets = [0, 128], sizes = [8, 32], strides = [1, 1]} : vector<8x384xf32> to vector<8x32xf32>
    %49 = vector.extract_strided_slice %46 {offsets = [0, 256], sizes = [8, 32], strides = [1, 1]} : vector<8x384xf32> to vector<8x32xf32>
    %50 = arith.truncf %47 : vector<8x32xf32> to vector<8x32xbf16>
    %51 = arith.truncf %48 : vector<8x32xf32> to vector<8x32xbf16>
    %cst_26 = arith.constant dense<0.000000e+00> : vector<8x8xf32>
    %52 = tpu.matmul %50, %51, %cst_26 {dimension_numbers = #tpu.dot_dimension_numbers<[1], [1], [0], [0], [0, 0, 1, 0], [], []>} : vector<8x32xbf16>, vector<8x32xbf16>, vector<8x8xf32> -> vector<8x8xf32>
    %cst_27 = arith.constant 0.0883883461 : f32
    %53 = vector.broadcast %cst_27 : f32 to vector<8x8xf32>
    %54 = arith.mulf %52, %53 : vector<8x8xf32>
    %55 = arith.addf %54, %12 : vector<8x8xf32>
    %cst_28 = arith.constant dense<0xFF800000> : vector<8xf32>
    %56 = vector.multi_reduction <maximumf>, %55, %cst_28 [1] : vector<8x8xf32> to vector<8xf32>
    %57 = vector.shape_cast %56 : vector<8xf32> to vector<8x1xf32>
    %58 = vector.broadcast %57 : vector<8x1xf32> to vector<8x8xf32>
    %59 = arith.subf %55, %58 : vector<8x8xf32>
    %60 = math.exp %59 : vector<8x8xf32>
    %cst_29 = arith.constant dense<0.000000e+00> : vector<8xf32>
    %61 = vector.multi_reduction <add>, %60, %cst_29 [1] : vector<8x8xf32> to vector<8xf32>
    %62 = vector.shape_cast %61 : vector<8xf32> to vector<8x1xf32>
    %63 = tpu.reciprocal %62 {approx = true} : vector<8x1xf32> -> vector<8x1xf32>
    %64 = vector.broadcast %63 : vector<8x1xf32> to vector<8x8xf32>
    %65 = arith.mulf %60, %64 : vector<8x8xf32>
    %66 = arith.truncf %65 : vector<8x8xf32> to vector<8x8xbf16>
    %67 = arith.truncf %49 : vector<8x32xf32> to vector<8x32xbf16>
    %cst_30 = arith.constant dense<0.000000e+00> : vector<8x32xf32>
    %68 = tpu.matmul %66, %67, %cst_30 {dimension_numbers = #tpu.dot_dimension_numbers<[1], [0], [0], [1], [0, 0, 1, 1], [], []>} : vector<8x8xbf16>, vector<8x32xbf16>, vector<8x32xf32> -> vector<8x32xf32>
    %69 = vector.extract_strided_slice %46 {offsets = [0, 32], sizes = [8, 32], strides = [1, 1]} : vector<8x384xf32> to vector<8x32xf32>
    %70 = vector.extract_strided_slice %46 {offsets = [0, 160], sizes = [8, 32], strides = [1, 1]} : vector<8x384xf32> to vector<8x32xf32>
    %71 = vector.extract_strided_slice %46 {offsets = [0, 288], sizes = [8, 32], strides = [1, 1]} : vector<8x384xf32> to vector<8x32xf32>
    %72 = arith.truncf %69 : vector<8x32xf32> to vector<8x32xbf16>
    %73 = arith.truncf %70 : vector<8x32xf32> to vector<8x32xbf16>
    %cst_31 = arith.constant dense<0.000000e+00> : vector<8x8xf32>
    %74 = tpu.matmul %72, %73, %cst_31 {dimension_numbers = #tpu.dot_dimension_numbers<[1], [1], [0], [0], [0, 0, 1, 0], [], []>} : vector<8x32xbf16>, vector<8x32xbf16>, vector<8x8xf32> -> vector<8x8xf32>
    %cst_32 = arith.constant 0.0883883461 : f32
    %75 = vector.broadcast %cst_32 : f32 to vector<8x8xf32>
    %76 = arith.mulf %74, %75 : vector<8x8xf32>
    %77 = arith.addf %76, %12 : vector<8x8xf32>
    %cst_33 = arith.constant dense<0xFF800000> : vector<8xf32>
    %78 = vector.multi_reduction <maximumf>, %77, %cst_33 [1] : vector<8x8xf32> to vector<8xf32>
    %79 = vector.shape_cast %78 : vector<8xf32> to vector<8x1xf32>
    %80 = vector.broadcast %79 : vector<8x1xf32> to vector<8x8xf32>
    %81 = arith.subf %77, %80 : vector<8x8xf32>
    %82 = math.exp %81 : vector<8x8xf32>
    %cst_34 = arith.constant dense<0.000000e+00> : vector<8xf32>
    %83 = vector.multi_reduction <add>, %82, %cst_34 [1] : vector<8x8xf32> to vector<8xf32>
    %84 = vector.shape_cast %83 : vector<8xf32> to vector<8x1xf32>
    %85 = tpu.reciprocal %84 {approx = true} : vector<8x1xf32> -> vector<8x1xf32>
    %86 = vector.broadcast %85 : vector<8x1xf32> to vector<8x8xf32>
    %87 = arith.mulf %82, %86 : vector<8x8xf32>
    %88 = arith.truncf %87 : vector<8x8xf32> to vector<8x8xbf16>
    %89 = arith.truncf %71 : vector<8x32xf32> to vector<8x32xbf16>
    %cst_35 = arith.constant dense<0.000000e+00> : vector<8x32xf32>
    %90 = tpu.matmul %88, %89, %cst_35 {dimension_numbers = #tpu.dot_dimension_numbers<[1], [0], [0], [1], [0, 0, 1, 1], [], []>} : vector<8x8xbf16>, vector<8x32xbf16>, vector<8x32xf32> -> vector<8x32xf32>
    %91 = vector.extract_strided_slice %46 {offsets = [0, 64], sizes = [8, 32], strides = [1, 1]} : vector<8x384xf32> to vector<8x32xf32>
    %92 = vector.extract_strided_slice %46 {offsets = [0, 192], sizes = [8, 32], strides = [1, 1]} : vector<8x384xf32> to vector<8x32xf32>
    %93 = vector.extract_strided_slice %46 {offsets = [0, 320], sizes = [8, 32], strides = [1, 1]} : vector<8x384xf32> to vector<8x32xf32>
    %94 = arith.truncf %91 : vector<8x32xf32> to vector<8x32xbf16>
    %95 = arith.truncf %92 : vector<8x32xf32> to vector<8x32xbf16>
    %cst_36 = arith.constant dense<0.000000e+00> : vector<8x8xf32>
    %96 = tpu.matmul %94, %95, %cst_36 {dimension_numbers = #tpu.dot_dimension_numbers<[1], [1], [0], [0], [0, 0, 1, 0], [], []>} : vector<8x32xbf16>, vector<8x32xbf16>, vector<8x8xf32> -> vector<8x8xf32>
    %cst_37 = arith.constant 0.0883883461 : f32
    %97 = vector.broadcast %cst_37 : f32 to vector<8x8xf32>
    %98 = arith.mulf %96, %97 : vector<8x8xf32>
    %99 = arith.addf %98, %12 : vector<8x8xf32>
    %cst_38 = arith.constant dense<0xFF800000> : vector<8xf32>
    %100 = vector.multi_reduction <maximumf>, %99, %cst_38 [1] : vector<8x8xf32> to vector<8xf32>
    %101 = vector.shape_cast %100 : vector<8xf32> to vector<8x1xf32>
    %102 = vector.broadcast %101 : vector<8x1xf32> to vector<8x8xf32>
    %103 = arith.subf %99, %102 : vector<8x8xf32>
    %104 = math.exp %103 : vector<8x8xf32>
    %cst_39 = arith.constant dense<0.000000e+00> : vector<8xf32>
    %105 = vector.multi_reduction <add>, %104, %cst_39 [1] : vector<8x8xf32> to vector<8xf32>
    %106 = vector.shape_cast %105 : vector<8xf32> to vector<8x1xf32>
    %107 = tpu.reciprocal %106 {approx = true} : vector<8x1xf32> -> vector<8x1xf32>
    %108 = vector.broadcast %107 : vector<8x1xf32> to vector<8x8xf32>
    %109 = arith.mulf %104, %108 : vector<8x8xf32>
    %110 = arith.truncf %109 : vector<8x8xf32> to vector<8x8xbf16>
    %111 = arith.truncf %93 : vector<8x32xf32> to vector<8x32xbf16>
    %cst_40 = arith.constant dense<0.000000e+00> : vector<8x32xf32>
    %112 = tpu.matmul %110, %111, %cst_40 {dimension_numbers = #tpu.dot_dimension_numbers<[1], [0], [0], [1], [0, 0, 1, 1], [], []>} : vector<8x8xbf16>, vector<8x32xbf16>, vector<8x32xf32> -> vector<8x32xf32>
    %113 = vector.extract_strided_slice %46 {offsets = [0, 96], sizes = [8, 32], strides = [1, 1]} : vector<8x384xf32> to vector<8x32xf32>
    %114 = vector.extract_strided_slice %46 {offsets = [0, 224], sizes = [8, 32], strides = [1, 1]} : vector<8x384xf32> to vector<8x32xf32>
    %115 = vector.extract_strided_slice %46 {offsets = [0, 352], sizes = [8, 32], strides = [1, 1]} : vector<8x384xf32> to vector<8x32xf32>
    %116 = arith.truncf %113 : vector<8x32xf32> to vector<8x32xbf16>
    %117 = arith.truncf %114 : vector<8x32xf32> to vector<8x32xbf16>
    %cst_41 = arith.constant dense<0.000000e+00> : vector<8x8xf32>
    %118 = tpu.matmul %116, %117, %cst_41 {dimension_numbers = #tpu.dot_dimension_numbers<[1], [1], [0], [0], [0, 0, 1, 0], [], []>} : vector<8x32xbf16>, vector<8x32xbf16>, vector<8x8xf32> -> vector<8x8xf32>
    %cst_42 = arith.constant 0.0883883461 : f32
    %119 = vector.broadcast %cst_42 : f32 to vector<8x8xf32>
    %120 = arith.mulf %118, %119 : vector<8x8xf32>
    %121 = arith.addf %120, %12 : vector<8x8xf32>
    %cst_43 = arith.constant dense<0xFF800000> : vector<8xf32>
    %122 = vector.multi_reduction <maximumf>, %121, %cst_43 [1] : vector<8x8xf32> to vector<8xf32>
    %123 = vector.shape_cast %122 : vector<8xf32> to vector<8x1xf32>
    %124 = vector.broadcast %123 : vector<8x1xf32> to vector<8x8xf32>
    %125 = arith.subf %121, %124 : vector<8x8xf32>
    %126 = math.exp %125 : vector<8x8xf32>
    %cst_44 = arith.constant dense<0.000000e+00> : vector<8xf32>
    %127 = vector.multi_reduction <add>, %126, %cst_44 [1] : vector<8x8xf32> to vector<8xf32>
    %128 = vector.shape_cast %127 : vector<8xf32> to vector<8x1xf32>
    %129 = tpu.reciprocal %128 {approx = true} : vector<8x1xf32> -> vector<8x1xf32>
    %130 = vector.broadcast %129 : vector<8x1xf32> to vector<8x8xf32>
    %131 = arith.mulf %126, %130 : vector<8x8xf32>
    %132 = arith.truncf %131 : vector<8x8xf32> to vector<8x8xbf16>
    %133 = arith.truncf %115 : vector<8x32xf32> to vector<8x32xbf16>
    %cst_45 = arith.constant dense<0.000000e+00> : vector<8x32xf32>
    %134 = tpu.matmul %132, %133, %cst_45 {dimension_numbers = #tpu.dot_dimension_numbers<[1], [0], [0], [1], [0, 0, 1, 1], [], []>} : vector<8x8xbf16>, vector<8x32xbf16>, vector<8x32xf32> -> vector<8x32xf32>
    %135 = tpu.concatenate %68, %90, %112, %134 in 1 : vector<8x32xf32>, vector<8x32xf32>, vector<8x32xf32>, vector<8x32xf32> -> vector<8x128xf32>
    %136 = arith.addf %6, %135 : vector<8x128xf32>
    %c0_46 = arith.constant 0 : index
    %c0_47 = arith.constant 0 : index
    %c0_48 = arith.constant 0 : index
    %137 = vector.load %arg8[%c0_46, %c0_47, %c0_48] : memref<2x1x128xf32, #tpu.memory_space<vmem>>, vector<1x1x128xf32>
    %138 = vector.shape_cast %137 : vector<1x1x128xf32> to vector<1x128xf32>
    %c0_49 = arith.constant 0 : index
    %c0_50 = arith.constant 0 : index
    %c0_51 = arith.constant 0 : index
    %139 = vector.load %arg9[%c0_49, %c0_50, %c0_51] : memref<2x1x128xf32, #tpu.memory_space<vmem>>, vector<1x1x128xf32>
    %140 = vector.shape_cast %139 : vector<1x1x128xf32> to vector<1x128xf32>
    %cst_52 = arith.constant dense<0.000000e+00> : vector<8xf32>
    %141 = vector.multi_reduction <add>, %136, %cst_52 [1] : vector<8x128xf32> to vector<8xf32>
    %142 = vector.shape_cast %141 : vector<8xf32> to vector<8x1xf32>
    %cst_53 = arith.constant 1.280000e+02 : f32
    %143 = vector.broadcast %cst_53 : f32 to vector<8x1xf32>
    %144 = arith.divf %142, %143 : vector<8x1xf32>
    %145 = vector.broadcast %144 : vector<8x1xf32> to vector<8x128xf32>
    %146 = arith.subf %136, %145 : vector<8x128xf32>
    %147 = arith.mulf %146, %146 : vector<8x128xf32>
    %cst_54 = arith.constant dense<0.000000e+00> : vector<8xf32>
    %148 = vector.multi_reduction <add>, %147, %cst_54 [1] : vector<8x128xf32> to vector<8xf32>
    %149 = vector.shape_cast %148 : vector<8xf32> to vector<8x1xf32>
    %cst_55 = arith.constant 1.280000e+02 : f32
    %150 = vector.broadcast %cst_55 : f32 to vector<8x1xf32>
    %151 = arith.divf %149, %150 : vector<8x1xf32>
    %152 = vector.broadcast %144 : vector<8x1xf32> to vector<8x128xf32>
    %153 = arith.subf %136, %152 : vector<8x128xf32>
    %cst_56 = arith.constant 9.99999974E-6 : f32
    %154 = vector.broadcast %cst_56 : f32 to vector<8x1xf32>
    %155 = arith.addf %151, %154 : vector<8x1xf32>
    %156 = math.rsqrt %155 : vector<8x1xf32>
    %157 = vector.broadcast %156 : vector<8x1xf32> to vector<8x128xf32>
    %158 = arith.mulf %153, %157 : vector<8x128xf32>
    %159 = vector.broadcast %138 : vector<1x128xf32> to vector<8x128xf32>
    %160 = arith.mulf %158, %159 : vector<8x128xf32>
    %161 = vector.broadcast %140 : vector<1x128xf32> to vector<8x128xf32>
    %162 = arith.addf %160, %161 : vector<8x128xf32>
    %c0_57 = arith.constant 0 : index
    %c0_58 = arith.constant 0 : index
    %c0_59 = arith.constant 0 : index
    %163 = vector.load %arg10[%c0_57, %c0_58, %c0_59] : memref<2x128x256xbf16, #tpu.memory_space<vmem>>, vector<1x128x256xbf16>
    %164 = vector.shape_cast %163 : vector<1x128x256xbf16> to vector<128x256xbf16>
    %c0_60 = arith.constant 0 : index
    %c0_61 = arith.constant 0 : index
    %c0_62 = arith.constant 0 : index
    %165 = vector.load %arg11[%c0_60, %c0_61, %c0_62] : memref<2x1x256xf32, #tpu.memory_space<vmem>>, vector<1x1x256xf32>
    %166 = vector.shape_cast %165 : vector<1x1x256xf32> to vector<1x256xf32>
    %167 = arith.truncf %162 : vector<8x128xf32> to vector<8x128xbf16>
    %cst_63 = arith.constant dense<0.000000e+00> : vector<8x256xf32>
    %168 = tpu.matmul %167, %164, %cst_63 {dimension_numbers = #tpu.dot_dimension_numbers<[1], [0], [0], [1], [0, 0, 1, 1], [], []>} : vector<8x128xbf16>, vector<128x256xbf16>, vector<8x256xf32> -> vector<8x256xf32>
    %169 = vector.broadcast %166 : vector<1x256xf32> to vector<8x256xf32>
    %170 = arith.addf %168, %169 : vector<8x256xf32>
    %cst_64 = arith.constant 5.000000e-01 : f32
    %171 = vector.broadcast %cst_64 : f32 to vector<8x256xf32>
    %172 = arith.mulf %171, %170 : vector<8x256xf32>
    %cst_65 = arith.constant 4.471500e-02 : f32
    %173 = vector.broadcast %cst_65 : f32 to vector<8x256xf32>
    %174 = arith.mulf %173, %170 : vector<8x256xf32>
    %175 = arith.mulf %174, %170 : vector<8x256xf32>
    %176 = arith.mulf %175, %170 : vector<8x256xf32>
    %177 = arith.addf %170, %176 : vector<8x256xf32>
    %cst_66 = arith.constant 0.797884583 : f32
    %178 = vector.broadcast %cst_66 : f32 to vector<8x256xf32>
    %179 = arith.mulf %178, %177 : vector<8x256xf32>
    %180 = math.tanh %179 : vector<8x256xf32>
    %cst_67 = arith.constant 1.000000e+00 : f32
    %181 = vector.broadcast %cst_67 : f32 to vector<8x256xf32>
    %182 = arith.addf %181, %180 : vector<8x256xf32>
    %183 = arith.mulf %172, %182 : vector<8x256xf32>
    %c0_68 = arith.constant 0 : index
    %c0_69 = arith.constant 0 : index
    %c0_70 = arith.constant 0 : index
    %184 = vector.load %arg12[%c0_68, %c0_69, %c0_70] : memref<2x256x128xbf16, #tpu.memory_space<vmem>>, vector<1x256x128xbf16>
    %185 = vector.shape_cast %184 : vector<1x256x128xbf16> to vector<256x128xbf16>
    %c0_71 = arith.constant 0 : index
    %c0_72 = arith.constant 0 : index
    %c0_73 = arith.constant 0 : index
    %186 = vector.load %arg13[%c0_71, %c0_72, %c0_73] : memref<2x1x128xf32, #tpu.memory_space<vmem>>, vector<1x1x128xf32>
    %187 = vector.shape_cast %186 : vector<1x1x128xf32> to vector<1x128xf32>
    %188 = arith.truncf %183 : vector<8x256xf32> to vector<8x256xbf16>
    %cst_74 = arith.constant dense<0.000000e+00> : vector<8x128xf32>
    %189 = tpu.matmul %188, %185, %cst_74 {dimension_numbers = #tpu.dot_dimension_numbers<[1], [0], [0], [1], [0, 0, 1, 1], [], []>} : vector<8x256xbf16>, vector<256x128xbf16>, vector<8x128xf32> -> vector<8x128xf32>
    %190 = vector.broadcast %187 : vector<1x128xf32> to vector<8x128xf32>
    %191 = arith.addf %189, %190 : vector<8x128xf32>
    %192 = arith.addf %136, %191 : vector<8x128xf32>
    %c1 = arith.constant 1 : index
    %c0_75 = arith.constant 0 : index
    %c0_76 = arith.constant 0 : index
    %193 = vector.load %arg4[%c1, %c0_75, %c0_76] : memref<2x1x128xf32, #tpu.memory_space<vmem>>, vector<1x1x128xf32>
    %194 = vector.shape_cast %193 : vector<1x1x128xf32> to vector<1x128xf32>
    %c1_77 = arith.constant 1 : index
    %c0_78 = arith.constant 0 : index
    %c0_79 = arith.constant 0 : index
    %195 = vector.load %arg5[%c1_77, %c0_78, %c0_79] : memref<2x1x128xf32, #tpu.memory_space<vmem>>, vector<1x1x128xf32>
    %196 = vector.shape_cast %195 : vector<1x1x128xf32> to vector<1x128xf32>
    %cst_80 = arith.constant dense<0.000000e+00> : vector<8xf32>
    %197 = vector.multi_reduction <add>, %192, %cst_80 [1] : vector<8x128xf32> to vector<8xf32>
    %198 = vector.shape_cast %197 : vector<8xf32> to vector<8x1xf32>
    %cst_81 = arith.constant 1.280000e+02 : f32
    %199 = vector.broadcast %cst_81 : f32 to vector<8x1xf32>
    %200 = arith.divf %198, %199 : vector<8x1xf32>
    %201 = vector.broadcast %200 : vector<8x1xf32> to vector<8x128xf32>
    %202 = arith.subf %192, %201 : vector<8x128xf32>
    %203 = arith.mulf %202, %202 : vector<8x128xf32>
    %cst_82 = arith.constant dense<0.000000e+00> : vector<8xf32>
    %204 = vector.multi_reduction <add>, %203, %cst_82 [1] : vector<8x128xf32> to vector<8xf32>
    %205 = vector.shape_cast %204 : vector<8xf32> to vector<8x1xf32>
    %cst_83 = arith.constant 1.280000e+02 : f32
    %206 = vector.broadcast %cst_83 : f32 to vector<8x1xf32>
    %207 = arith.divf %205, %206 : vector<8x1xf32>
    %208 = vector.broadcast %200 : vector<8x1xf32> to vector<8x128xf32>
    %209 = arith.subf %192, %208 : vector<8x128xf32>
    %cst_84 = arith.constant 9.99999974E-6 : f32
    %210 = vector.broadcast %cst_84 : f32 to vector<8x1xf32>
    %211 = arith.addf %207, %210 : vector<8x1xf32>
    %212 = math.rsqrt %211 : vector<8x1xf32>
    %213 = vector.broadcast %212 : vector<8x1xf32> to vector<8x128xf32>
    %214 = arith.mulf %209, %213 : vector<8x128xf32>
    %215 = vector.broadcast %194 : vector<1x128xf32> to vector<8x128xf32>
    %216 = arith.mulf %214, %215 : vector<8x128xf32>
    %217 = vector.broadcast %196 : vector<1x128xf32> to vector<8x128xf32>
    %218 = arith.addf %216, %217 : vector<8x128xf32>
    %c1_85 = arith.constant 1 : index
    %c0_86 = arith.constant 0 : index
    %c0_87 = arith.constant 0 : index
    %219 = vector.load %arg6[%c1_85, %c0_86, %c0_87] : memref<2x128x384xbf16, #tpu.memory_space<vmem>>, vector<1x128x384xbf16>
    %220 = vector.shape_cast %219 : vector<1x128x384xbf16> to vector<128x384xbf16>
    %c1_88 = arith.constant 1 : index
    %c0_89 = arith.constant 0 : index
    %c0_90 = arith.constant 0 : index
    %221 = vector.load %arg7[%c1_88, %c0_89, %c0_90] : memref<2x1x384xf32, #tpu.memory_space<vmem>>, vector<1x1x384xf32>
    %222 = vector.shape_cast %221 : vector<1x1x384xf32> to vector<1x384xf32>
    %223 = arith.truncf %218 : vector<8x128xf32> to vector<8x128xbf16>
    %cst_91 = arith.constant dense<0.000000e+00> : vector<8x384xf32>
    %224 = tpu.matmul %223, %220, %cst_91 {dimension_numbers = #tpu.dot_dimension_numbers<[1], [0], [0], [1], [0, 0, 1, 1], [], []>} : vector<8x128xbf16>, vector<128x384xbf16>, vector<8x384xf32> -> vector<8x384xf32>
    %225 = vector.broadcast %222 : vector<1x384xf32> to vector<8x384xf32>
    %226 = arith.addf %224, %225 : vector<8x384xf32>
    %227 = vector.extract_strided_slice %226 {offsets = [0, 0], sizes = [8, 32], strides = [1, 1]} : vector<8x384xf32> to vector<8x32xf32>
    %228 = vector.extract_strided_slice %226 {offsets = [0, 128], sizes = [8, 32], strides = [1, 1]} : vector<8x384xf32> to vector<8x32xf32>
    %229 = vector.extract_strided_slice %226 {offsets = [0, 256], sizes = [8, 32], strides = [1, 1]} : vector<8x384xf32> to vector<8x32xf32>
    %230 = arith.truncf %227 : vector<8x32xf32> to vector<8x32xbf16>
    %231 = arith.truncf %228 : vector<8x32xf32> to vector<8x32xbf16>
    %cst_92 = arith.constant dense<0.000000e+00> : vector<8x8xf32>
    %232 = tpu.matmul %230, %231, %cst_92 {dimension_numbers = #tpu.dot_dimension_numbers<[1], [1], [0], [0], [0, 0, 1, 0], [], []>} : vector<8x32xbf16>, vector<8x32xbf16>, vector<8x8xf32> -> vector<8x8xf32>
    %cst_93 = arith.constant 0.0883883461 : f32
    %233 = vector.broadcast %cst_93 : f32 to vector<8x8xf32>
    %234 = arith.mulf %232, %233 : vector<8x8xf32>
    %235 = arith.addf %234, %12 : vector<8x8xf32>
    %cst_94 = arith.constant dense<0xFF800000> : vector<8xf32>
    %236 = vector.multi_reduction <maximumf>, %235, %cst_94 [1] : vector<8x8xf32> to vector<8xf32>
    %237 = vector.shape_cast %236 : vector<8xf32> to vector<8x1xf32>
    %238 = vector.broadcast %237 : vector<8x1xf32> to vector<8x8xf32>
    %239 = arith.subf %235, %238 : vector<8x8xf32>
    %240 = math.exp %239 : vector<8x8xf32>
    %cst_95 = arith.constant dense<0.000000e+00> : vector<8xf32>
    %241 = vector.multi_reduction <add>, %240, %cst_95 [1] : vector<8x8xf32> to vector<8xf32>
    %242 = vector.shape_cast %241 : vector<8xf32> to vector<8x1xf32>
    %243 = tpu.reciprocal %242 {approx = true} : vector<8x1xf32> -> vector<8x1xf32>
    %244 = vector.broadcast %243 : vector<8x1xf32> to vector<8x8xf32>
    %245 = arith.mulf %240, %244 : vector<8x8xf32>
    %246 = arith.truncf %245 : vector<8x8xf32> to vector<8x8xbf16>
    %247 = arith.truncf %229 : vector<8x32xf32> to vector<8x32xbf16>
    %cst_96 = arith.constant dense<0.000000e+00> : vector<8x32xf32>
    %248 = tpu.matmul %246, %247, %cst_96 {dimension_numbers = #tpu.dot_dimension_numbers<[1], [0], [0], [1], [0, 0, 1, 1], [], []>} : vector<8x8xbf16>, vector<8x32xbf16>, vector<8x32xf32> -> vector<8x32xf32>
    %249 = vector.extract_strided_slice %226 {offsets = [0, 32], sizes = [8, 32], strides = [1, 1]} : vector<8x384xf32> to vector<8x32xf32>
    %250 = vector.extract_strided_slice %226 {offsets = [0, 160], sizes = [8, 32], strides = [1, 1]} : vector<8x384xf32> to vector<8x32xf32>
    %251 = vector.extract_strided_slice %226 {offsets = [0, 288], sizes = [8, 32], strides = [1, 1]} : vector<8x384xf32> to vector<8x32xf32>
    %252 = arith.truncf %249 : vector<8x32xf32> to vector<8x32xbf16>
    %253 = arith.truncf %250 : vector<8x32xf32> to vector<8x32xbf16>
    %cst_97 = arith.constant dense<0.000000e+00> : vector<8x8xf32>
    %254 = tpu.matmul %252, %253, %cst_97 {dimension_numbers = #tpu.dot_dimension_numbers<[1], [1], [0], [0], [0, 0, 1, 0], [], []>} : vector<8x32xbf16>, vector<8x32xbf16>, vector<8x8xf32> -> vector<8x8xf32>
    %cst_98 = arith.constant 0.0883883461 : f32
    %255 = vector.broadcast %cst_98 : f32 to vector<8x8xf32>
    %256 = arith.mulf %254, %255 : vector<8x8xf32>
    %257 = arith.addf %256, %12 : vector<8x8xf32>
    %cst_99 = arith.constant dense<0xFF800000> : vector<8xf32>
    %258 = vector.multi_reduction <maximumf>, %257, %cst_99 [1] : vector<8x8xf32> to vector<8xf32>
    %259 = vector.shape_cast %258 : vector<8xf32> to vector<8x1xf32>
    %260 = vector.broadcast %259 : vector<8x1xf32> to vector<8x8xf32>
    %261 = arith.subf %257, %260 : vector<8x8xf32>
    %262 = math.exp %261 : vector<8x8xf32>
    %cst_100 = arith.constant dense<0.000000e+00> : vector<8xf32>
    %263 = vector.multi_reduction <add>, %262, %cst_100 [1] : vector<8x8xf32> to vector<8xf32>
    %264 = vector.shape_cast %263 : vector<8xf32> to vector<8x1xf32>
    %265 = tpu.reciprocal %264 {approx = true} : vector<8x1xf32> -> vector<8x1xf32>
    %266 = vector.broadcast %265 : vector<8x1xf32> to vector<8x8xf32>
    %267 = arith.mulf %262, %266 : vector<8x8xf32>
    %268 = arith.truncf %267 : vector<8x8xf32> to vector<8x8xbf16>
    %269 = arith.truncf %251 : vector<8x32xf32> to vector<8x32xbf16>
    %cst_101 = arith.constant dense<0.000000e+00> : vector<8x32xf32>
    %270 = tpu.matmul %268, %269, %cst_101 {dimension_numbers = #tpu.dot_dimension_numbers<[1], [0], [0], [1], [0, 0, 1, 1], [], []>} : vector<8x8xbf16>, vector<8x32xbf16>, vector<8x32xf32> -> vector<8x32xf32>
    %271 = vector.extract_strided_slice %226 {offsets = [0, 64], sizes = [8, 32], strides = [1, 1]} : vector<8x384xf32> to vector<8x32xf32>
    %272 = vector.extract_strided_slice %226 {offsets = [0, 192], sizes = [8, 32], strides = [1, 1]} : vector<8x384xf32> to vector<8x32xf32>
    %273 = vector.extract_strided_slice %226 {offsets = [0, 320], sizes = [8, 32], strides = [1, 1]} : vector<8x384xf32> to vector<8x32xf32>
    %274 = arith.truncf %271 : vector<8x32xf32> to vector<8x32xbf16>
    %275 = arith.truncf %272 : vector<8x32xf32> to vector<8x32xbf16>
    %cst_102 = arith.constant dense<0.000000e+00> : vector<8x8xf32>
    %276 = tpu.matmul %274, %275, %cst_102 {dimension_numbers = #tpu.dot_dimension_numbers<[1], [1], [0], [0], [0, 0, 1, 0], [], []>} : vector<8x32xbf16>, vector<8x32xbf16>, vector<8x8xf32> -> vector<8x8xf32>
    %cst_103 = arith.constant 0.0883883461 : f32
    %277 = vector.broadcast %cst_103 : f32 to vector<8x8xf32>
    %278 = arith.mulf %276, %277 : vector<8x8xf32>
    %279 = arith.addf %278, %12 : vector<8x8xf32>
    %cst_104 = arith.constant dense<0xFF800000> : vector<8xf32>
    %280 = vector.multi_reduction <maximumf>, %279, %cst_104 [1] : vector<8x8xf32> to vector<8xf32>
    %281 = vector.shape_cast %280 : vector<8xf32> to vector<8x1xf32>
    %282 = vector.broadcast %281 : vector<8x1xf32> to vector<8x8xf32>
    %283 = arith.subf %279, %282 : vector<8x8xf32>
    %284 = math.exp %283 : vector<8x8xf32>
    %cst_105 = arith.constant dense<0.000000e+00> : vector<8xf32>
    %285 = vector.multi_reduction <add>, %284, %cst_105 [1] : vector<8x8xf32> to vector<8xf32>
    %286 = vector.shape_cast %285 : vector<8xf32> to vector<8x1xf32>
    %287 = tpu.reciprocal %286 {approx = true} : vector<8x1xf32> -> vector<8x1xf32>
    %288 = vector.broadcast %287 : vector<8x1xf32> to vector<8x8xf32>
    %289 = arith.mulf %284, %288 : vector<8x8xf32>
    %290 = arith.truncf %289 : vector<8x8xf32> to vector<8x8xbf16>
    %291 = arith.truncf %273 : vector<8x32xf32> to vector<8x32xbf16>
    %cst_106 = arith.constant dense<0.000000e+00> : vector<8x32xf32>
    %292 = tpu.matmul %290, %291, %cst_106 {dimension_numbers = #tpu.dot_dimension_numbers<[1], [0], [0], [1], [0, 0, 1, 1], [], []>} : vector<8x8xbf16>, vector<8x32xbf16>, vector<8x32xf32> -> vector<8x32xf32>
    %293 = vector.extract_strided_slice %226 {offsets = [0, 96], sizes = [8, 32], strides = [1, 1]} : vector<8x384xf32> to vector<8x32xf32>
    %294 = vector.extract_strided_slice %226 {offsets = [0, 224], sizes = [8, 32], strides = [1, 1]} : vector<8x384xf32> to vector<8x32xf32>
    %295 = vector.extract_strided_slice %226 {offsets = [0, 352], sizes = [8, 32], strides = [1, 1]} : vector<8x384xf32> to vector<8x32xf32>
    %296 = arith.truncf %293 : vector<8x32xf32> to vector<8x32xbf16>
    %297 = arith.truncf %294 : vector<8x32xf32> to vector<8x32xbf16>
    %cst_107 = arith.constant dense<0.000000e+00> : vector<8x8xf32>
    %298 = tpu.matmul %296, %297, %cst_107 {dimension_numbers = #tpu.dot_dimension_numbers<[1], [1], [0], [0], [0, 0, 1, 0], [], []>} : vector<8x32xbf16>, vector<8x32xbf16>, vector<8x8xf32> -> vector<8x8xf32>
    %cst_108 = arith.constant 0.0883883461 : f32
    %299 = vector.broadcast %cst_108 : f32 to vector<8x8xf32>
    %300 = arith.mulf %298, %299 : vector<8x8xf32>
    %301 = arith.addf %300, %12 : vector<8x8xf32>
    %cst_109 = arith.constant dense<0xFF800000> : vector<8xf32>
    %302 = vector.multi_reduction <maximumf>, %301, %cst_109 [1] : vector<8x8xf32> to vector<8xf32>
    %303 = vector.shape_cast %302 : vector<8xf32> to vector<8x1xf32>
    %304 = vector.broadcast %303 : vector<8x1xf32> to vector<8x8xf32>
    %305 = arith.subf %301, %304 : vector<8x8xf32>
    %306 = math.exp %305 : vector<8x8xf32>
    %cst_110 = arith.constant dense<0.000000e+00> : vector<8xf32>
    %307 = vector.multi_reduction <add>, %306, %cst_110 [1] : vector<8x8xf32> to vector<8xf32>
    %308 = vector.shape_cast %307 : vector<8xf32> to vector<8x1xf32>
    %309 = tpu.reciprocal %308 {approx = true} : vector<8x1xf32> -> vector<8x1xf32>
    %310 = vector.broadcast %309 : vector<8x1xf32> to vector<8x8xf32>
    %311 = arith.mulf %306, %310 : vector<8x8xf32>
    %312 = arith.truncf %311 : vector<8x8xf32> to vector<8x8xbf16>
    %313 = arith.truncf %295 : vector<8x32xf32> to vector<8x32xbf16>
    %cst_111 = arith.constant dense<0.000000e+00> : vector<8x32xf32>
    %314 = tpu.matmul %312, %313, %cst_111 {dimension_numbers = #tpu.dot_dimension_numbers<[1], [0], [0], [1], [0, 0, 1, 1], [], []>} : vector<8x8xbf16>, vector<8x32xbf16>, vector<8x32xf32> -> vector<8x32xf32>
    %315 = tpu.concatenate %248, %270, %292, %314 in 1 : vector<8x32xf32>, vector<8x32xf32>, vector<8x32xf32>, vector<8x32xf32> -> vector<8x128xf32>
    %316 = arith.addf %192, %315 : vector<8x128xf32>
    %c1_112 = arith.constant 1 : index
    %c0_113 = arith.constant 0 : index
    %c0_114 = arith.constant 0 : index
    %317 = vector.load %arg8[%c1_112, %c0_113, %c0_114] : memref<2x1x128xf32, #tpu.memory_space<vmem>>, vector<1x1x128xf32>
    %318 = vector.shape_cast %317 : vector<1x1x128xf32> to vector<1x128xf32>
    %c1_115 = arith.constant 1 : index
    %c0_116 = arith.constant 0 : index
    %c0_117 = arith.constant 0 : index
    %319 = vector.load %arg9[%c1_115, %c0_116, %c0_117] : memref<2x1x128xf32, #tpu.memory_space<vmem>>, vector<1x1x128xf32>
    %320 = vector.shape_cast %319 : vector<1x1x128xf32> to vector<1x128xf32>
    %cst_118 = arith.constant dense<0.000000e+00> : vector<8xf32>
    %321 = vector.multi_reduction <add>, %316, %cst_118 [1] : vector<8x128xf32> to vector<8xf32>
    %322 = vector.shape_cast %321 : vector<8xf32> to vector<8x1xf32>
    %cst_119 = arith.constant 1.280000e+02 : f32
    %323 = vector.broadcast %cst_119 : f32 to vector<8x1xf32>
    %324 = arith.divf %322, %323 : vector<8x1xf32>
    %325 = vector.broadcast %324 : vector<8x1xf32> to vector<8x128xf32>
    %326 = arith.subf %316, %325 : vector<8x128xf32>
    %327 = arith.mulf %326, %326 : vector<8x128xf32>
    %cst_120 = arith.constant dense<0.000000e+00> : vector<8xf32>
    %328 = vector.multi_reduction <add>, %327, %cst_120 [1] : vector<8x128xf32> to vector<8xf32>
    %329 = vector.shape_cast %328 : vector<8xf32> to vector<8x1xf32>
    %cst_121 = arith.constant 1.280000e+02 : f32
    %330 = vector.broadcast %cst_121 : f32 to vector<8x1xf32>
    %331 = arith.divf %329, %330 : vector<8x1xf32>
    %332 = vector.broadcast %324 : vector<8x1xf32> to vector<8x128xf32>
    %333 = arith.subf %316, %332 : vector<8x128xf32>
    %cst_122 = arith.constant 9.99999974E-6 : f32
    %334 = vector.broadcast %cst_122 : f32 to vector<8x1xf32>
    %335 = arith.addf %331, %334 : vector<8x1xf32>
    %336 = math.rsqrt %335 : vector<8x1xf32>
    %337 = vector.broadcast %336 : vector<8x1xf32> to vector<8x128xf32>
    %338 = arith.mulf %333, %337 : vector<8x128xf32>
    %339 = vector.broadcast %318 : vector<1x128xf32> to vector<8x128xf32>
    %340 = arith.mulf %338, %339 : vector<8x128xf32>
    %341 = vector.broadcast %320 : vector<1x128xf32> to vector<8x128xf32>
    %342 = arith.addf %340, %341 : vector<8x128xf32>
    %c1_123 = arith.constant 1 : index
    %c0_124 = arith.constant 0 : index
    %c0_125 = arith.constant 0 : index
    %343 = vector.load %arg10[%c1_123, %c0_124, %c0_125] : memref<2x128x256xbf16, #tpu.memory_space<vmem>>, vector<1x128x256xbf16>
    %344 = vector.shape_cast %343 : vector<1x128x256xbf16> to vector<128x256xbf16>
    %c1_126 = arith.constant 1 : index
    %c0_127 = arith.constant 0 : index
    %c0_128 = arith.constant 0 : index
    %345 = vector.load %arg11[%c1_126, %c0_127, %c0_128] : memref<2x1x256xf32, #tpu.memory_space<vmem>>, vector<1x1x256xf32>
    %346 = vector.shape_cast %345 : vector<1x1x256xf32> to vector<1x256xf32>
    %347 = arith.truncf %342 : vector<8x128xf32> to vector<8x128xbf16>
    %cst_129 = arith.constant dense<0.000000e+00> : vector<8x256xf32>
    %348 = tpu.matmul %347, %344, %cst_129 {dimension_numbers = #tpu.dot_dimension_numbers<[1], [0], [0], [1], [0, 0, 1, 1], [], []>} : vector<8x128xbf16>, vector<128x256xbf16>, vector<8x256xf32> -> vector<8x256xf32>
    %349 = vector.broadcast %346 : vector<1x256xf32> to vector<8x256xf32>
    %350 = arith.addf %348, %349 : vector<8x256xf32>
    %cst_130 = arith.constant 5.000000e-01 : f32
    %351 = vector.broadcast %cst_130 : f32 to vector<8x256xf32>
    %352 = arith.mulf %351, %350 : vector<8x256xf32>
    %cst_131 = arith.constant 4.471500e-02 : f32
    %353 = vector.broadcast %cst_131 : f32 to vector<8x256xf32>
    %354 = arith.mulf %353, %350 : vector<8x256xf32>
    %355 = arith.mulf %354, %350 : vector<8x256xf32>
    %356 = arith.mulf %355, %350 : vector<8x256xf32>
    %357 = arith.addf %350, %356 : vector<8x256xf32>
    %cst_132 = arith.constant 0.797884583 : f32
    %358 = vector.broadcast %cst_132 : f32 to vector<8x256xf32>
    %359 = arith.mulf %358, %357 : vector<8x256xf32>
    %360 = math.tanh %359 : vector<8x256xf32>
    %cst_133 = arith.constant 1.000000e+00 : f32
    %361 = vector.broadcast %cst_133 : f32 to vector<8x256xf32>
    %362 = arith.addf %361, %360 : vector<8x256xf32>
    %363 = arith.mulf %352, %362 : vector<8x256xf32>
    %c1_134 = arith.constant 1 : index
    %c0_135 = arith.constant 0 : index
    %c0_136 = arith.constant 0 : index
    %364 = vector.load %arg12[%c1_134, %c0_135, %c0_136] : memref<2x256x128xbf16, #tpu.memory_space<vmem>>, vector<1x256x128xbf16>
    %365 = vector.shape_cast %364 : vector<1x256x128xbf16> to vector<256x128xbf16>
    %c1_137 = arith.constant 1 : index
    %c0_138 = arith.constant 0 : index
    %c0_139 = arith.constant 0 : index
    %366 = vector.load %arg13[%c1_137, %c0_138, %c0_139] : memref<2x1x128xf32, #tpu.memory_space<vmem>>, vector<1x1x128xf32>
    %367 = vector.shape_cast %366 : vector<1x1x128xf32> to vector<1x128xf32>
    %368 = arith.truncf %363 : vector<8x256xf32> to vector<8x256xbf16>
    %cst_140 = arith.constant dense<0.000000e+00> : vector<8x128xf32>
    %369 = tpu.matmul %368, %365, %cst_140 {dimension_numbers = #tpu.dot_dimension_numbers<[1], [0], [0], [1], [0, 0, 1, 1], [], []>} : vector<8x256xbf16>, vector<256x128xbf16>, vector<8x128xf32> -> vector<8x128xf32>
    %370 = vector.broadcast %367 : vector<1x128xf32> to vector<8x128xf32>
    %371 = arith.addf %369, %370 : vector<8x128xf32>
    %372 = arith.addf %316, %371 : vector<8x128xf32>
    %c0_141 = arith.constant 0 : index
    %c0_142 = arith.constant 0 : index
    %373 = vector.load %arg14[%c0_141, %c0_142] : memref<1x128xf32, #tpu.memory_space<vmem>>, vector<1x128xf32>
    %c0_143 = arith.constant 0 : index
    %c0_144 = arith.constant 0 : index
    %374 = vector.load %arg15[%c0_143, %c0_144] : memref<1x128xf32, #tpu.memory_space<vmem>>, vector<1x128xf32>
    %cst_145 = arith.constant dense<0.000000e+00> : vector<8xf32>
    %375 = vector.multi_reduction <add>, %372, %cst_145 [1] : vector<8x128xf32> to vector<8xf32>
    %376 = vector.shape_cast %375 : vector<8xf32> to vector<8x1xf32>
    %cst_146 = arith.constant 1.280000e+02 : f32
    %377 = vector.broadcast %cst_146 : f32 to vector<8x1xf32>
    %378 = arith.divf %376, %377 : vector<8x1xf32>
    %379 = vector.broadcast %378 : vector<8x1xf32> to vector<8x128xf32>
    %380 = arith.subf %372, %379 : vector<8x128xf32>
    %381 = arith.mulf %380, %380 : vector<8x128xf32>
    %cst_147 = arith.constant dense<0.000000e+00> : vector<8xf32>
    %382 = vector.multi_reduction <add>, %381, %cst_147 [1] : vector<8x128xf32> to vector<8xf32>
    %383 = vector.shape_cast %382 : vector<8xf32> to vector<8x1xf32>
    %cst_148 = arith.constant 1.280000e+02 : f32
    %384 = vector.broadcast %cst_148 : f32 to vector<8x1xf32>
    %385 = arith.divf %383, %384 : vector<8x1xf32>
    %386 = vector.broadcast %378 : vector<8x1xf32> to vector<8x128xf32>
    %387 = arith.subf %372, %386 : vector<8x128xf32>
    %cst_149 = arith.constant 9.99999974E-6 : f32
    %388 = vector.broadcast %cst_149 : f32 to vector<8x1xf32>
    %389 = arith.addf %385, %388 : vector<8x1xf32>
    %390 = math.rsqrt %389 : vector<8x1xf32>
    %391 = vector.broadcast %390 : vector<8x1xf32> to vector<8x128xf32>
    %392 = arith.mulf %387, %391 : vector<8x128xf32>
    %393 = vector.broadcast %373 : vector<1x128xf32> to vector<8x128xf32>
    %394 = arith.mulf %392, %393 : vector<8x128xf32>
    %395 = vector.broadcast %374 : vector<1x128xf32> to vector<8x128xf32>
    %396 = arith.addf %394, %395 : vector<8x128xf32>
    %397 = vector.extract_strided_slice %396 {offsets = [0, 0], sizes = [1, 128], strides = [1, 1]} : vector<8x128xf32> to vector<1x128xf32>
    %c0_150 = arith.constant 0 : index
    %c0_151 = arith.constant 0 : index
    %398 = vector.load %arg16[%c0_150, %c0_151] : memref<128x128xbf16, #tpu.memory_space<vmem>>, vector<128x128xbf16>
    %c0_152 = arith.constant 0 : index
    %c0_153 = arith.constant 0 : index
    %399 = vector.load %arg17[%c0_152, %c0_153] : memref<1x128xf32, #tpu.memory_space<vmem>>, vector<1x128xf32>
    %400 = arith.truncf %397 : vector<1x128xf32> to vector<1x128xbf16>
    %cst_154 = arith.constant dense<0.000000e+00> : vector<1x128xf32>
    %401 = tpu.matmul %400, %398, %cst_154 {dimension_numbers = #tpu.dot_dimension_numbers<[1], [0], [0], [1], [0, 0, 1, 1], [], []>} : vector<1x128xbf16>, vector<128x128xbf16>, vector<1x128xf32> -> vector<1x128xf32>
    %402 = arith.addf %401, %399 : vector<1x128xf32>
    %c0_155 = arith.constant 0 : index
    %c0_156 = arith.constant 0 : index
    %c0_157 = arith.constant 0 : index
    %403 = vector.load %arg18[%c0_155, %c0_156, %c0_157] : memref<1x1x128xf32, #tpu.memory_space<vmem>>, vector<1x1x128xf32>
    %404 = vector.shape_cast %403 : vector<1x1x128xf32> to vector<1x128xf32>
    %405 = vector.shape_cast %402 : vector<1x128xf32> to vector<1x1x128xf32>
    tpu.vector_store %arg18[%c0_155, %c0_156, %c0_157], %405 {strides = array<i32>} : memref<1x1x128xf32, #tpu.memory_space<vmem>>, vector<1x1x128xf32>,
    return
  }
  func.func @transform_0(%arg0: i32) -> (i32, i32, i32) {
    %c0_i32 = arith.constant 0 : i32
    %c0_i32_0 = arith.constant 0 : i32
    %c0_i32_1 = arith.constant 0 : i32
    return %arg0, %c0_i32, %c0_i32_0 : i32, i32, i32
  }
  func.func @transform_1(%arg0: i32) -> (i32, i32) {
    %c0_i32 = arith.constant 0 : i32
    %c0_i32_0 = arith.constant 0 : i32
    %c0_i32_1 = arith.constant 0 : i32
    return %c0_i32, %c0_i32_0 : i32, i32
  }
  func.func @transform_2(%arg0: i32) -> (i32, i32) {
    %c0_i32 = arith.constant 0 : i32
    %c0_i32_0 = arith.constant 0 : i32
    %c0_i32_1 = arith.constant 0 : i32
    return %c0_i32, %c0_i32_0 : i32, i32
  }
  func.func @transform_3(%arg0: i32) -> (i32, i32, i32) {
    %c0_i32 = arith.constant 0 : i32
    %c0_i32_0 = arith.constant 0 : i32
    %c0_i32_1 = arith.constant 0 : i32
    %c0_i32_2 = arith.constant 0 : i32
    return %c0_i32, %c0_i32_0, %c0_i32_1 : i32, i32, i32
  }
  func.func @transform_4(%arg0: i32) -> (i32, i32, i32) {
    %c0_i32 = arith.constant 0 : i32
    %c0_i32_0 = arith.constant 0 : i32
    %c0_i32_1 = arith.constant 0 : i32
    %c0_i32_2 = arith.constant 0 : i32
    return %c0_i32, %c0_i32_0, %c0_i32_1 : i32, i32, i32
  }
  func.func @transform_5(%arg0: i32) -> (i32, i32, i32) {
    %c0_i32 = arith.constant 0 : i32
    %c0_i32_0 = arith.constant 0 : i32
    %c0_i32_1 = arith.constant 0 : i32
    %c0_i32_2 = arith.constant 0 : i32
    return %c0_i32, %c0_i32_0, %c0_i32_1 : i32, i32, i32
  }
  func.func @transform_6(%arg0: i32) -> (i32, i32, i32) {
    %c0_i32 = arith.constant 0 : i32
    %c0_i32_0 = arith.constant 0 : i32
    %c0_i32_1 = arith.constant 0 : i32
    %c0_i32_2 = arith.constant 0 : i32
    return %c0_i32, %c0_i32_0, %c0_i32_1 : i32, i32, i32
  }
  func.func @transform_7(%arg0: i32) -> (i32, i32, i32) {
    %c0_i32 = arith.constant 0 : i32
    %c0_i32_0 = arith.constant 0 : i32
    %c0_i32_1 = arith.constant 0 : i32
    %c0_i32_2 = arith.constant 0 : i32
    return %c0_i32, %c0_i32_0, %c0_i32_1 : i32, i32, i32
  }
  func.func @transform_8(%arg0: i32) -> (i32, i32, i32) {
    %c0_i32 = arith.constant 0 : i32
    %c0_i32_0 = arith.constant 0 : i32
    %c0_i32_1 = arith.constant 0 : i32
    %c0_i32_2 = arith.constant 0 : i32
    return %c0_i32, %c0_i32_0, %c0_i32_1 : i32, i32, i32
  }
  func.func @transform_9(%arg0: i32) -> (i32, i32, i32) {
    %c0_i32 = arith.constant 0 : i32
    %c0_i32_0 = arith.constant 0 : i32
    %c0_i32_1 = arith.constant 0 : i32
    %c0_i32_2 = arith.constant 0 : i32
    return %c0_i32, %c0_i32_0, %c0_i32_1 : i32, i32, i32
  }
  func.func @transform_10(%arg0: i32) -> (i32, i32, i32) {
    %c0_i32 = arith.constant 0 : i32
    %c0_i32_0 = arith.constant 0 : i32
    %c0_i32_1 = arith.constant 0 : i32
    %c0_i32_2 = arith.constant 0 : i32
    return %c0_i32, %c0_i32_0, %c0_i32_1 : i32, i32, i32
  }
  func.func @transform_11(%arg0: i32) -> (i32, i32, i32) {
    %c0_i32 = arith.constant 0 : i32
    %c0_i32_0 = arith.constant 0 : i32
    %c0_i32_1 = arith.constant 0 : i32
    %c0_i32_2 = arith.constant 0 : i32
    return %c0_i32, %c0_i32_0, %c0_i32_1 : i32, i32, i32
  }
  func.func @transform_12(%arg0: i32) -> (i32, i32, i32) {
    %c0_i32 = arith.constant 0 : i32
    %c0_i32_0 = arith.constant 0 : i32
    %c0_i32_1 = arith.constant 0 : i32
    %c0_i32_2 = arith.constant 0 : i32
    return %c0_i32, %c0_i32_0, %c0_i32_1 : i32, i32, i32
  }
  func.func @transform_13(%arg0: i32) -> (i32, i32) {
    %c0_i32 = arith.constant 0 : i32
    %c0_i32_0 = arith.constant 0 : i32
    %c0_i32_1 = arith.constant 0 : i32
    return %c0_i32, %c0_i32_0 : i32, i32
  }
  func.func @transform_14(%arg0: i32) -> (i32, i32) {
    %c0_i32 = arith.constant 0 : i32
    %c0_i32_0 = arith.constant 0 : i32
    %c0_i32_1 = arith.constant 0 : i32
    return %c0_i32, %c0_i32_0 : i32, i32
  }
  func.func @transform_15(%arg0: i32) -> (i32, i32) {
    %c0_i32 = arith.constant 0 : i32
    %c0_i32_0 = arith.constant 0 : i32
    %c0_i32_1 = arith.constant 0 : i32
    return %c0_i32, %c0_i32_0 : i32, i32
  }
  func.func @transform_16(%arg0: i32) -> (i32, i32) {
    %c0_i32 = arith.constant 0 : i32
    %c0_i32_0 = arith.constant 0 : i32
    %c0_i32_1 = arith.constant 0 : i32
    return %c0_i32, %c0_i32_0 : i32, i32
  }
  func.func @transform_17(%arg0: i32) -> (i32, i32, i32) {
    %c0_i32 = arith.constant 0 : i32
    %c0_i32_0 = arith.constant 0 : i32
    %c0_i32_1 = arith.constant 0 : i32
    return %arg0, %c0_i32, %c0_i32_0 : i32, i32, i32
  }
}

</mosaic_0001>

<llo_original>
// kernel: vit_forward.1
$region0: #{vit_forward.1}
  #allocation0 [shape = 'u32[]', space=smem, size = 0x4, offset = 0x4, fixed_abs, tag = 'smem constant byte address 0x4 - core index']
  #allocation1 [shape = 'u32[144,128]{1,0:T(1,128)}', space=vmem, size = 0x12000, scoped, tag = 'internal scratch']
  %s0 = inlined_call_operand.vmem [shape: f32[2,8,768], index: 0, kind: input, shape index: {}]
  %s1 = inlined_call_operand.vmem [shape: f32[8,128], index: 1, kind: input, shape index: {}]
  %s2 = inlined_call_operand.vmem [shape: bf16[768,128], index: 2, kind: input, shape index: {}]
  %s3 = inlined_call_operand.vmem [shape: f32[2,1,128], index: 3, kind: input, shape index: {}]
  %s4 = inlined_call_operand.vmem [shape: f32[2,1,128], index: 4, kind: input, shape index: {}]
  %s5 = inlined_call_operand.vmem [shape: bf16[2,128,384], index: 5, kind: input, shape index: {}]
  %s6 = inlined_call_operand.vmem [shape: f32[2,1,384], index: 6, kind: input, shape index: {}]
  %s7 = inlined_call_operand.vmem [shape: f32[2,1,128], index: 7, kind: input, shape index: {}]
  %s8 = inlined_call_operand.vmem [shape: f32[2,1,128], index: 8, kind: input, shape index: {}]
  %s9 = inlined_call_operand.vmem [shape: bf16[2,128,256], index: 9, kind: input, shape index: {}]
  %s10 = inlined_call_operand.vmem [shape: f32[2,1,256], index: 10, kind: input, shape index: {}]
  %s11 = inlined_call_operand.vmem [shape: bf16[2,256,128], index: 11, kind: input, shape index: {}]
  %s12 = inlined_call_operand.vmem [shape: f32[2,1,128], index: 12, kind: input, shape index: {}]
  %s13 = inlined_call_operand.vmem [shape: f32[1,128], index: 13, kind: input, shape index: {}]
  %s14 = inlined_call_operand.vmem [shape: f32[1,128], index: 14, kind: input, shape index: {}]
  %s15 = inlined_call_operand.vmem [shape: bf16[128,128], index: 15, kind: input, shape index: {}]
  %s16 = inlined_call_operand.vmem [shape: f32[1,128], index: 16, kind: input, shape index: {}]
  %s17 = inlined_call_operand.hbm [shape: f32[2,1,128], index: 17, kind: output, shape index: {}]
  %s18 = sld [smem:[#allocation0]]
  $region101: #{vit_forward.1} parent=0
    _
  %s20 = ssub.s32 1, %s18
  %s21 = scalar_select 0, %s20, %s18
  $region1: #{vit_forward.1} parent=0
    #allocation2 [shape = 'u8[1024]{0}', space=vmem, size = 0x400, scoped, tag = 'output window, operand 0']
    #allocation3 [shape = 's32[2]{0}', space=sflag, size = 0x8, scoped, tag = 'scoped memory for vit_forward.1']
    %22 = vsyncpa [#allocation3], 0
    %s23 = scalar_lea.sflag [#allocation3], 1
    %24 = vsyncpa %s23, 0
    loop: start=0, step=1, limit=4
    $region2: #{vit_forward.1} parent=1 // loop_pre_header
      _
    $region3: #{vit_forward.1} parent=1 // loop_header
      %s26 = sphi 0, %s30
      %p27 = scmp.ge.s32.totalorder %s26, 4
      %s36 = sphi 0, %s38
      %s39 = sphi 0, %s36
      %s40 = sphi 0, %s39
      %s56 = sphi 0, %s40
      %s60 = sphi 0, %s60
      %s62 = sphi 0, %s60
      %s63 = sphi 0, %s62
      %s77 = sphi 0, %s63
      %s81 = sphi 0, %s81
      %s83 = sphi 0, %s81
      %s84 = sphi 0, %s83
      %s98 = sphi 0, %s84
      %s102 = sphi 0, %s102
      %s104 = sphi 0, %s102
      %s105 = sphi 0, %s104
      %s119 = sphi 0, %s105
      %s123 = sphi 0, %s123
      %s125 = sphi 0, %s123
      %s126 = sphi 0, %s125
      %s140 = sphi 0, %s126
      %s144 = sphi 0, %s144
      %s146 = sphi 0, %s144
      %s147 = sphi 0, %s146
      %s161 = sphi 0, %s147
      %s165 = sphi 0, %s165
      %s167 = sphi 0, %s165
      %s168 = sphi 0, %s167
      %s182 = sphi 0, %s168
      %s186 = sphi 0, %s186
      %s188 = sphi 0, %s186
      %s189 = sphi 0, %s188
      %s203 = sphi 0, %s189
      %s207 = sphi 0, %s207
      %s209 = sphi 0, %s207
      %s210 = sphi 0, %s209
      %s224 = sphi 0, %s210
      %s228 = sphi 0, %s228
      %s230 = sphi 0, %s228
      %s231 = sphi 0, %s230
      %s245 = sphi 0, %s231
      %s249 = sphi 0, %s249
      %s251 = sphi 0, %s249
      %s252 = sphi 0, %s251
      %s266 = sphi 0, %s252
      %s270 = sphi 0, %s270
      %s272 = sphi 0, %s270
      %s273 = sphi 0, %s272
      %s287 = sphi 0, %s273
      %s291 = sphi 0, %s291
      %s293 = sphi 0, %s291
      %s294 = sphi 0, %s293
      %s308 = sphi 0, %s294
      %s312 = sphi 0, %s312
      %s314 = sphi 0, %s312
      %s315 = sphi 0, %s314
      %s329 = sphi 0, %s315
      %s333 = sphi 0, %s333
      %s335 = sphi 0, %s333
      %s336 = sphi 0, %s335
      %s350 = sphi 0, %s336
      %s354 = sphi 0, %s354
      %s356 = sphi 0, %s354
      %s357 = sphi 0, %s356
      %s371 = sphi 0, %s357
      %s375 = sphi 0, %s375
      %s377 = sphi 0, %s375
      %s378 = sphi 0, %s377
      %s392 = sphi 0, %s378
      %s398 = sphi 0, %s400
      %s401 = sphi 0, %s398
      %s402 = sphi 0, %s401
      %s418 = sphi 0, %s402
    $region4: #{vit_forward.1} parent=1 // loop_header_branch
      %29 = sbr.rel (%p27) target = $region8
    $region5: #{vit_forward.1} parent=1 // loop_body
      %s31 = ssub.s32 %s26, 1
      %s32 = ssub.s32 %s26, 2
      %s33 = sadd.s32 %s26, 1
      %s34 = ssub.s32 %s26, %s33
      %p35 = scmp.eq.s32.totalorder %s34, 0
      %s37 = sadd.s32 %s36, 1
      %s38 = scalar_select %p35, %s36, %s37
      %p41 = pneg %p35
      %p42 = scmp.eq.s32.totalorder %s26, 1
      %p43 = por %p41, %p42
      %p44 = scmp.ne.s32.totalorder %s36, %s39
      %p45 = scmp.eq.s32.totalorder %s26, 0
      %p46 = por %p44, %p45
      %p47 = scmp.ne.s32.totalorder %s36, %s39
      %p48 = scmp.eq.s32.totalorder %s31, 1
      %p49 = por %p47, %p48
      %p50 = scmp.ne.s32.totalorder %s39, %s40
      %p51 = scmp.eq.s32.totalorder %s31, 0
      %p52 = por %p50, %p51
      %p53 = scmp.ne.s32.totalorder %s39, %s40
      %p54 = scmp.eq.s32.totalorder %s32, 1
      %p55 = por %p53, %p54
      %p57 = scmp.ne.s32.totalorder %s40, %s56
      %p58 = scmp.eq.s32.totalorder %s32, 0
      %p59 = por %p57, %p58
      %s61 = sadd.s32 %s60, 1
      %p64 = scmp.eq.s32.totalorder %s26, 1
      %p65 = scmp.ne.s32.totalorder %s60, %s62
      %p66 = scmp.eq.s32.totalorder %s26, 0
      %p67 = por %p65, %p66
      %p68 = scmp.ne.s32.totalorder %s60, %s62
      %p69 = scmp.eq.s32.totalorder %s31, 1
      %p70 = por %p68, %p69
      %p71 = scmp.ne.s32.totalorder %s62, %s63
      %p72 = scmp.eq.s32.totalorder %s31, 0
      %p73 = por %p71, %p72
      %p74 = scmp.ne.s32.totalorder %s62, %s63
      %p75 = scmp.eq.s32.totalorder %s32, 1
      %p76 = por %p74, %p75
      %p78 = scmp.ne.s32.totalorder %s63, %s77
      %p79 = scmp.eq.s32.totalorder %s32, 0
      %p80 = por %p78, %p79
      %s82 = sadd.s32 %s81, 1
      %p85 = scmp.eq.s32.totalorder %s26, 1
      %p86 = scmp.ne.s32.totalorder %s81, %s83
      %p87 = scmp.eq.s32.totalorder %s26, 0
      %p88 = por %p86, %p87
      %p89 = scmp.ne.s32.totalorder %s81, %s83
      %p90 = scmp.eq.s32.totalorder %s31, 1
      %p91 = por %p89, %p90
      %p92 = scmp.ne.s32.totalorder %s83, %s84
      %p93 = scmp.eq.s32.totalorder %s31, 0
      %p94 = por %p92, %p93
      %p95 = scmp.ne.s32.totalorder %s83, %s84
      %p96 = scmp.eq.s32.totalorder %s32, 1
      %p97 = por %p95, %p96
      %p99 = scmp.ne.s32.totalorder %s84, %s98
      %p100 = scmp.eq.s32.totalorder %s32, 0
      %p101 = por %p99, %p100
      %s103 = sadd.s32 %s102, 1
      %p106 = scmp.eq.s32.totalorder %s26, 1
      %p107 = scmp.ne.s32.totalorder %s102, %s104
      %p108 = scmp.eq.s32.totalorder %s26, 0
      %p109 = por %p107, %p108
      %p110 = scmp.ne.s32.totalorder %s102, %s104
      %p111 = scmp.eq.s32.totalorder %s31, 1
      %p112 = por %p110, %p111
      %p113 = scmp.ne.s32.totalorder %s104, %s105
      %p114 = scmp.eq.s32.totalorder %s31, 0
      %p115 = por %p113, %p114
      %p116 = scmp.ne.s32.totalorder %s104, %s105
      %p117 = scmp.eq.s32.totalorder %s32, 1
      %p118 = por %p116, %p117
      %p120 = scmp.ne.s32.totalorder %s105, %s119
      %p121 = scmp.eq.s32.totalorder %s32, 0
      %p122 = por %p120, %p121
      %s124 = sadd.s32 %s123, 1
      %p127 = scmp.eq.s32.totalorder %s26, 1
      %p128 = scmp.ne.s32.totalorder %s123, %s125
      %p129 = scmp.eq.s32.totalorder %s26, 0
      %p130 = por %p128, %p129
      %p131 = scmp.ne.s32.totalorder %s123, %s125
      %p132 = scmp.eq.s32.totalorder %s31, 1
      %p133 = por %p131, %p132
      %p134 = scmp.ne.s32.totalorder %s125, %s126
      %p135 = scmp.eq.s32.totalorder %s31, 0
      %p136 = por %p134, %p135
      %p137 = scmp.ne.s32.totalorder %s125, %s126
      %p138 = scmp.eq.s32.totalorder %s32, 1
      %p139 = por %p137, %p138
      %p141 = scmp.ne.s32.totalorder %s126, %s140
      %p142 = scmp.eq.s32.totalorder %s32, 0
      %p143 = por %p141, %p142
      %s145 = sadd.s32 %s144, 1
      %p148 = scmp.eq.s32.totalorder %s26, 1
      %p149 = scmp.ne.s32.totalorder %s144, %s146
      %p150 = scmp.eq.s32.totalorder %s26, 0
      %p151 = por %p149, %p150
      %p152 = scmp.ne.s32.totalorder %s144, %s146
      %p153 = scmp.eq.s32.totalorder %s31, 1
      %p154 = por %p152, %p153
      %p155 = scmp.ne.s32.totalorder %s146, %s147
      %p156 = scmp.eq.s32.totalorder %s31, 0
      %p157 = por %p155, %p156
      %p158 = scmp.ne.s32.totalorder %s146, %s147
      %p159 = scmp.eq.s32.totalorder %s32, 1
      %p160 = por %p158, %p159
      %p162 = scmp.ne.s32.totalorder %s147, %s161
      %p163 = scmp.eq.s32.totalorder %s32, 0
      %p164 = por %p162, %p163
      %s166 = sadd.s32 %s165, 1
      %p169 = scmp.eq.s32.totalorder %s26, 1
      %p170 = scmp.ne.s32.totalorder %s165, %s167
      %p171 = scmp.eq.s32.totalorder %s26, 0
      %p172 = por %p170, %p171
      %p173 = scmp.ne.s32.totalorder %s165, %s167
      %p174 = scmp.eq.s32.totalorder %s31, 1
      %p175 = por %p173, %p174
      %p176 = scmp.ne.s32.totalorder %s167, %s168
      %p177 = scmp.eq.s32.totalorder %s31, 0
      %p178 = por %p176, %p177
      %p179 = scmp.ne.s32.totalorder %s167, %s168
      %p180 = scmp.eq.s32.totalorder %s32, 1
      %p181 = por %p179, %p180
      %p183 = scmp.ne.s32.totalorder %s168, %s182
      %p184 = scmp.eq.s32.totalorder %s32, 0
      %p185 = por %p183, %p184
      %s187 = sadd.s32 %s186, 1
      %p190 = scmp.eq.s32.totalorder %s26, 1
      %p191 = scmp.ne.s32.totalorder %s186, %s188
      %p192 = scmp.eq.s32.totalorder %s26, 0
      %p193 = por %p191, %p192
      %p194 = scmp.ne.s32.totalorder %s186, %s188
      %p195 = scmp.eq.s32.totalorder %s31, 1
      %p196 = por %p194, %p195
      %p197 = scmp.ne.s32.totalorder %s188, %s189
      %p198 = scmp.eq.s32.totalorder %s31, 0
      %p199 = por %p197, %p198
      %p200 = scmp.ne.s32.totalorder %s188, %s189
      %p201 = scmp.eq.s32.totalorder %s32, 1
      %p202 = por %p200, %p201
      %p204 = scmp.ne.s32.totalorder %s189, %s203
      %p205 = scmp.eq.s32.totalorder %s32, 0
      %p206 = por %p204, %p205
      %s208 = sadd.s32 %s207, 1
      %p211 = scmp.eq.s32.totalorder %s26, 1
      %p212 = scmp.ne.s32.totalorder %s207, %s209
      %p213 = scmp.eq.s32.totalorder %s26, 0
      %p214 = por %p212, %p213
      %p215 = scmp.ne.s32.totalorder %s207, %s209
      %p216 = scmp.eq.s32.totalorder %s31, 1
      %p217 = por %p215, %p216
      %p218 = scmp.ne.s32.totalorder %s209, %s210
      %p219 = scmp.eq.s32.totalorder %s31, 0
      %p220 = por %p218, %p219
      %p221 = scmp.ne.s32.totalorder %s209, %s210
      %p222 = scmp.eq.s32.totalorder %s32, 1
      %p223 = por %p221, %p222
      %p225 = scmp.ne.s32.totalorder %s210, %s224
      %p226 = scmp.eq.s32.totalorder %s32, 0
      %p227 = por %p225, %p226
      %s229 = sadd.s32 %s228, 1
      %p232 = scmp.eq.s32.totalorder %s26, 1
      %p233 = scmp.ne.s32.totalorder %s228, %s230
      %p234 = scmp.eq.s32.totalorder %s26, 0
      %p235 = por %p233, %p234
      %p236 = scmp.ne.s32.totalorder %s228, %s230
      %p237 = scmp.eq.s32.totalorder %s31, 1
      %p238 = por %p236, %p237
      %p239 = scmp.ne.s32.totalorder %s230, %s231
      %p240 = scmp.eq.s32.totalorder %s31, 0
      %p241 = por %p239, %p240
      %p242 = scmp.ne.s32.totalorder %s230, %s231
      %p243 = scmp.eq.s32.totalorder %s32, 1
      %p244 = por %p242, %p243
      %p246 = scmp.ne.s32.totalorder %s231, %s245
      %p247 = scmp.eq.s32.totalorder %s32, 0
      %p248 = por %p246, %p247
      %s250 = sadd.s32 %s249, 1
      %p253 = scmp.eq.s32.totalorder %s26, 1
      %p254 = scmp.ne.s32.totalorder %s249, %s251
      %p255 = scmp.eq.s32.totalorder %s26, 0
      %p256 = por %p254, %p255
      %p257 = scmp.ne.s32.totalorder %s249, %s251
      %p258 = scmp.eq.s32.totalorder %s31, 1
      %p259 = por %p257, %p258
      %p260 = scmp.ne.s32.totalorder %s251, %s252
      %p261 = scmp.eq.s32.totalorder %s31, 0
      %p262 = por %p260, %p261
      %p263 = scmp.ne.s32.totalorder %s251, %s252
      %p264 = scmp.eq.s32.totalorder %s32, 1
      %p265 = por %p263, %p264
      %p267 = scmp.ne.s32.totalorder %s252, %s266
      %p268 = scmp.eq.s32.totalorder %s32, 0
      %p269 = por %p267, %p268
      %s271 = sadd.s32 %s270, 1
      %p274 = scmp.eq.s32.totalorder %s26, 1
      %p275 = scmp.ne.s32.totalorder %s270, %s272
      %p276 = scmp.eq.s32.totalorder %s26, 0
      %p277 = por %p275, %p276
      %p278 = scmp.ne.s32.totalorder %s270, %s272
      %p279 = scmp.eq.s32.totalorder %s31, 1
      %p280 = por %p278, %p279
      %p281 = scmp.ne.s32.totalorder %s272, %s273
      %p282 = scmp.eq.s32.totalorder %s31, 0
      %p283 = por %p281, %p282
      %p284 = scmp.ne.s32.totalorder %s272, %s273
      %p285 = scmp.eq.s32.totalorder %s32, 1
      %p286 = por %p284, %p285
      %p288 = scmp.ne.s32.totalorder %s273, %s287
      %p289 = scmp.eq.s32.totalorder %s32, 0
      %p290 = por %p288, %p289
      %s292 = sadd.s32 %s291, 1
      %p295 = scmp.eq.s32.totalorder %s26, 1
      %p296 = scmp.ne.s32.totalorder %s291, %s293
      %p297 = scmp.eq.s32.totalorder %s26, 0
      %p298 = por %p296, %p297
      %p299 = scmp.ne.s32.totalorder %s291, %s293
      %p300 = scmp.eq.s32.totalorder %s31, 1
      %p301 = por %p299, %p300
      %p302 = scmp.ne.s32.totalorder %s293, %s294
      %p303 = scmp.eq.s32.totalorder %s31, 0
      %p304 = por %p302, %p303
      %p305 = scmp.ne.s32.totalorder %s293, %s294
      %p306 = scmp.eq.s32.totalorder %s32, 1
      %p307 = por %p305, %p306
      %p309 = scmp.ne.s32.totalorder %s294, %s308
      %p310 = scmp.eq.s32.totalorder %s32, 0
      %p311 = por %p309, %p310
      %s313 = sadd.s32 %s312, 1
      %p316 = scmp.eq.s32.totalorder %s26, 1
      %p317 = scmp.ne.s32.totalorder %s312, %s314
      %p318 = scmp.eq.s32.totalorder %s26, 0
      %p319 = por %p317, %p318
      %p320 = scmp.ne.s32.totalorder %s312, %s314
      %p321 = scmp.eq.s32.totalorder %s31, 1
      %p322 = por %p320, %p321
      %p323 = scmp.ne.s32.totalorder %s314, %s315
      %p324 = scmp.eq.s32.totalorder %s31, 0
      %p325 = por %p323, %p324
      %p326 = scmp.ne.s32.totalorder %s314, %s315
      %p327 = scmp.eq.s32.totalorder %s32, 1
      %p328 = por %p326, %p327
      %p330 = scmp.ne.s32.totalorder %s315, %s329
      %p331 = scmp.eq.s32.totalorder %s32, 0
      %p332 = por %p330, %p331
      %s334 = sadd.s32 %s333, 1
      %p337 = scmp.eq.s32.totalorder %s26, 1
      %p338 = scmp.ne.s32.totalorder %s333, %s335
      %p339 = scmp.eq.s32.totalorder %s26, 0
      %p340 = por %p338, %p339
      %p341 = scmp.ne.s32.totalorder %s333, %s335
      %p342 = scmp.eq.s32.totalorder %s31, 1
      %p343 = por %p341, %p342
      %p344 = scmp.ne.s32.totalorder %s335, %s336
      %p345 = scmp.eq.s32.totalorder %s31, 0
      %p346 = por %p344, %p345
      %p347 = scmp.ne.s32.totalorder %s335, %s336
      %p348 = scmp.eq.s32.totalorder %s32, 1
      %p349 = por %p347, %p348
      %p351 = scmp.ne.s32.totalorder %s336, %s350
      %p352 = scmp.eq.s32.totalorder %s32, 0
      %p353 = por %p351, %p352
      %s355 = sadd.s32 %s354, 1
      %p358 = scmp.eq.s32.totalorder %s26, 1
      %p359 = scmp.ne.s32.totalorder %s354, %s356
      %p360 = scmp.eq.s32.totalorder %s26, 0
      %p361 = por %p359, %p360
      %p362 = scmp.ne.s32.totalorder %s354, %s356
      %p363 = scmp.eq.s32.totalorder %s31, 1
      %p364 = por %p362, %p363
      %p365 = scmp.ne.s32.totalorder %s356, %s357
      %p366 = scmp.eq.s32.totalorder %s31, 0
      %p367 = por %p365, %p366
      %p368 = scmp.ne.s32.totalorder %s356, %s357
      %p369 = scmp.eq.s32.totalorder %s32, 1
      %p370 = por %p368, %p369
      %p372 = scmp.ne.s32.totalorder %s357, %s371
      %p373 = scmp.eq.s32.totalorder %s32, 0
      %p374 = por %p372, %p373
      %s376 = sadd.s32 %s375, 1
      %p379 = scmp.eq.s32.totalorder %s26, 1
      %p380 = scmp.ne.s32.totalorder %s375, %s377
      %p381 = scmp.eq.s32.totalorder %s26, 0
      %p382 = por %p380, %p381
      %p383 = scmp.ne.s32.totalorder %s375, %s377
      %p384 = scmp.eq.s32.totalorder %s31, 1
      %p385 = por %p383, %p384
      %p386 = scmp.ne.s32.totalorder %s377, %s378
      %p387 = scmp.eq.s32.totalorder %s31, 0
      %p388 = por %p386, %p387
      %p389 = scmp.ne.s32.totalorder %s377, %s378
      %p390 = scmp.eq.s32.totalorder %s32, 1
      %p391 = por %p389, %p390
      %p393 = scmp.ne.s32.totalorder %s378, %s392
      %p394 = scmp.eq.s32.totalorder %s32, 0
      %p395 = por %p393, %p394
      %s396 = ssub.s32 %s26, %s33
      %p397 = scmp.eq.s32.totalorder %s396, 0
      %s399 = sadd.s32 %s398, 1
      %s400 = scalar_select %p397, %s398, %s399
      %p403 = pneg %p397
      %p404 = scmp.eq.s32.totalorder %s26, 1
      %p405 = por %p403, %p404
      %p406 = scmp.ne.s32.totalorder %s398, %s401
      %p407 = scmp.eq.s32.totalorder %s26, 0
      %p408 = por %p406, %p407
      %p409 = scmp.ne.s32.totalorder %s398, %s401
      %p410 = scmp.eq.s32.totalorder %s31, 1
      %p411 = por %p409, %p410
      %p412 = scmp.ne.s32.totalorder %s401, %s402
      %p413 = scmp.eq.s32.totalorder %s31, 0
      %p414 = por %p412, %p413
      %p415 = scmp.ne.s32.totalorder %s401, %s402
      %p416 = scmp.eq.s32.totalorder %s32, 1
      %p417 = por %p415, %p416
      %p419 = scmp.ne.s32.totalorder %s402, %s418
      %p420 = scmp.eq.s32.totalorder %s32, 0
      %p421 = por %p419, %p420
      %p422 = scmp.le.s32.totalorder 1, %s26
      %p423 = scmp.lt.s32.totalorder %s26, 3
      %p424 = pnand %p422, %p423
      %p425 = pneg %p424
      // Predicated region
      $region9: #{vit_forward.1} parent=5 // pred_check
        _
      $region10: #{vit_forward.1} parent=5 // pred_check_branch
        %427 = sbr.rel (%p424) target = $region12
      $region11: #{vit_forward.1} parent=5 // pred_region
        %s428 = ssub.s32 %s26, 1
        // Predicated region
        $region13: #{vit_forward.1} parent=11 // pred_check
          %p429 = pneg %p73
        $region14: #{vit_forward.1} parent=11 // pred_check_branch
          %431 = sbr.rel (%p429) target = $region16
        $region15: #{vit_forward.1} parent=11 // pred_region
          _
        $region16: #{vit_forward.1} parent=11 // pred_fallthru
          _
        // Predicated region
        $region17: #{vit_forward.1} parent=11 // pred_check
          %p432 = pneg %p94
        $region18: #{vit_forward.1} parent=11 // pred_check_branch
          %434 = sbr.rel (%p432) target = $region20
        $region19: #{vit_forward.1} parent=11 // pred_region
          _
        $region20: #{vit_forward.1} parent=11 // pred_fallthru
          _
        // Predicated region
        $region21: #{vit_forward.1} parent=11 // pred_check
          %p435 = pneg %p115
        $region22: #{vit_forward.1} parent=11 // pred_check_branch
          %437 = sbr.rel (%p435) target = $region24
        $region23: #{vit_forward.1} parent=11 // pred_region
          _
        $region24: #{vit_forward.1} parent=11 // pred_fallthru
          _
        // Predicated region
        $region25: #{vit_forward.1} parent=11 // pred_check
          %p438 = pneg %p136
        $region26: #{vit_forward.1} parent=11 // pred_check_branch
          %440 = sbr.rel (%p438) target = $region28
        $region27: #{vit_forward.1} parent=11 // pred_region
          _
        $region28: #{vit_forward.1} parent=11 // pred_fallthru
          _
        // Predicated region
        $region29: #{vit_forward.1} parent=11 // pred_check
          %p441 = pneg %p157
        $region30: #{vit_forward.1} parent=11 // pred_check_branch
          %443 = sbr.rel (%p441) target = $region32
        $region31: #{vit_forward.1} parent=11 // pred_region
          _
        $region32: #{vit_forward.1} parent=11 // pred_fallthru
          _
        // Predicated region
        $region33: #{vit_forward.1} parent=11 // pred_check
          %p444 = pneg %p178
        $region34: #{vit_forward.1} parent=11 // pred_check_branch
          %446 = sbr.rel (%p444) target = $region36
        $region35: #{vit_forward.1} parent=11 // pred_region
          _
        $region36: #{vit_forward.1} parent=11 // pred_fallthru
          _
        // Predicated region
        $region37: #{vit_forward.1} parent=11 // pred_check
          %p447 = pneg %p199
        $region38: #{vit_forward.1} parent=11 // pred_check_branch
          %449 = sbr.rel (%p447) target = $region40
        $region39: #{vit_forward.1} parent=11 // pred_region
          _
        $region40: #{vit_forward.1} parent=11 // pred_fallthru
          _
        // Predicated region
        $region41: #{vit_forward.1} parent=11 // pred_check
          %p450 = pneg %p220
        $region42: #{vit_forward.1} parent=11 // pred_check_branch
          %452 = sbr.rel (%p450) target = $region44
        $region43: #{vit_forward.1} parent=11 // pred_region
          _
        $region44: #{vit_forward.1} parent=11 // pred_fallthru
          _
        // Predicated region
        $region45: #{vit_forward.1} parent=11 // pred_check
          %p453 = pneg %p241
        $region46: #{vit_forward.1} parent=11 // pred_check_branch
          %455 = sbr.rel (%p453) target = $region48
        $region47: #{vit_forward.1} parent=11 // pred_region
          _
        $region48: #{vit_forward.1} parent=11 // pred_fallthru
          _
        // Predicated region
        $region49: #{vit_forward.1} parent=11 // pred_check
          %p456 = pneg %p262
        $region50: #{vit_forward.1} parent=11 // pred_check_branch
          %458 = sbr.rel (%p456) target = $region52
        $region51: #{vit_forward.1} parent=11 // pred_region
          _
        $region52: #{vit_forward.1} parent=11 // pred_fallthru
          _
        // Predicated region
        $region53: #{vit_forward.1} parent=11 // pred_check
          %p459 = pneg %p283
        $region54: #{vit_forward.1} parent=11 // pred_check_branch
          %461 = sbr.rel (%p459) target = $region56
        $region55: #{vit_forward.1} parent=11 // pred_region
          _
        $region56: #{vit_forward.1} parent=11 // pred_fallthru
          _
        // Predicated region
        $region57: #{vit_forward.1} parent=11 // pred_check
          %p462 = pneg %p304
        $region58: #{vit_forward.1} parent=11 // pred_check_branch
          %464 = sbr.rel (%p462) target = $region60
        $region59: #{vit_forward.1} parent=11 // pred_region
          _
        $region60: #{vit_forward.1} parent=11 // pred_fallthru
          _
        // Predicated region
        $region61: #{vit_forward.1} parent=11 // pred_check
          %p465 = pneg %p325
        $region62: #{vit_forward.1} parent=11 // pred_check_branch
          %467 = sbr.rel (%p465) target = $region64
        $region63: #{vit_forward.1} parent=11 // pred_region
          _
        $region64: #{vit_forward.1} parent=11 // pred_fallthru
          _
        // Predicated region
        $region65: #{vit_forward.1} parent=11 // pred_check
          %p468 = pneg %p346
        $region66: #{vit_forward.1} parent=11 // pred_check_branch
          %470 = sbr.rel (%p468) target = $region68
        $region67: #{vit_forward.1} parent=11 // pred_region
          _
        $region68: #{vit_forward.1} parent=11 // pred_fallthru
          _
        // Predicated region
        $region69: #{vit_forward.1} parent=11 // pred_check
          %p471 = pneg %p367
        $region70: #{vit_forward.1} parent=11 // pred_check_branch
          %473 = sbr.rel (%p471) target = $region72
        $region71: #{vit_forward.1} parent=11 // pred_region
          _
        $region72: #{vit_forward.1} parent=11 // pred_fallthru
          _
        // Predicated region
        $region73: #{vit_forward.1} parent=11 // pred_check
          %p474 = pneg %p388
        $region74: #{vit_forward.1} parent=11 // pred_check_branch
          %476 = sbr.rel (%p474) target = $region76
        $region75: #{vit_forward.1} parent=11 // pred_region
          _
        $region76: #{vit_forward.1} parent=11 // pred_fallthru
          _
      $region12: #{vit_forward.1} parent=5 // pred_fallthru
        _
      %p477 = scmp.lt.s32.totalorder %s26, 2
      // Predicated region
      $region77: #{vit_forward.1} parent=5 // pred_check
        %p478 = pneg %p477
      $region78: #{vit_forward.1} parent=5 // pred_check_branch
        %480 = sbr.rel (%p478) target = $region80
      $region79: #{vit_forward.1} parent=5 // pred_region
        // Predicated region
        $region81: #{vit_forward.1} parent=79 // pred_check
          %p481 = pneg %p46
        $region82: #{vit_forward.1} parent=79 // pred_check_branch
          %483 = sbr.rel (%p481) target = $region84
        $region83: #{vit_forward.1} parent=79 // pred_region
          %p484 = scmp.lt.s32.totalorder %s26, 1
          %s485 = scalar_select %p484, %s26, 1
          %s486 = smul.addr %s485, 6
          %s487 = smul.addr %s486, 8
          %s488 = scalar_lea.vmem %s0, %s487
        $region84: #{vit_forward.1} parent=79 // pred_fallthru
          _
      $region80: #{vit_forward.1} parent=5 // pred_fallthru
        _
      %p489 = scmp.le.s32.totalorder 1, %s26
      %p490 = scmp.lt.s32.totalorder %s26, 3
      %p491 = pnand %p489, %p490
      %p492 = pneg %p491
      // Predicated region
      $region85: #{vit_forward.1} parent=5 // pred_check
        _
      $region86: #{vit_forward.1} parent=5 // pred_check_branch
        %494 = sbr.rel (%p491) target = $region88
      $region87: #{vit_forward.1} parent=5 // pred_region
        %s495 = ssub.s32 %s26, 1
        %p496 = scmp.lt.s32.totalorder %s31, 1
        %s497 = scalar_select %p496, %s31, 1
        %s498 = smul.addr %s497, 6
        %s499 = smul.addr %s498, 8
        %s500 = scalar_lea.vmem %s0, %s499
        %p501 = pneg %p52
        %p502 = pneg %p49
        %p503 = pneg %p73
        %p504 = pneg %p70
        %p505 = pneg %p94
        %p506 = pneg %p91
        %p507 = pneg %p115
        %p508 = pneg %p112
        %p509 = pneg %p136
        %p510 = pneg %p133
        %p511 = pneg %p157
        %p512 = pneg %p154
        %p513 = pneg %p178
        %p514 = pneg %p175
        %p515 = pneg %p199
        %p516 = pneg %p196
        %p517 = pneg %p220
        %p518 = pneg %p217
        %p519 = pneg %p241
        %p520 = pneg %p238
        %p521 = pneg %p262
        %p522 = pneg %p259
        %p523 = pneg %p283
        %p524 = pneg %p280
        %p525 = pneg %p304
        %p526 = pneg %p301
        %p527 = pneg %p325
        %p528 = pneg %p322
        %p529 = pneg %p346
        %p530 = pneg %p343
        %p531 = pneg %p367
        %p532 = pneg %p364
        %p533 = pneg %p388
        %p534 = pneg %p385
        %p535 = pneg %p414
        %p536 = pneg %p411
        %s537 = sand.u32 %s401, 1
        %s538 = scalar_lea.sflag [#allocation3], %s537
        %s539 = sand.u32 %s401, 1
        %s540 = scalar_lea.vmem [#allocation2], %s539
        %p541 = scmp.lt.s32.totalorder %s31, 1
        %s542 = scalar_select %p541, %s31, 1
        %s543 = smul.addr %s542, 6
        %s544 = smul.addr %s543, 8
        %s545 = scalar_lea.vmem %s0, %s544
        %v547 = vld [vmem:[%s545] sm:$0xff]
        %v548 = vld [vmem:[%s545 + $0x8] sm:$0xff]
        %v549 = vld [vmem:[%s545 + $0x10] sm:$0xff]
        %v550 = vld [vmem:[%s545 + $0x18] sm:$0xff]
        %v551 = vld [vmem:[%s545 + $0x20] sm:$0xff]
        %v552 = vld [vmem:[%s545 + $0x28] sm:$0xff]
        %v553 = vld [vmem:[%s1] sm:$0xff]
        %v554 = vld [vmem:[%s2] sm:$0xf]
        %v555 = vld [vmem:[%s2 + $0x4] sm:$0xf]
        %v556 = vld [vmem:[%s2 + $0x8] sm:$0xf]
        %v557 = vld [vmem:[%s2 + $0xc] sm:$0xf]
        %v558 = vld [vmem:[%s2 + $0x10] sm:$0xf]
        %v559 = vld [vmem:[%s2 + $0x14] sm:$0xf]
        %v560 = vld [vmem:[%s2 + $0x18] sm:$0xf]
        %v561 = vld [vmem:[%s2 + $0x1c] sm:$0xf]
        %v562 = vld [vmem:[%s2 + $0x20] sm:$0xf]
        %v563 = vld [vmem:[%s2 + $0x24] sm:$0xf]
        %v564 = vld [vmem:[%s2 + $0x28] sm:$0xf]
        %v565 = vld [vmem:[%s2 + $0x2c] sm:$0xf]
        %v566 = vld [vmem:[%s2 + $0x30] sm:$0xf]
        %v567 = vld [vmem:[%s2 + $0x34] sm:$0xf]
        %v568 = vld [vmem:[%s2 + $0x38] sm:$0xf]
        %v569 = vld [vmem:[%s2 + $0x3c] sm:$0xf]
        %v570 = vld [vmem:[%s2 + $0x40] sm:$0xf]
        %v571 = vld [vmem:[%s2 + $0x44] sm:$0xf]
        %v572 = vld [vmem:[%s2 + $0x48] sm:$0xf]
        %v573 = vld [vmem:[%s2 + $0x4c] sm:$0xf]
        %v574 = vld [vmem:[%s2 + $0x50] sm:$0xf]
        %v575 = vld [vmem:[%s2 + $0x54] sm:$0xf]
        %v576 = vld [vmem:[%s2 + $0x58] sm:$0xf]
        %v577 = vld [vmem:[%s2 + $0x5c] sm:$0xf]
        %v578 = vld [vmem:[%s2 + $0x60] sm:$0xf]
        %v579 = vld [vmem:[%s2 + $0x64] sm:$0xf]
        %v580 = vld [vmem:[%s2 + $0x68] sm:$0xf]
        %v581 = vld [vmem:[%s2 + $0x6c] sm:$0xf]
        %v582 = vld [vmem:[%s2 + $0x70] sm:$0xf]
        %v583 = vld [vmem:[%s2 + $0x74] sm:$0xf]
        %v584 = vld [vmem:[%s2 + $0x78] sm:$0xf]
        %v585 = vld [vmem:[%s2 + $0x7c] sm:$0xf]
        %v586 = vld [vmem:[%s2 + $0x80] sm:$0xf]
        %v587 = vld [vmem:[%s2 + $0x84] sm:$0xf]
        %v588 = vld [vmem:[%s2 + $0x88] sm:$0xf]
        %v589 = vld [vmem:[%s2 + $0x8c] sm:$0xf]
        %v590 = vld [vmem:[%s2 + $0x90] sm:$0xf]
        %v591 = vld [vmem:[%s2 + $0x94] sm:$0xf]
        %v592 = vld [vmem:[%s2 + $0x98] sm:$0xf]
        %v593 = vld [vmem:[%s2 + $0x9c] sm:$0xf]
        %v594 = vld [vmem:[%s2 + $0xa0] sm:$0xf]
        %v595 = vld [vmem:[%s2 + $0xa4] sm:$0xf]
        %v596 = vld [vmem:[%s2 + $0xa8] sm:$0xf]
        %v597 = vld [vmem:[%s2 + $0xac] sm:$0xf]
        %v598 = vld [vmem:[%s2 + $0xb0] sm:$0xf]
        %v599 = vld [vmem:[%s2 + $0xb4] sm:$0xf]
        %v600 = vld [vmem:[%s2 + $0xb8] sm:$0xf]
        %v601 = vld [vmem:[%s2 + $0xbc] sm:$0xf]
        %v602 = vld [vmem:[%s2 + $0xc0] sm:$0xf]
        %v603 = vld [vmem:[%s2 + $0xc4] sm:$0xf]
        %v604 = vld [vmem:[%s2 + $0xc8] sm:$0xf]
        %v605 = vld [vmem:[%s2 + $0xcc] sm:$0xf]
        %v606 = vld [vmem:[%s2 + $0xd0] sm:$0xf]
        %v607 = vld [vmem:[%s2 + $0xd4] sm:$0xf]
        %v608 = vld [vmem:[%s2 + $0xd8] sm:$0xf]
        %v609 = vld [vmem:[%s2 + $0xdc] sm:$0xf]
        %v610 = vld [vmem:[%s2 + $0xe0] sm:$0xf]
        %v611 = vld [vmem:[%s2 + $0xe4] sm:$0xf]
        %v612 = vld [vmem:[%s2 + $0xe8] sm:$0xf]
        %v613 = vld [vmem:[%s2 + $0xec] sm:$0xf]
        %v614 = vld [vmem:[%s2 + $0xf0] sm:$0xf]
        %v615 = vld [vmem:[%s2 + $0xf4] sm:$0xf]
        %v616 = vld [vmem:[%s2 + $0xf8] sm:$0xf]
        %v617 = vld [vmem:[%s2 + $0xfc] sm:$0xf]
        %v618 = vld [vmem:[%s2 + $0x100] sm:$0xf]
        %v619 = vld [vmem:[%s2 + $0x104] sm:$0xf]
        %v620 = vld [vmem:[%s2 + $0x108] sm:$0xf]
        %v621 = vld [vmem:[%s2 + $0x10c] sm:$0xf]
        %v622 = vld [vmem:[%s2 + $0x110] sm:$0xf]
        %v623 = vld [vmem:[%s2 + $0x114] sm:$0xf]
        %v624 = vld [vmem:[%s2 + $0x118] sm:$0xf]
        %v625 = vld [vmem:[%s2 + $0x11c] sm:$0xf]
        %v626 = vld [vmem:[%s2 + $0x120] sm:$0xf]
        %v627 = vld [vmem:[%s2 + $0x124] sm:$0xf]
        %v628 = vld [vmem:[%s2 + $0x128] sm:$0xf]
        %v629 = vld [vmem:[%s2 + $0x12c] sm:$0xf]
        %v630 = vld [vmem:[%s2 + $0x130] sm:$0xf]
        %v631 = vld [vmem:[%s2 + $0x134] sm:$0xf]
        %v632 = vld [vmem:[%s2 + $0x138] sm:$0xf]
        %v633 = vld [vmem:[%s2 + $0x13c] sm:$0xf]
        %v634 = vld [vmem:[%s2 + $0x140] sm:$0xf]
        %v635 = vld [vmem:[%s2 + $0x144] sm:$0xf]
        %v636 = vld [vmem:[%s2 + $0x148] sm:$0xf]
        %v637 = vld [vmem:[%s2 + $0x14c] sm:$0xf]
        %v638 = vld [vmem:[%s2 + $0x150] sm:$0xf]
        %v639 = vld [vmem:[%s2 + $0x154] sm:$0xf]
        %v640 = vld [vmem:[%s2 + $0x158] sm:$0xf]
        %v641 = vld [vmem:[%s2 + $0x15c] sm:$0xf]
        %v642 = vld [vmem:[%s2 + $0x160] sm:$0xf]
        %v643 = vld [vmem:[%s2 + $0x164] sm:$0xf]
        %v644 = vld [vmem:[%s2 + $0x168] sm:$0xf]
        %v645 = vld [vmem:[%s2 + $0x16c] sm:$0xf]
        %v646 = vld [vmem:[%s2 + $0x170] sm:$0xf]
        %v647 = vld [vmem:[%s2 + $0x174] sm:$0xf]
        %v648 = vld [vmem:[%s2 + $0x178] sm:$0xf]
        %v649 = vld [vmem:[%s2 + $0x17c] sm:$0xf]
        %v650 = vpack.c.bf16 %v547, %v547
        %v651 = vpack.c.bf16 %v548, %v548
        %v652 = vpack.c.bf16 %v549, %v549
        %v653 = vpack.c.bf16 %v550, %v550
        %v654 = vpack.c.bf16 %v551, %v551
        %v655 = vpack.c.bf16 %v552, %v552
        %v752 = vunpack.c.l.b16 %v554
        %v753 = vunpack.c.l.b16 %v555
        %v754 = vunpack.c.l.b16 %v556
        %v755 = vunpack.c.l.b16 %v557
        %v756 = vunpack.c.l.b16 %v558
        %v757 = vunpack.c.l.b16 %v559
        %v758 = vunpack.c.l.b16 %v560
        %v759 = vunpack.c.l.b16 %v561
        %v760 = vunpack.c.l.b16 %v562
        %v761 = vunpack.c.l.b16 %v563
        %v762 = vunpack.c.l.b16 %v564
        %v763 = vunpack.c.l.b16 %v565
        %v764 = vunpack.c.l.b16 %v566
        %v765 = vunpack.c.l.b16 %v567
        %v766 = vunpack.c.l.b16 %v568
        %v767 = vunpack.c.l.b16 %v569
        %v768 = vunpack.c.l.b16 %v570
        %v769 = vunpack.c.l.b16 %v571
        %v770 = vunpack.c.l.b16 %v572
        %v771 = vunpack.c.l.b16 %v573
        %v772 = vunpack.c.l.b16 %v574
        %v773 = vunpack.c.l.b16 %v575
        %v774 = vunpack.c.l.b16 %v576
        %v775 = vunpack.c.l.b16 %v577
        %v776 = vunpack.c.l.b16 %v578
        %v777 = vunpack.c.l.b16 %v579
        %v778 = vunpack.c.l.b16 %v580
        %v779 = vunpack.c.l.b16 %v581
        %v780 = vunpack.c.l.b16 %v582
        %v781 = vunpack.c.l.b16 %v583
        %v782 = vunpack.c.l.b16 %v584
        %v783 = vunpack.c.l.b16 %v585
        %v784 = vunpack.c.l.b16 %v586
        %v785 = vunpack.c.l.b16 %v587
        %v786 = vunpack.c.l.b16 %v588
        %v787 = vunpack.c.l.b16 %v589
        %v788 = vunpack.c.l.b16 %v590
        %v789 = vunpack.c.l.b16 %v591
        %v790 = vunpack.c.l.b16 %v592
        %v791 = vunpack.c.l.b16 %v593
        %v792 = vunpack.c.l.b16 %v594
        %v793 = vunpack.c.l.b16 %v595
        %v794 = vunpack.c.l.b16 %v596
        %v795 = vunpack.c.l.b16 %v597
        %v796 = vunpack.c.l.b16 %v598
        %v797 = vunpack.c.l.b16 %v599
        %v798 = vunpack.c.l.b16 %v600
        %v799 = vunpack.c.l.b16 %v601
        %v800 = vunpack.c.l.b16 %v602
        %v801 = vunpack.c.l.b16 %v603
        %v802 = vunpack.c.l.b16 %v604
        %v803 = vunpack.c.l.b16 %v605
        %v804 = vunpack.c.l.b16 %v606
        %v805 = vunpack.c.l.b16 %v607
        %v806 = vunpack.c.l.b16 %v608
        %v807 = vunpack.c.l.b16 %v609
        %v808 = vunpack.c.l.b16 %v610
        %v809 = vunpack.c.l.b16 %v611
        %v810 = vunpack.c.l.b16 %v612
        %v811 = vunpack.c.l.b16 %v613
        %v812 = vunpack.c.l.b16 %v614
        %v813 = vunpack.c.l.b16 %v615
        %v814 = vunpack.c.l.b16 %v616
        %v815 = vunpack.c.l.b16 %v617
        %v816 = vunpack.c.l.b16 %v618
        %v817 = vunpack.c.l.b16 %v619
        %v818 = vunpack.c.l.b16 %v620
        %v819 = vunpack.c.l.b16 %v621
        %v820 = vunpack.c.l.b16 %v622
        %v821 = vunpack.c.l.b16 %v623
        %v822 = vunpack.c.l.b16 %v624
        %v823 = vunpack.c.l.b16 %v625
        %v824 = vunpack.c.l.b16 %v626
        %v825 = vunpack.c.l.b16 %v627
        %v826 = vunpack.c.l.b16 %v628
        %v827 = vunpack.c.l.b16 %v629
        %v828 = vunpack.c.l.b16 %v630
        %v829 = vunpack.c.l.b16 %v631
        %v830 = vunpack.c.l.b16 %v632
        %v831 = vunpack.c.l.b16 %v633
        %v832 = vunpack.c.l.b16 %v634
        %v833 = vunpack.c.l.b16 %v635
        %v834 = vunpack.c.l.b16 %v636
        %v835 = vunpack.c.l.b16 %v637
        %v836 = vunpack.c.l.b16 %v638
        %v837 = vunpack.c.l.b16 %v639
        %v838 = vunpack.c.l.b16 %v640
        %v839 = vunpack.c.l.b16 %v641
        %v840 = vunpack.c.l.b16 %v642
        %v841 = vunpack.c.l.b16 %v643
        %v842 = vunpack.c.l.b16 %v644
        %v843 = vunpack.c.l.b16 %v645
        %v844 = vunpack.c.l.b16 %v646
        %v845 = vunpack.c.l.b16 %v647
        %v846 = vunpack.c.l.b16 %v648
        %v847 = vunpack.c.l.b16 %v649
        %v848 = vpack.c.b16 %v753, %v752
        %v849 = vpack.c.b16 %v755, %v754
        %v850 = vpack.c.b16 %v757, %v756
        %v851 = vpack.c.b16 %v759, %v758
        %v852 = vpack.c.b16 %v761, %v760
        %v853 = vpack.c.b16 %v763, %v762
        %v854 = vpack.c.b16 %v765, %v764
        %v855 = vpack.c.b16 %v767, %v766
        %v856 = vpack.c.b16 %v769, %v768
        %v857 = vpack.c.b16 %v771, %v770
        %v858 = vpack.c.b16 %v773, %v772
        %v859 = vpack.c.b16 %v775, %v774
        %v860 = vpack.c.b16 %v777, %v776
        %v861 = vpack.c.b16 %v779, %v778
        %v862 = vpack.c.b16 %v781, %v780
        %v863 = vpack.c.b16 %v783, %v782
        %v864 = vpack.c.b16 %v785, %v784
        %v865 = vpack.c.b16 %v787, %v786
        %v866 = vpack.c.b16 %v789, %v788
        %v867 = vpack.c.b16 %v791, %v790
        %v868 = vpack.c.b16 %v793, %v792
        %v869 = vpack.c.b16 %v795, %v794
        %v870 = vpack.c.b16 %v797, %v796
        %v871 = vpack.c.b16 %v799, %v798
        %v872 = vpack.c.b16 %v801, %v800
        %v873 = vpack.c.b16 %v803, %v802
        %v874 = vpack.c.b16 %v805, %v804
        %v875 = vpack.c.b16 %v807, %v806
        %v876 = vpack.c.b16 %v809, %v808
        %v877 = vpack.c.b16 %v811, %v810
        %v878 = vpack.c.b16 %v813, %v812
        %v879 = vpack.c.b16 %v815, %v814
        %v880 = vpack.c.b16 %v817, %v816
        %v881 = vpack.c.b16 %v819, %v818
        %v882 = vpack.c.b16 %v821, %v820
        %v883 = vpack.c.b16 %v823, %v822
        %v884 = vpack.c.b16 %v825, %v824
        %v885 = vpack.c.b16 %v827, %v826
        %v886 = vpack.c.b16 %v829, %v828
        %v887 = vpack.c.b16 %v831, %v830
        %v888 = vpack.c.b16 %v833, %v832
        %v889 = vpack.c.b16 %v835, %v834
        %v890 = vpack.c.b16 %v837, %v836
        %v891 = vpack.c.b16 %v839, %v838
        %v892 = vpack.c.b16 %v841, %v840
        %v893 = vpack.c.b16 %v843, %v842
        %v894 = vpack.c.b16 %v845, %v844
        %v895 = vpack.c.b16 %v847, %v846
        %944 = vmatprep.subr.bf16.mxu0 0
        %945 = vmatpush1.bf16.msra.mxu0 %v848
        %946 = vmatprep.subr.bf16.mxu0 0
        %947 = vmatpush1.bf16.msra.mxu0 %v849
        %948 = vmatprep.subr.bf16.mxu0 0
        %949 = vmatpush1.bf16.msra.mxu0 %v850
        %950 = vmatprep.subr.bf16.mxu0 0
        %951 = vmatpush1.bf16.msra.mxu0 %v851
        %952 = vmatprep.subr.bf16.mxu0 0
        %953 = vmatpush1.bf16.msra.mxu0 %v852
        %954 = vmatprep.subr.bf16.mxu0 0
        %955 = vmatpush1.bf16.msra.mxu0 %v853
        %956 = vmatprep.subr.bf16.mxu0 0
        %957 = vmatpush1.bf16.msra.mxu0 %v854
        %958 = vmatprep.subr.bf16.mxu0 0
        %959 = vmatpush1.bf16.msra.mxu0 %v855
        %960 = vmatprep.subr.bf16.mxu0 0
        %961 = vmatpush1.bf16.msra.mxu0 %v856
        %962 = vmatprep.subr.bf16.mxu0 0
        %963 = vmatpush1.bf16.msra.mxu0 %v857
        %964 = vmatprep.subr.bf16.mxu0 0
        %965 = vmatpush1.bf16.msra.mxu0 %v858
        %966 = vmatprep.subr.bf16.mxu0 0
        %967 = vmatpush1.bf16.msra.mxu0 %v859
        %968 = vmatprep.subr.bf16.mxu0 0
        %969 = vmatpush1.bf16.msra.mxu0 %v860
        %970 = vmatprep.subr.bf16.mxu0 0
        %971 = vmatpush1.bf16.msra.mxu0 %v861
        %972 = vmatprep.subr.bf16.mxu0 0
        %973 = vmatpush1.bf16.msra.mxu0 %v862
        %974 = vmatprep.subr.bf16.mxu0 0
        %975 = vmatpush1.bf16.msra.mxu0 %v863
        %976 = vmatprep.mubr.bf16.mxu0 %v651
        %977 = vmatmul.mubr.bf16.gmra.mrb[0].mxu0 %v650
        %v978 = vpop.f32.mrb[0].mxu0
        %v979 = vadd.f32 0.0, %v978
        %v980 = vpop.f32.mrb[0].mxu0
        %v981 = vpop.f32.mrb[0].mxu0
        %v982 = vpop.f32.mrb[0].mxu0
        %983 = vdwg.mxu0
        %984 = vmatprep.subr.bf16.mxu0 0
        %985 = vmatpush1.bf16.msra.mxu0 %v864
        %986 = vmatprep.subr.bf16.mxu0 0
        %987 = vmatpush1.bf16.msra.mxu0 %v865
        %988 = vmatprep.subr.bf16.mxu0 0
        %989 = vmatpush1.bf16.msra.mxu0 %v866
        %990 = vmatprep.subr.bf16.mxu0 0
        %991 = vmatpush1.bf16.msra.mxu0 %v867
        %992 = vmatprep.subr.bf16.mxu0 0
        %993 = vmatpush1.bf16.msra.mxu0 %v868
        %994 = vmatprep.subr.bf16.mxu0 0
        %995 = vmatpush1.bf16.msra.mxu0 %v869
        %996 = vmatprep.subr.bf16.mxu0 0
        %997 = vmatpush1.bf16.msra.mxu0 %v870
        %998 = vmatprep.subr.bf16.mxu0 0
        %999 = vmatpush1.bf16.msra.mxu0 %v871
        %1000 = vmatprep.subr.bf16.mxu0 0
        %1001 = vmatpush1.bf16.msra.mxu0 %v872
        %1002 = vmatprep.subr.bf16.mxu0 0
        %1003 = vmatpush1.bf16.msra.mxu0 %v873
        %1004 = vmatprep.subr.bf16.mxu0 0
        %1005 = vmatpush1.bf16.msra.mxu0 %v874
        %1006 = vmatprep.subr.bf16.mxu0 0
        %1007 = vmatpush1.bf16.msra.mxu0 %v875
        %1008 = vmatprep.subr.bf16.mxu0 0
        %1009 = vmatpush1.bf16.msra.mxu0 %v876
        %1010 = vmatprep.subr.bf16.mxu0 0
        %1011 = vmatpush1.bf16.msra.mxu0 %v877
        %1012 = vmatprep.subr.bf16.mxu0 0
        %1013 = vmatpush1.bf16.msra.mxu0 %v878
        %1014 = vmatprep.subr.bf16.mxu0 0
        %1015 = vmatpush1.bf16.msra.mxu0 %v879
        %1016 = vmatprep.mubr.bf16.mxu0 %v653
        %1017 = vmatmul.mubr.bf16.gmra.mrb[0].mxu0 %v652
        %v1018 = vpop.f32.mrb[0].mxu0
        %v1019 = vadd.f32 %v979, %v1018
        %v1020 = vpop.f32.mrb[0].mxu0
        %v1021 = vpop.f32.mrb[0].mxu0
        %v1022 = vpop.f32.mrb[0].mxu0
        %1023 = vdwg.mxu0
        %1024 = vmatprep.subr.bf16.mxu0 0
        %1025 = vmatpush1.bf16.msra.mxu0 %v880
        %1026 = vmatprep.subr.bf16.mxu0 0
        %1027 = vmatpush1.bf16.msra.mxu0 %v881
        %1028 = vmatprep.subr.bf16.mxu0 0
        %1029 = vmatpush1.bf16.msra.mxu0 %v882
        %1030 = vmatprep.subr.bf16.mxu0 0
        %1031 = vmatpush1.bf16.msra.mxu0 %v883
        %1032 = vmatprep.subr.bf16.mxu0 0
        %1033 = vmatpush1.bf16.msra.mxu0 %v884
        %1034 = vmatprep.subr.bf16.mxu0 0
        %1035 = vmatpush1.bf16.msra.mxu0 %v885
        %1036 = vmatprep.subr.bf16.mxu0 0
        %1037 = vmatpush1.bf16.msra.mxu0 %v886
        %1038 = vmatprep.subr.bf16.mxu0 0
        %1039 = vmatpush1.bf16.msra.mxu0 %v887
        %1040 = vmatprep.subr.bf16.mxu0 0
        %1041 = vmatpush1.bf16.msra.mxu0 %v888
        %1042 = vmatprep.subr.bf16.mxu0 0
        %1043 = vmatpush1.bf16.msra.mxu0 %v889
        %1044 = vmatprep.subr.bf16.mxu0 0
        %1045 = vmatpush1.bf16.msra.mxu0 %v890
        %1046 = vmatprep.subr.bf16.mxu0 0
        %1047 = vmatpush1.bf16.msra.mxu0 %v891
        %1048 = vmatprep.subr.bf16.mxu0 0
        %1049 = vmatpush1.bf16.msra.mxu0 %v892
        %1050 = vmatprep.subr.bf16.mxu0 0
        %1051 = vmatpush1.bf16.msra.mxu0 %v893
        %1052 = vmatprep.subr.bf16.mxu0 0
        %1053 = vmatpush1.bf16.msra.mxu0 %v894
        %1054 = vmatprep.subr.bf16.mxu0 0
        %1055 = vmatpush1.bf16.msra.mxu0 %v895
        %1056 = vmatprep.mubr.bf16.mxu0 %v655
        %1057 = vmatmul.mubr.bf16.gmra.mrb[0].mxu0 %v654
        %v1058 = vpop.f32.mrb[0].mxu0
        %v1059 = vadd.f32 %v1019, %v1058
        %v1060 = vpop.f32.mrb[0].mxu0
        %v1061 = vpop.f32.mrb[0].mxu0
        %v1062 = vpop.f32.mrb[0].mxu0
        %1063 = vdwg.mxu0
        %v1064 = vadd.f32 %v553, %v1059
        %v1065 = vlaneseq
        %v1066 = vand.u32 %v1065, 127
        %vm1067 = vcmp.lt.s32.totalorder %v1066, 5
        %v1068 = vsel %vm1067, 0.0, -1e+30
        %v1069 = vld [vmem:[%s3] sm:$0x1]
        %v1070 = vld [vmem:[%s4] sm:$0x1]
        %1071 = vadd.xlane.f32.xlu0 %v1064
        %v1072 = vpop.xlane.xlu0 %1071
        %v1073 = vrcp.pop 128.0
        %v1074 = vmul.f32 %v1072, %v1073
        %v1075 = vsub.f32 %v1064, %v1074
        %v1076 = vmul.f32 %v1075, %v1075
        %1077 = vadd.xlane.f32.xlu0 %v1076
        %v1078 = vpop.xlane.xlu0 %1077
        %v1079 = vmul.f32 %v1078, %v1073
        %v1080 = vadd.f32 %v1079, 1e-05
        %v1081 = vrsqrt.pop %v1080
        %v1082 = vmul.f32 %v1075, %v1081
        %v1084 = vlaneseq
        %v1085 = vshrl.u32 %v1084, 7
        %v1086 = vsub.s32 0, %v1085
        %v1087 = vrot.slane %v1069, %v1086
        %v1089 = vmul.f32 %v1082, %v1087
        %v1091 = vlaneseq
        %v1092 = vshrl.u32 %v1091, 7
        %v1093 = vsub.s32 0, %v1092
        %v1094 = vrot.slane %v1070, %v1093
        %v1096 = vadd.f32 %v1089, %v1094
        %v1097 = vld [vmem:[%s5] sm:$0xff]
        %v1098 = vld [vmem:[%s5 + $0x8] sm:$0xf]
        %v1099 = vld [vmem:[%s5 + $0xc] sm:$0xff]
        %v1100 = vld [vmem:[%s5 + $0x14] sm:$0xf]
        %v1101 = vld [vmem:[%s5 + $0x18] sm:$0xff]
        %v1102 = vld [vmem:[%s5 + $0x20] sm:$0xf]
        %v1103 = vld [vmem:[%s5 + $0x24] sm:$0xff]
        %v1104 = vld [vmem:[%s5 + $0x2c] sm:$0xf]
        %v1105 = vld [vmem:[%s5 + $0x30] sm:$0xff]
        %v1106 = vld [vmem:[%s5 + $0x38] sm:$0xf]
        %v1107 = vld [vmem:[%s5 + $0x3c] sm:$0xff]
        %v1108 = vld [vmem:[%s5 + $0x44] sm:$0xf]
        %v1109 = vld [vmem:[%s5 + $0x48] sm:$0xff]
        %v1110 = vld [vmem:[%s5 + $0x50] sm:$0xf]
        %v1111 = vld [vmem:[%s5 + $0x54] sm:$0xff]
        %v1112 = vld [vmem:[%s5 + $0x5c] sm:$0xf]
        %v1113 = vld [vmem:[%s5 + $0x60] sm:$0xff]
        %v1114 = vld [vmem:[%s5 + $0x68] sm:$0xf]
        %v1115 = vld [vmem:[%s5 + $0x6c] sm:$0xff]
        %v1116 = vld [vmem:[%s5 + $0x74] sm:$0xf]
        %v1117 = vld [vmem:[%s5 + $0x78] sm:$0xff]
        %v1118 = vld [vmem:[%s5 + $0x80] sm:$0xf]
        %v1119 = vld [vmem:[%s5 + $0x84] sm:$0xff]
        %v1120 = vld [vmem:[%s5 + $0x8c] sm:$0xf]
        %v1121 = vld [vmem:[%s5 + $0x90] sm:$0xff]
        %v1122 = vld [vmem:[%s5 + $0x98] sm:$0xf]
        %v1123 = vld [vmem:[%s5 + $0x9c] sm:$0xff]
        %v1124 = vld [vmem:[%s5 + $0xa4] sm:$0xf]
        %v1125 = vld [vmem:[%s5 + $0xa8] sm:$0xff]
        %v1126 = vld [vmem:[%s5 + $0xb0] sm:$0xf]
        %v1127 = vld [vmem:[%s5 + $0xb4] sm:$0xff]
        %v1128 = vld [vmem:[%s5 + $0xbc] sm:$0xf]
        %v1129 = vld [vmem:[%s6] sm:$0x7]
        %v1130 = vpack.c.bf16 %v1096, %v1096
        %v1132 = vlaneseq
        %v1133 = vshrl.u32 %v1132, 7
        %v1134 = vsub.s32 0, %v1133
        %v1135 = vrot.slane %v1129, %v1134
        %v1136 = vlaneseq
        %v1137 = vshrl.u32 %v1136, 7
        %v1138 = vsub.s32 1, %v1137
        %v1139 = vrot.slane %v1129, %v1138
        %v1140 = vlaneseq
        %v1141 = vshrl.u32 %v1140, 7
        %v1142 = vsub.s32 2, %v1141
        %v1143 = vrot.slane %v1129, %v1142
        %v1179 = vunpack.c.l.b16 %v1097
        %v1180 = vunpack.c.h.b16 %v1097
        %v1181 = vunpack.c.l.b16 %v1098
        %v1182 = vunpack.c.l.b16 %v1099
        %v1183 = vunpack.c.h.b16 %v1099
        %v1184 = vunpack.c.l.b16 %v1100
        %v1185 = vunpack.c.l.b16 %v1101
        %v1186 = vunpack.c.h.b16 %v1101
        %v1187 = vunpack.c.l.b16 %v1102
        %v1188 = vunpack.c.l.b16 %v1103
        %v1189 = vunpack.c.h.b16 %v1103
        %v1190 = vunpack.c.l.b16 %v1104
        %v1191 = vunpack.c.l.b16 %v1105
        %v1192 = vunpack.c.h.b16 %v1105
        %v1193 = vunpack.c.l.b16 %v1106
        %v1194 = vunpack.c.l.b16 %v1107
        %v1195 = vunpack.c.h.b16 %v1107
        %v1196 = vunpack.c.l.b16 %v1108
        %v1197 = vunpack.c.l.b16 %v1109
        %v1198 = vunpack.c.h.b16 %v1109
        %v1199 = vunpack.c.l.b16 %v1110
        %v1200 = vunpack.c.l.b16 %v1111
        %v1201 = vunpack.c.h.b16 %v1111
        %v1202 = vunpack.c.l.b16 %v1112
        %v1203 = vunpack.c.l.b16 %v1113
        %v1204 = vunpack.c.h.b16 %v1113
        %v1205 = vunpack.c.l.b16 %v1114
        %v1206 = vunpack.c.l.b16 %v1115
        %v1207 = vunpack.c.h.b16 %v1115
        %v1208 = vunpack.c.l.b16 %v1116
        %v1209 = vunpack.c.l.b16 %v1117
        %v1210 = vunpack.c.h.b16 %v1117
        %v1211 = vunpack.c.l.b16 %v1118
        %v1212 = vunpack.c.l.b16 %v1119
        %v1213 = vunpack.c.h.b16 %v1119
        %v1214 = vunpack.c.l.b16 %v1120
        %v1215 = vunpack.c.l.b16 %v1121
        %v1216 = vunpack.c.h.b16 %v1121
        %v1217 = vunpack.c.l.b16 %v1122
        %v1218 = vunpack.c.l.b16 %v1123
        %v1219 = vunpack.c.h.b16 %v1123
        %v1220 = vunpack.c.l.b16 %v1124
        %v1221 = vunpack.c.l.b16 %v1125
        %v1222 = vunpack.c.h.b16 %v1125
        %v1223 = vunpack.c.l.b16 %v1126
        %v1224 = vunpack.c.l.b16 %v1127
        %v1225 = vunpack.c.h.b16 %v1127
        %v1226 = vunpack.c.l.b16 %v1128
        %v1227 = vpack.c.b16 %v1182, %v1179
        %v1228 = vpack.c.b16 %v1183, %v1180
        %v1229 = vpack.c.b16 %v1184, %v1181
        %v1230 = vpack.c.b16 %v1188, %v1185
        %v1231 = vpack.c.b16 %v1189, %v1186
        %v1232 = vpack.c.b16 %v1190, %v1187
        %v1233 = vpack.c.b16 %v1194, %v1191
        %v1234 = vpack.c.b16 %v1195, %v1192
        %v1235 = vpack.c.b16 %v1196, %v1193
        %v1236 = vpack.c.b16 %v1200, %v1197
        %v1237 = vpack.c.b16 %v1201, %v1198
        %v1238 = vpack.c.b16 %v1202, %v1199
        %v1239 = vpack.c.b16 %v1206, %v1203
        %v1240 = vpack.c.b16 %v1207, %v1204
        %v1241 = vpack.c.b16 %v1208, %v1205
        %v1242 = vpack.c.b16 %v1212, %v1209
        %v1243 = vpack.c.b16 %v1213, %v1210
        %v1244 = vpack.c.b16 %v1214, %v1211
        %v1245 = vpack.c.b16 %v1218, %v1215
        %v1246 = vpack.c.b16 %v1219, %v1216
        %v1247 = vpack.c.b16 %v1220, %v1217
        %v1248 = vpack.c.b16 %v1224, %v1221
        %v1249 = vpack.c.b16 %v1225, %v1222
        %v1250 = vpack.c.b16 %v1226, %v1223
        %1275 = vmatprep.subr.bf16.mxu0 %v1228
        %1276 = vmatpush1.bf16.msra.mxu0 %v1227
        %1277 = vmatprep.subr.bf16.mxu0 %v1231
        %1278 = vmatpush1.bf16.msra.mxu0 %v1230
        %1279 = vmatprep.subr.bf16.mxu0 %v1234
        %1280 = vmatpush1.bf16.msra.mxu0 %v1233
        %1281 = vmatprep.subr.bf16.mxu0 %v1237
        %1282 = vmatpush1.bf16.msra.mxu0 %v1236
        %1283 = vmatprep.subr.bf16.mxu0 %v1240
        %1284 = vmatpush1.bf16.msra.mxu0 %v1239
        %1285 = vmatprep.subr.bf16.mxu0 %v1243
        %1286 = vmatpush1.bf16.msra.mxu0 %v1242
        %1287 = vmatprep.subr.bf16.mxu0 %v1246
        %1288 = vmatpush1.bf16.msra.mxu0 %v1245
        %1289 = vmatprep.subr.bf16.mxu0 %v1249
        %1290 = vmatpush1.bf16.msra.mxu0 %v1248
        %1291 = vmatprep.subr.bf16.mxu0 0
        %1292 = vmatpush1.bf16.msra.mxu0 0
        %1293 = vmatprep.subr.bf16.mxu0 0
        %1294 = vmatpush1.bf16.msra.mxu0 0
        %1295 = vmatprep.subr.bf16.mxu0 0
        %1296 = vmatpush1.bf16.msra.mxu0 0
        %1297 = vmatprep.subr.bf16.mxu0 0
        %1298 = vmatpush1.bf16.msra.mxu0 0
        %1299 = vmatprep.subr.bf16.mxu0 0
        %1300 = vmatpush1.bf16.msra.mxu0 0
        %1301 = vmatprep.subr.bf16.mxu0 0
        %1302 = vmatpush1.bf16.msra.mxu0 0
        %1303 = vmatprep.subr.bf16.mxu0 0
        %1304 = vmatpush1.bf16.msra.mxu0 0
        %1305 = vmatprep.subr.bf16.mxu0 0
        %1306 = vmatpush1.bf16.msra.mxu0 0
        %1307 = vmatprep.mubr.bf16.mxu0 0
        %1308 = vmatmul.mubr.bf16.gmra.mrb[0].mxu0 %v1130
        %v1309 = vpop.f32.mrb[0].mxu0
        %v1310 = vadd.f32 %v1135, %v1309
        %v1311 = vpop.f32.mrb[0].mxu0
        %v1312 = vadd.f32 %v1139, %v1311
        %v1313 = vpop.f32.mrb[0].mxu0
        %v1314 = vpop.f32.mrb[0].mxu0
        %1315 = vdwg.mxu0
        %1316 = vmatprep.subr.bf16.mxu0 0
        %1317 = vmatpush1.bf16.msra.mxu0 %v1229
        %1318 = vmatprep.subr.bf16.mxu0 0
        %1319 = vmatpush1.bf16.msra.mxu0 %v1232
        %1320 = vmatprep.subr.bf16.mxu0 0
        %1321 = vmatpush1.bf16.msra.mxu0 %v1235
        %1322 = vmatprep.subr.bf16.mxu0 0
        %1323 = vmatpush1.bf16.msra.mxu0 %v1238
        %1324 = vmatprep.subr.bf16.mxu0 0
        %1325 = vmatpush1.bf16.msra.mxu0 %v1241
        %1326 = vmatprep.subr.bf16.mxu0 0
        %1327 = vmatpush1.bf16.msra.mxu0 %v1244
        %1328 = vmatprep.subr.bf16.mxu0 0
        %1329 = vmatpush1.bf16.msra.mxu0 %v1247
        %1330 = vmatprep.subr.bf16.mxu0 0
        %1331 = vmatpush1.bf16.msra.mxu0 %v1250
        %1332 = vmatprep.subr.bf16.mxu0 0
        %1333 = vmatpush1.bf16.msra.mxu0 0
        %1334 = vmatprep.subr.bf16.mxu0 0
        %1335 = vmatpush1.bf16.msra.mxu0 0
        %1336 = vmatprep.subr.bf16.mxu0 0
        %1337 = vmatpush1.bf16.msra.mxu0 0
        %1338 = vmatprep.subr.bf16.mxu0 0
        %1339 = vmatpush1.bf16.msra.mxu0 0
        %1340 = vmatprep.subr.bf16.mxu0 0
        %1341 = vmatpush1.bf16.msra.mxu0 0
        %1342 = vmatprep.subr.bf16.mxu0 0
        %1343 = vmatpush1.bf16.msra.mxu0 0
        %1344 = vmatprep.subr.bf16.mxu0 0
        %1345 = vmatpush1.bf16.msra.mxu0 0
        %1346 = vmatprep.subr.bf16.mxu0 0
        %1347 = vmatpush1.bf16.msra.mxu0 0
        %1348 = vmatprep.mubr.bf16.mxu0 0
        %1349 = vmatmul.mubr.bf16.gmra.mrb[0].mxu0 %v1130
        %v1350 = vpop.f32.mrb[0].mxu0
        %v1351 = vadd.f32 %v1143, %v1350
        %v1352 = vpop.f32.mrb[0].mxu0
        %v1353 = vpop.f32.mrb[0].mxu0
        %v1354 = vpop.f32.mrb[0].mxu0
        %1355 = vdwg.mxu0
        %v1356 = vpack.c.bf16 %v1310, %v1310
        %v1357 = vpack.c.bf16 %v1312, %v1312
        %vm1358 = vcmask 261120
        %v1360 = vsel %vm1358, %v1356, 0
        %v1363 = vsel %vm1358, %v1357, 0
        %1365 = vmatprep.subr.bf16.mxu0 0
        %1366 = vmatpush1.bf16.xpose.msra.mxu0 %v1363
        %1367 = vmatprep.subr.bf16.mxu0 0
        %1368 = vmatpush1.bf16.xpose.msra.mxu0 0
        %1369 = vmatprep.subr.bf16.mxu0 0
        %1370 = vmatpush1.bf16.xpose.msra.mxu0 0
        %1371 = vmatprep.subr.bf16.mxu0 0
        %1372 = vmatpush1.bf16.xpose.msra.mxu0 0
        %1373 = vmatprep.subr.bf16.mxu0 0
        %1374 = vmatpush1.bf16.xpose.msra.mxu0 0
        %1375 = vmatprep.subr.bf16.mxu0 0
        %1376 = vmatpush1.bf16.xpose.msra.mxu0 0
        %1377 = vmatprep.subr.bf16.mxu0 0
        %1378 = vmatpush1.bf16.xpose.msra.mxu0 0
        %1379 = vmatprep.subr.bf16.mxu0 0
        %1380 = vmatpush1.bf16.xpose.msra.mxu0 0
        %1381 = vmatprep.subr.bf16.mxu0 0
        %1382 = vmatpush1.bf16.xpose.msra.mxu0 0
        %1383 = vmatprep.subr.bf16.mxu0 0
        %1384 = vmatpush1.bf16.xpose.msra.mxu0 0
        %1385 = vmatprep.subr.bf16.mxu0 0
        %1386 = vmatpush1.bf16.xpose.msra.mxu0 0
        %1387 = vmatprep.subr.bf16.mxu0 0
        %1388 = vmatpush1.bf16.xpose.msra.mxu0 0
        %1389 = vmatprep.subr.bf16.mxu0 0
        %1390 = vmatpush1.bf16.xpose.msra.mxu0 0
        %1391 = vmatprep.subr.bf16.mxu0 0
        %1392 = vmatpush1.bf16.xpose.msra.mxu0 0
        %1393 = vmatprep.subr.bf16.mxu0 0
        %1394 = vmatpush1.bf16.xpose.msra.mxu0 0
        %1395 = vmatprep.subr.bf16.mxu0 0
        %1396 = vmatpush1.bf16.xpose.msra.mxu0 0
        %1397 = vmatprep.mubr.bf16.mxu0 0
        %1398 = vmatmul.mubr.bf16.gmra.mrb[0].mxu0 %v1360
        %v1399 = vpop.f32.mrb[0].mxu0
        %v1400 = vadd.f32 0.0, %v1399
        %v1401 = vpop.f32.mrb[0].mxu0
        %v1402 = vpop.f32.mrb[0].mxu0
        %v1403 = vpop.f32.mrb[0].mxu0
        %1404 = vdwg.mxu0
        %v1405 = vmul.f32 %v1400, 0.088388346
        %v1406 = vadd.f32 %v1405, %v1068
        %vm1407 = vcmask 64512
        %v1408 = vsel %vm1407, %v1406, -inf
        %1409 = vmax.xlane.f32.xlu0 %v1408
        %v1410 = vpop.xlane.xlu0 %1409
        %v1411 = vsub.f32 %v1406, %v1410
        %v1412 = vmul.f32 %v1411, 1.442695
        %v1413 = vpow.pop %v1412
        %v1414 = vsel %vm1407, %v1413, 0.0
        %1415 = vadd.xlane.f32.xlu0 %v1414
        %v1416 = vpop.xlane.xlu0 %1415
        %v1417 = vrcp.pop %v1416
        %v1418 = vmul.f32 %v1413, %v1417
        %v1419 = vpack.c.bf16 %v1418, %v1418
        %v1420 = vpack.c.bf16 %v1351, %v1351
        %v1422 = vsel %vm1407, %v1419, 0
        %vm1424 = vcmask 1043456
        %v1426 = vsel %vm1424, %v1420, 0
        %1428 = vmatprep.subr.bf16.mxu0 0
        %1429 = vmatpush1.bf16.msra.mxu0 %v1426
        %1430 = vmatprep.subr.bf16.mxu0 0
        %1431 = vmatpush1.bf16.msra.mxu0 0
        %1432 = vmatprep.subr.bf16.mxu0 0
        %1433 = vmatpush1.bf16.msra.mxu0 0
        %1434 = vmatprep.subr.bf16.mxu0 0
        %1435 = vmatpush1.bf16.msra.mxu0 0
        %1436 = vmatprep.subr.bf16.mxu0 0
        %1437 = vmatpush1.bf16.msra.mxu0 0
        %1438 = vmatprep.subr.bf16.mxu0 0
        %1439 = vmatpush1.bf16.msra.mxu0 0
        %1440 = vmatprep.subr.bf16.mxu0 0
        %1441 = vmatpush1.bf16.msra.mxu0 0
        %1442 = vmatprep.subr.bf16.mxu0 0
        %1443 = vmatpush1.bf16.msra.mxu0 0
        %1444 = vmatprep.subr.bf16.mxu0 0
        %1445 = vmatpush1.bf16.msra.mxu0 0
        %1446 = vmatprep.subr.bf16.mxu0 0
        %1447 = vmatpush1.bf16.msra.mxu0 0
        %1448 = vmatprep.subr.bf16.mxu0 0
        %1449 = vmatpush1.bf16.msra.mxu0 0
        %1450 = vmatprep.subr.bf16.mxu0 0
        %1451 = vmatpush1.bf16.msra.mxu0 0
        %1452 = vmatprep.subr.bf16.mxu0 0
        %1453 = vmatpush1.bf16.msra.mxu0 0
        %1454 = vmatprep.subr.bf16.mxu0 0
        %1455 = vmatpush1.bf16.msra.mxu0 0
        %1456 = vmatprep.subr.bf16.mxu0 0
        %1457 = vmatpush1.bf16.msra.mxu0 0
        %1458 = vmatprep.subr.bf16.mxu0 0
        %1459 = vmatpush1.bf16.msra.mxu0 0
        %1460 = vmatprep.mubr.bf16.mxu0 0
        %1461 = vmatmul.mubr.bf16.gmra.mrb[0].mxu0 %v1422
        %v1462 = vpop.f32.mrb[0].mxu0
        %v1463 = vadd.f32 0.0, %v1462
        %v1464 = vpop.f32.mrb[0].mxu0
        %v1465 = vpop.f32.mrb[0].mxu0
        %v1466 = vpop.f32.mrb[0].mxu0
        %1467 = vdwg.mxu0
        %1469 = vrot.lane.b32.xlu0 %v1356, 96
        %v1470 = vpop.permute.xlu0 %1469
        %1472 = vrot.lane.b32.xlu0 %v1357, 96
        %v1473 = vpop.permute.xlu0 %1472
        %v1475 = vsel %vm1358, %v1470, 0
        %v1478 = vsel %vm1358, %v1473, 0
        %1480 = vmatprep.subr.bf16.mxu0 0
        %1481 = vmatpush1.bf16.xpose.msra.mxu0 %v1478
        %1482 = vmatprep.subr.bf16.mxu0 0
        %1483 = vmatpush1.bf16.xpose.msra.mxu0 0
        %1484 = vmatprep.subr.bf16.mxu0 0
        %1485 = vmatpush1.bf16.xpose.msra.mxu0 0
        %1486 = vmatprep.subr.bf16.mxu0 0
        %1487 = vmatpush1.bf16.xpose.msra.mxu0 0
        %1488 = vmatprep.subr.bf16.mxu0 0
        %1489 = vmatpush1.bf16.xpose.msra.mxu0 0
        %1490 = vmatprep.subr.bf16.mxu0 0
        %1491 = vmatpush1.bf16.xpose.msra.mxu0 0
        %1492 = vmatprep.subr.bf16.mxu0 0
        %1493 = vmatpush1.bf16.xpose.msra.mxu0 0
        %1494 = vmatprep.subr.bf16.mxu0 0
        %1495 = vmatpush1.bf16.xpose.msra.mxu0 0
        %1496 = vmatprep.subr.bf16.mxu0 0
        %1497 = vmatpush1.bf16.xpose.msra.mxu0 0
        %1498 = vmatprep.subr.bf16.mxu0 0
        %1499 = vmatpush1.bf16.xpose.msra.mxu0 0
        %1500 = vmatprep.subr.bf16.mxu0 0
        %1501 = vmatpush1.bf16.xpose.msra.mxu0 0
        %1502 = vmatprep.subr.bf16.mxu0 0
        %1503 = vmatpush1.bf16.xpose.msra.mxu0 0
        %1504 = vmatprep.subr.bf16.mxu0 0
        %1505 = vmatpush1.bf16.xpose.msra.mxu0 0
        %1506 = vmatprep.subr.bf16.mxu0 0
        %1507 = vmatpush1.bf16.xpose.msra.mxu0 0
        %1508 = vmatprep.subr.bf16.mxu0 0
        %1509 = vmatpush1.bf16.xpose.msra.mxu0 0
        %1510 = vmatprep.subr.bf16.mxu0 0
        %1511 = vmatpush1.bf16.xpose.msra.mxu0 0
        %1512 = vmatprep.mubr.bf16.mxu0 0
        %1513 = vmatmul.mubr.bf16.gmra.mrb[0].mxu0 %v1475
        %v1514 = vpop.f32.mrb[0].mxu0
        %v1515 = vadd.f32 0.0, %v1514
        %v1516 = vpop.f32.mrb[0].mxu0
        %v1517 = vpop.f32.mrb[0].mxu0
        %v1518 = vpop.f32.mrb[0].mxu0
        %1519 = vdwg.mxu0
        %v1520 = vmul.f32 %v1515, 0.088388346
        %v1521 = vadd.f32 %v1520, %v1068
        %v1522 = vsel %vm1407, %v1521, -inf
        %1523 = vmax.xlane.f32.xlu0 %v1522
        %v1524 = vpop.xlane.xlu0 %1523
        %v1525 = vsub.f32 %v1521, %v1524
        %v1526 = vmul.f32 %v1525, 1.442695
        %v1527 = vpow.pop %v1526
        %v1528 = vsel %vm1407, %v1527, 0.0
        %1529 = vadd.xlane.f32.xlu0 %v1528
        %v1530 = vpop.xlane.xlu0 %1529
        %v1531 = vrcp.pop %v1530
        %v1532 = vmul.f32 %v1527, %v1531
        %v1533 = vpack.c.bf16 %v1532, %v1532
        %1535 = vrot.lane.b32.xlu0 %v1420, 96
        %v1536 = vpop.permute.xlu0 %1535
        %v1538 = vsel %vm1407, %v1533, 0
        %v1541 = vsel %vm1424, %v1536, 0
        %1543 = vmatprep.subr.bf16.mxu0 0
        %1544 = vmatpush1.bf16.msra.mxu0 %v1541
        %1545 = vmatprep.subr.bf16.mxu0 0
        %1546 = vmatpush1.bf16.msra.mxu0 0
        %1547 = vmatprep.subr.bf16.mxu0 0
        %1548 = vmatpush1.bf16.msra.mxu0 0
        %1549 = vmatprep.subr.bf16.mxu0 0
        %1550 = vmatpush1.bf16.msra.mxu0 0
        %1551 = vmatprep.subr.bf16.mxu0 0
        %1552 = vmatpush1.bf16.msra.mxu0 0
        %1553 = vmatprep.subr.bf16.mxu0 0
        %1554 = vmatpush1.bf16.msra.mxu0 0
        %1555 = vmatprep.subr.bf16.mxu0 0
        %1556 = vmatpush1.bf16.msra.mxu0 0
        %1557 = vmatprep.subr.bf16.mxu0 0
        %1558 = vmatpush1.bf16.msra.mxu0 0
        %1559 = vmatprep.subr.bf16.mxu0 0
        %1560 = vmatpush1.bf16.msra.mxu0 0
        %1561 = vmatprep.subr.bf16.mxu0 0
        %1562 = vmatpush1.bf16.msra.mxu0 0
        %1563 = vmatprep.subr.bf16.mxu0 0
        %1564 = vmatpush1.bf16.msra.mxu0 0
        %1565 = vmatprep.subr.bf16.mxu0 0
        %1566 = vmatpush1.bf16.msra.mxu0 0
        %1567 = vmatprep.subr.bf16.mxu0 0
        %1568 = vmatpush1.bf16.msra.mxu0 0
        %1569 = vmatprep.subr.bf16.mxu0 0
        %1570 = vmatpush1.bf16.msra.mxu0 0
        %1571 = vmatprep.subr.bf16.mxu0 0
        %1572 = vmatpush1.bf16.msra.mxu0 0
        %1573 = vmatprep.subr.bf16.mxu0 0
        %1574 = vmatpush1.bf16.msra.mxu0 0
        %1575 = vmatprep.mubr.bf16.mxu0 0
        %1576 = vmatmul.mubr.bf16.gmra.mrb[0].mxu0 %v1538
        %v1577 = vpop.f32.mrb[0].mxu0
        %v1578 = vadd.f32 0.0, %v1577
        %v1579 = vpop.f32.mrb[0].mxu0
        %v1580 = vpop.f32.mrb[0].mxu0
        %v1581 = vpop.f32.mrb[0].mxu0
        %1582 = vdwg.mxu0
        %1583 = vrot.lane.b32.xlu0 %v1356, 64
        %v1584 = vpop.permute.xlu0 %1583
        %1585 = vrot.lane.b32.xlu0 %v1357, 64
        %v1586 = vpop.permute.xlu0 %1585
        %v1588 = vsel %vm1358, %v1584, 0
        %v1591 = vsel %vm1358, %v1586, 0
        %1593 = vmatprep.subr.bf16.mxu0 0
        %1594 = vmatpush1.bf16.xpose.msra.mxu0 %v1591
        %1595 = vmatprep.subr.bf16.mxu0 0
        %1596 = vmatpush1.bf16.xpose.msra.mxu0 0
        %1597 = vmatprep.subr.bf16.mxu0 0
        %1598 = vmatpush1.bf16.xpose.msra.mxu0 0
        %1599 = vmatprep.subr.bf16.mxu0 0
        %1600 = vmatpush1.bf16.xpose.msra.mxu0 0
        %1601 = vmatprep.subr.bf16.mxu0 0
        %1602 = vmatpush1.bf16.xpose.msra.mxu0 0
        %1603 = vmatprep.subr.bf16.mxu0 0
        %1604 = vmatpush1.bf16.xpose.msra.mxu0 0
        %1605 = vmatprep.subr.bf16.mxu0 0
        %1606 = vmatpush1.bf16.xpose.msra.mxu0 0
        %1607 = vmatprep.subr.bf16.mxu0 0
        %1608 = vmatpush1.bf16.xpose.msra.mxu0 0
        %1609 = vmatprep.subr.bf16.mxu0 0
        %1610 = vmatpush1.bf16.xpose.msra.mxu0 0
        %1611 = vmatprep.subr.bf16.mxu0 0
        %1612 = vmatpush1.bf16.xpose.msra.mxu0 0
        %1613 = vmatprep.subr.bf16.mxu0 0
        %1614 = vmatpush1.bf16.xpose.msra.mxu0 0
        %1615 = vmatprep.subr.bf16.mxu0 0
        %1616 = vmatpush1.bf16.xpose.msra.mxu0 0
        %1617 = vmatprep.subr.bf16.mxu0 0
        %1618 = vmatpush1.bf16.xpose.msra.mxu0 0
        %1619 = vmatprep.subr.bf16.mxu0 0
        %1620 = vmatpush1.bf16.xpose.msra.mxu0 0
        %1621 = vmatprep.subr.bf16.mxu0 0
        %1622 = vmatpush1.bf16.xpose.msra.mxu0 0
        %1623 = vmatprep.subr.bf16.mxu0 0
        %1624 = vmatpush1.bf16.xpose.msra.mxu0 0
        %1625 = vmatprep.mubr.bf16.mxu0 0
        %1626 = vmatmul.mubr.bf16.gmra.mrb[0].mxu0 %v1588
        %v1627 = vpop.f32.mrb[0].mxu0
        %v1628 = vadd.f32 0.0, %v1627
        %v1629 = vpop.f32.mrb[0].mxu0
        %v1630 = vpop.f32.mrb[0].mxu0
        %v1631 = vpop.f32.mrb[0].mxu0
        %1632 = vdwg.mxu0
        %v1633 = vmul.f32 %v1628, 0.088388346
        %v1634 = vadd.f32 %v1633, %v1068
        %v1635 = vsel %vm1407, %v1634, -inf
        %1636 = vmax.xlane.f32.xlu0 %v1635
        %v1637 = vpop.xlane.xlu0 %1636
        %v1638 = vsub.f32 %v1634, %v1637
        %v1639 = vmul.f32 %v1638, 1.442695
        %v1640 = vpow.pop %v1639
        %v1641 = vsel %vm1407, %v1640, 0.0
        %1642 = vadd.xlane.f32.xlu0 %v1641
        %v1643 = vpop.xlane.xlu0 %1642
        %v1644 = vrcp.pop %v1643
        %v1645 = vmul.f32 %v1640, %v1644
        %v1646 = vpack.c.bf16 %v1645, %v1645
        %1647 = vrot.lane.b32.xlu0 %v1420, 64
        %v1648 = vpop.permute.xlu0 %1647
        %v1650 = vsel %vm1407, %v1646, 0
        %v1653 = vsel %vm1424, %v1648, 0
        %1655 = vmatprep.subr.bf16.mxu0 0
        %1656 = vmatpush1.bf16.msra.mxu0 %v1653
        %1657 = vmatprep.subr.bf16.mxu0 0
        %1658 = vmatpush1.bf16.msra.mxu0 0
        %1659 = vmatprep.subr.bf16.mxu0 0
        %1660 = vmatpush1.bf16.msra.mxu0 0
        %1661 = vmatprep.subr.bf16.mxu0 0
        %1662 = vmatpush1.bf16.msra.mxu0 0
        %1663 = vmatprep.subr.bf16.mxu0 0
        %1664 = vmatpush1.bf16.msra.mxu0 0
        %1665 = vmatprep.subr.bf16.mxu0 0
        %1666 = vmatpush1.bf16.msra.mxu0 0
        %1667 = vmatprep.subr.bf16.mxu0 0
        %1668 = vmatpush1.bf16.msra.mxu0 0
        %1669 = vmatprep.subr.bf16.mxu0 0
        %1670 = vmatpush1.bf16.msra.mxu0 0
        %1671 = vmatprep.subr.bf16.mxu0 0
        %1672 = vmatpush1.bf16.msra.mxu0 0
        %1673 = vmatprep.subr.bf16.mxu0 0
        %1674 = vmatpush1.bf16.msra.mxu0 0
        %1675 = vmatprep.subr.bf16.mxu0 0
        %1676 = vmatpush1.bf16.msra.mxu0 0
        %1677 = vmatprep.subr.bf16.mxu0 0
        %1678 = vmatpush1.bf16.msra.mxu0 0
        %1679 = vmatprep.subr.bf16.mxu0 0
        %1680 = vmatpush1.bf16.msra.mxu0 0
        %1681 = vmatprep.subr.bf16.mxu0 0
        %1682 = vmatpush1.bf16.msra.mxu0 0
        %1683 = vmatprep.subr.bf16.mxu0 0
        %1684 = vmatpush1.bf16.msra.mxu0 0
        %1685 = vmatprep.subr.bf16.mxu0 0
        %1686 = vmatpush1.bf16.msra.mxu0 0
        %1687 = vmatprep.mubr.bf16.mxu0 0
        %1688 = vmatmul.mubr.bf16.gmra.mrb[0].mxu0 %v1650
        %v1689 = vpop.f32.mrb[0].mxu0
        %v1690 = vadd.f32 0.0, %v1689
        %v1691 = vpop.f32.mrb[0].mxu0
        %v1692 = vpop.f32.mrb[0].mxu0
        %v1693 = vpop.f32.mrb[0].mxu0
        %1694 = vdwg.mxu0
        %1695 = vrot.lane.b32.xlu0 %v1356, 32
        %v1696 = vpop.permute.xlu0 %1695
        %1697 = vrot.lane.b32.xlu0 %v1357, 32
        %v1698 = vpop.permute.xlu0 %1697
        %v1700 = vsel %vm1358, %v1696, 0
        %v1703 = vsel %vm1358, %v1698, 0
        %1705 = vmatprep.subr.bf16.mxu0 0
        %1706 = vmatpush1.bf16.xpose.msra.mxu0 %v1703
        %1707 = vmatprep.subr.bf16.mxu0 0
        %1708 = vmatpush1.bf16.xpose.msra.mxu0 0
        %1709 = vmatprep.subr.bf16.mxu0 0
        %1710 = vmatpush1.bf16.xpose.msra.mxu0 0
        %1711 = vmatprep.subr.bf16.mxu0 0
        %1712 = vmatpush1.bf16.xpose.msra.mxu0 0
        %1713 = vmatprep.subr.bf16.mxu0 0
        %1714 = vmatpush1.bf16.xpose.msra.mxu0 0
        %1715 = vmatprep.subr.bf16.mxu0 0
        %1716 = vmatpush1.bf16.xpose.msra.mxu0 0
        %1717 = vmatprep.subr.bf16.mxu0 0
        %1718 = vmatpush1.bf16.xpose.msra.mxu0 0
        %1719 = vmatprep.subr.bf16.mxu0 0
        %1720 = vmatpush1.bf16.xpose.msra.mxu0 0
        %1721 = vmatprep.subr.bf16.mxu0 0
        %1722 = vmatpush1.bf16.xpose.msra.mxu0 0
        %1723 = vmatprep.subr.bf16.mxu0 0
        %1724 = vmatpush1.bf16.xpose.msra.mxu0 0
        %1725 = vmatprep.subr.bf16.mxu0 0
        %1726 = vmatpush1.bf16.xpose.msra.mxu0 0
        %1727 = vmatprep.subr.bf16.mxu0 0
        %1728 = vmatpush1.bf16.xpose.msra.mxu0 0
        %1729 = vmatprep.subr.bf16.mxu0 0
        %1730 = vmatpush1.bf16.xpose.msra.mxu0 0
        %1731 = vmatprep.subr.bf16.mxu0 0
        %1732 = vmatpush1.bf16.xpose.msra.mxu0 0
        %1733 = vmatprep.subr.bf16.mxu0 0
        %1734 = vmatpush1.bf16.xpose.msra.mxu0 0
        %1735 = vmatprep.subr.bf16.mxu0 0
        %1736 = vmatpush1.bf16.xpose.msra.mxu0 0
        %1737 = vmatprep.mubr.bf16.mxu0 0
        %1738 = vmatmul.mubr.bf16.gmra.mrb[0].mxu0 %v1700
        %v1739 = vpop.f32.mrb[0].mxu0
        %v1740 = vadd.f32 0.0, %v1739
        %v1741 = vpop.f32.mrb[0].mxu0
        %v1742 = vpop.f32.mrb[0].mxu0
        %v1743 = vpop.f32.mrb[0].mxu0
        %1744 = vdwg.mxu0
        %v1745 = vmul.f32 %v1740, 0.088388346
        %v1746 = vadd.f32 %v1745, %v1068
        %v1747 = vsel %vm1407, %v1746, -inf
        %1748 = vmax.xlane.f32.xlu0 %v1747
        %v1749 = vpop.xlane.xlu0 %1748
        %v1750 = vsub.f32 %v1746, %v1749
        %v1751 = vmul.f32 %v1750, 1.442695
        %v1752 = vpow.pop %v1751
        %v1753 = vsel %vm1407, %v1752, 0.0
        %1754 = vadd.xlane.f32.xlu0 %v1753
        %v1755 = vpop.xlane.xlu0 %1754
        %v1756 = vrcp.pop %v1755
        %v1757 = vmul.f32 %v1752, %v1756
        %v1758 = vpack.c.bf16 %v1757, %v1757
        %1759 = vrot.lane.b32.xlu0 %v1420, 32
        %v1760 = vpop.permute.xlu0 %1759
        %v1762 = vsel %vm1407, %v1758, 0
        %v1765 = vsel %vm1424, %v1760, 0
        %1767 = vmatprep.subr.bf16.mxu0 0
        %1768 = vmatpush1.bf16.msra.mxu0 %v1765
        %1769 = vmatprep.subr.bf16.mxu0 0
        %1770 = vmatpush1.bf16.msra.mxu0 0
        %1771 = vmatprep.subr.bf16.mxu0 0
        %1772 = vmatpush1.bf16.msra.mxu0 0
        %1773 = vmatprep.subr.bf16.mxu0 0
        %1774 = vmatpush1.bf16.msra.mxu0 0
        %1775 = vmatprep.subr.bf16.mxu0 0
        %1776 = vmatpush1.bf16.msra.mxu0 0
        %1777 = vmatprep.subr.bf16.mxu0 0
        %1778 = vmatpush1.bf16.msra.mxu0 0
        %1779 = vmatprep.subr.bf16.mxu0 0
        %1780 = vmatpush1.bf16.msra.mxu0 0
        %1781 = vmatprep.subr.bf16.mxu0 0
        %1782 = vmatpush1.bf16.msra.mxu0 0
        %1783 = vmatprep.subr.bf16.mxu0 0
        %1784 = vmatpush1.bf16.msra.mxu0 0
        %1785 = vmatprep.subr.bf16.mxu0 0
        %1786 = vmatpush1.bf16.msra.mxu0 0
        %1787 = vmatprep.subr.bf16.mxu0 0
        %1788 = vmatpush1.bf16.msra.mxu0 0
        %1789 = vmatprep.subr.bf16.mxu0 0
        %1790 = vmatpush1.bf16.msra.mxu0 0
        %1791 = vmatprep.subr.bf16.mxu0 0
        %1792 = vmatpush1.bf16.msra.mxu0 0
        %1793 = vmatprep.subr.bf16.mxu0 0
        %1794 = vmatpush1.bf16.msra.mxu0 0
        %1795 = vmatprep.subr.bf16.mxu0 0
        %1796 = vmatpush1.bf16.msra.mxu0 0
        %1797 = vmatprep.subr.bf16.mxu0 0
        %1798 = vmatpush1.bf16.msra.mxu0 0
        %1799 = vmatprep.mubr.bf16.mxu0 0
        %1800 = vmatmul.mubr.bf16.gmra.mrb[0].mxu0 %v1762
        %v1801 = vpop.f32.mrb[0].mxu0
        %v1802 = vadd.f32 0.0, %v1801
        %v1803 = vpop.f32.mrb[0].mxu0
        %v1804 = vpop.f32.mrb[0].mxu0
        %v1805 = vpop.f32.mrb[0].mxu0
        %1806 = vdwg.mxu0
        %1808 = vrot.lane.b32.xlu0 %v1578, 32
        %v1809 = vpop.permute.xlu0 %1808
        %1812 = vrot.lane.b32.xlu0 %v1690, 64
        %v1813 = vpop.permute.xlu0 %1812
        %1816 = vrot.lane.b32.xlu0 %v1802, 96
        %v1817 = vpop.permute.xlu0 %1816
        %v1819 = vsel %vm1358, %v1463, %v1809
        %vm1820 = vcmask 523264
        %v1821 = vsel %vm1820, %v1819, %v1813
        %vm1822 = vcmask 785408
        %v1823 = vsel %vm1822, %v1821, %v1817
        %v1824 = vadd.f32 %v1064, %v1823
        %v1825 = vld [vmem:[%s7] sm:$0x1]
        %v1826 = vld [vmem:[%s8] sm:$0x1]
        %1827 = vadd.xlane.f32.xlu0 %v1824
        %v1828 = vpop.xlane.xlu0 %1827
        %v1829 = vmul.f32 %v1828, %v1073
        %v1830 = vsub.f32 %v1824, %v1829
        %v1831 = vmul.f32 %v1830, %v1830
        %1832 = vadd.xlane.f32.xlu0 %v1831
        %v1833 = vpop.xlane.xlu0 %1832
        %v1834 = vmul.f32 %v1833, %v1073
        %v1835 = vadd.f32 %v1834, 1e-05
        %v1836 = vrsqrt.pop %v1835
        %v1837 = vmul.f32 %v1830, %v1836
        %v1839 = vlaneseq
        %v1840 = vshrl.u32 %v1839, 7
        %v1841 = vsub.s32 0, %v1840
        %v1842 = vrot.slane %v1825, %v1841
        %v1844 = vmul.f32 %v1837, %v1842
        %v1846 = vlaneseq
        %v1847 = vshrl.u32 %v1846, 7
        %v1848 = vsub.s32 0, %v1847
        %v1849 = vrot.slane %v1826, %v1848
        %v1851 = vadd.f32 %v1844, %v1849
        %v1852 = vld [vmem:[%s9] sm:$0xff]
        %v1853 = vld [vmem:[%s9 + $0x8] sm:$0xff]
        %v1854 = vld [vmem:[%s9 + $0x10] sm:$0xff]
        %v1855 = vld [vmem:[%s9 + $0x18] sm:$0xff]
        %v1856 = vld [vmem:[%s9 + $0x20] sm:$0xff]
        %v1857 = vld [vmem:[%s9 + $0x28] sm:$0xff]
        %v1858 = vld [vmem:[%s9 + $0x30] sm:$0xff]
        %v1859 = vld [vmem:[%s9 + $0x38] sm:$0xff]
        %v1860 = vld [vmem:[%s9 + $0x40] sm:$0xff]
        %v1861 = vld [vmem:[%s9 + $0x48] sm:$0xff]
        %v1862 = vld [vmem:[%s9 + $0x50] sm:$0xff]
        %v1863 = vld [vmem:[%s9 + $0x58] sm:$0xff]
        %v1864 = vld [vmem:[%s9 + $0x60] sm:$0xff]
        %v1865 = vld [vmem:[%s9 + $0x68] sm:$0xff]
        %v1866 = vld [vmem:[%s9 + $0x70] sm:$0xff]
        %v1867 = vld [vmem:[%s9 + $0x78] sm:$0xff]
        %v1868 = vld [vmem:[%s10] sm:$0x3]
        %v1869 = vpack.c.bf16 %v1851, %v1851
        %v1871 = vlaneseq
        %v1872 = vshrl.u32 %v1871, 7
        %v1873 = vsub.s32 0, %v1872
        %v1874 = vrot.slane %v1868, %v1873
        %v1875 = vlaneseq
        %v1876 = vshrl.u32 %v1875, 7
        %v1877 = vsub.s32 1, %v1876
        %v1878 = vrot.slane %v1868, %v1877
        %v1897 = vunpack.c.l.b16 %v1852
        %v1898 = vunpack.c.h.b16 %v1852
        %v1899 = vunpack.c.l.b16 %v1853
        %v1900 = vunpack.c.h.b16 %v1853
        %v1901 = vunpack.c.l.b16 %v1854
        %v1902 = vunpack.c.h.b16 %v1854
        %v1903 = vunpack.c.l.b16 %v1855
        %v1904 = vunpack.c.h.b16 %v1855
        %v1905 = vunpack.c.l.b16 %v1856
        %v1906 = vunpack.c.h.b16 %v1856
        %v1907 = vunpack.c.l.b16 %v1857
        %v1908 = vunpack.c.h.b16 %v1857
        %v1909 = vunpack.c.l.b16 %v1858
        %v1910 = vunpack.c.h.b16 %v1858
        %v1911 = vunpack.c.l.b16 %v1859
        %v1912 = vunpack.c.h.b16 %v1859
        %v1913 = vunpack.c.l.b16 %v1860
        %v1914 = vunpack.c.h.b16 %v1860
        %v1915 = vunpack.c.l.b16 %v1861
        %v1916 = vunpack.c.h.b16 %v1861
        %v1917 = vunpack.c.l.b16 %v1862
        %v1918 = vunpack.c.h.b16 %v1862
        %v1919 = vunpack.c.l.b16 %v1863
        %v1920 = vunpack.c.h.b16 %v1863
        %v1921 = vunpack.c.l.b16 %v1864
        %v1922 = vunpack.c.h.b16 %v1864
        %v1923 = vunpack.c.l.b16 %v1865
        %v1924 = vunpack.c.h.b16 %v1865
        %v1925 = vunpack.c.l.b16 %v1866
        %v1926 = vunpack.c.h.b16 %v1866
        %v1927 = vunpack.c.l.b16 %v1867
        %v1928 = vunpack.c.h.b16 %v1867
        %v1929 = vpack.c.b16 %v1899, %v1897
        %v1930 = vpack.c.b16 %v1900, %v1898
        %v1931 = vpack.c.b16 %v1903, %v1901
        %v1932 = vpack.c.b16 %v1904, %v1902
        %v1933 = vpack.c.b16 %v1907, %v1905
        %v1934 = vpack.c.b16 %v1908, %v1906
        %v1935 = vpack.c.b16 %v1911, %v1909
        %v1936 = vpack.c.b16 %v1912, %v1910
        %v1937 = vpack.c.b16 %v1915, %v1913
        %v1938 = vpack.c.b16 %v1916, %v1914
        %v1939 = vpack.c.b16 %v1919, %v1917
        %v1940 = vpack.c.b16 %v1920, %v1918
        %v1941 = vpack.c.b16 %v1923, %v1921
        %v1942 = vpack.c.b16 %v1924, %v1922
        %v1943 = vpack.c.b16 %v1927, %v1925
        %v1944 = vpack.c.b16 %v1928, %v1926
        %1961 = vmatprep.subr.bf16.mxu0 %v1930
        %1962 = vmatpush1.bf16.msra.mxu0 %v1929
        %1963 = vmatprep.subr.bf16.mxu0 %v1932
        %1964 = vmatpush1.bf16.msra.mxu0 %v1931
        %1965 = vmatprep.subr.bf16.mxu0 %v1934
        %1966 = vmatpush1.bf16.msra.mxu0 %v1933
        %1967 = vmatprep.subr.bf16.mxu0 %v1936
        %1968 = vmatpush1.bf16.msra.mxu0 %v1935
        %1969 = vmatprep.subr.bf16.mxu0 %v1938
        %1970 = vmatpush1.bf16.msra.mxu0 %v1937
        %1971 = vmatprep.subr.bf16.mxu0 %v1940
        %1972 = vmatpush1.bf16.msra.mxu0 %v1939
        %1973 = vmatprep.subr.bf16.mxu0 %v1942
        %1974 = vmatpush1.bf16.msra.mxu0 %v1941
        %1975 = vmatprep.subr.bf16.mxu0 %v1944
        %1976 = vmatpush1.bf16.msra.mxu0 %v1943
        %1977 = vmatprep.subr.bf16.mxu0 0
        %1978 = vmatpush1.bf16.msra.mxu0 0
        %1979 = vmatprep.subr.bf16.mxu0 0
        %1980 = vmatpush1.bf16.msra.mxu0 0
        %1981 = vmatprep.subr.bf16.mxu0 0
        %1982 = vmatpush1.bf16.msra.mxu0 0
        %1983 = vmatprep.subr.bf16.mxu0 0
        %1984 = vmatpush1.bf16.msra.mxu0 0
        %1985 = vmatprep.subr.bf16.mxu0 0
        %1986 = vmatpush1.bf16.msra.mxu0 0
        %1987 = vmatprep.subr.bf16.mxu0 0
        %1988 = vmatpush1.bf16.msra.mxu0 0
        %1989 = vmatprep.subr.bf16.mxu0 0
        %1990 = vmatpush1.bf16.msra.mxu0 0
        %1991 = vmatprep.subr.bf16.mxu0 0
        %1992 = vmatpush1.bf16.msra.mxu0 0
        %1993 = vmatprep.mubr.bf16.mxu0 0
        %1994 = vmatmul.mubr.bf16.gmra.mrb[0].mxu0 %v1869
        %v1995 = vpop.f32.mrb[0].mxu0
        %v1996 = vadd.f32 %v1874, %v1995
        %v1997 = vpop.f32.mrb[0].mxu0
        %v1998 = vadd.f32 %v1878, %v1997
        %v1999 = vpop.f32.mrb[0].mxu0
        %v2000 = vpop.f32.mrb[0].mxu0
        %2001 = vdwg.mxu0
        %v2002 = vmul.f32 %v1996, 0.5
        %v2003 = vmul.f32 %v1998, 0.5
        %v2004 = vmul.f32 %v1996, 0.044715
        %v2005 = vmul.f32 %v1998, 0.044715
        %v2006 = vmul.f32 %v2004, %v1996
        %v2007 = vmul.f32 %v2005, %v1998
        %v2008 = vmul.f32 %v2006, %v1996
        %v2009 = vmul.f32 %v2007, %v1998
        %v2010 = vadd.f32 %v1996, %v2008
        %v2011 = vadd.f32 %v1998, %v2009
        %v2012 = vmul.f32 %v2010, 0.7978846
        %v2013 = vmul.f32 %v2011, 0.7978846
        %v2014 = vtanh.pop %v2012
        %v2015 = vtanh.pop %v2013
        %v2016 = vadd.f32 %v2014, 1.0
        %v2017 = vadd.f32 %v2015, 1.0
        %v2018 = vmul.f32 %v2002, %v2016
        %v2019 = vmul.f32 %v2003, %v2017
        %v2020 = vld [vmem:[%s11] sm:$0xf]
        %v2021 = vld [vmem:[%s11 + $0x4] sm:$0xf]
        %v2022 = vld [vmem:[%s11 + $0x8] sm:$0xf]
        %v2023 = vld [vmem:[%s11 + $0xc] sm:$0xf]
        %v2024 = vld [vmem:[%s11 + $0x10] sm:$0xf]
        %v2025 = vld [vmem:[%s11 + $0x14] sm:$0xf]
        %v2026 = vld [vmem:[%s11 + $0x18] sm:$0xf]
        %v2027 = vld [vmem:[%s11 + $0x1c] sm:$0xf]
        %v2028 = vld [vmem:[%s11 + $0x20] sm:$0xf]
        %v2029 = vld [vmem:[%s11 + $0x24] sm:$0xf]
        %v2030 = vld [vmem:[%s11 + $0x28] sm:$0xf]
        %v2031 = vld [vmem:[%s11 + $0x2c] sm:$0xf]
        %v2032 = vld [vmem:[%s11 + $0x30] sm:$0xf]
        %v2033 = vld [vmem:[%s11 + $0x34] sm:$0xf]
        %v2034 = vld [vmem:[%s11 + $0x38] sm:$0xf]
        %v2035 = vld [vmem:[%s11 + $0x3c] sm:$0xf]
        %v2036 = vld [vmem:[%s11 + $0x40] sm:$0xf]
        %v2037 = vld [vmem:[%s11 + $0x44] sm:$0xf]
        %v2038 = vld [vmem:[%s11 + $0x48] sm:$0xf]
        %v2039 = vld [vmem:[%s11 + $0x4c] sm:$0xf]
        %v2040 = vld [vmem:[%s11 + $0x50] sm:$0xf]
        %v2041 = vld [vmem:[%s11 + $0x54] sm:$0xf]
        %v2042 = vld [vmem:[%s11 + $0x58] sm:$0xf]
        %v2043 = vld [vmem:[%s11 + $0x5c] sm:$0xf]
        %v2044 = vld [vmem:[%s11 + $0x60] sm:$0xf]
        %v2045 = vld [vmem:[%s11 + $0x64] sm:$0xf]
        %v2046 = vld [vmem:[%s11 + $0x68] sm:$0xf]
        %v2047 = vld [vmem:[%s11 + $0x6c] sm:$0xf]
        %v2048 = vld [vmem:[%s11 + $0x70] sm:$0xf]
        %v2049 = vld [vmem:[%s11 + $0x74] sm:$0xf]
        %v2050 = vld [vmem:[%s11 + $0x78] sm:$0xf]
        %v2051 = vld [vmem:[%s11 + $0x7c] sm:$0xf]
        %v2052 = vld [vmem:[%s12] sm:$0x1]
        %v2053 = vpack.c.bf16 %v2018, %v2018
        %v2054 = vpack.c.bf16 %v2019, %v2019
        %v2056 = vlaneseq
        %v2057 = vshrl.u32 %v2056, 7
        %v2058 = vsub.s32 0, %v2057
        %v2059 = vrot.slane %v2052, %v2058
        %v2093 = vunpack.c.l.b16 %v2020
        %v2094 = vunpack.c.l.b16 %v2021
        %v2095 = vunpack.c.l.b16 %v2022
        %v2096 = vunpack.c.l.b16 %v2023
        %v2097 = vunpack.c.l.b16 %v2024
        %v2098 = vunpack.c.l.b16 %v2025
        %v2099 = vunpack.c.l.b16 %v2026
        %v2100 = vunpack.c.l.b16 %v2027
        %v2101 = vunpack.c.l.b16 %v2028
        %v2102 = vunpack.c.l.b16 %v2029
        %v2103 = vunpack.c.l.b16 %v2030
        %v2104 = vunpack.c.l.b16 %v2031
        %v2105 = vunpack.c.l.b16 %v2032
        %v2106 = vunpack.c.l.b16 %v2033
        %v2107 = vunpack.c.l.b16 %v2034
        %v2108 = vunpack.c.l.b16 %v2035
        %v2109 = vunpack.c.l.b16 %v2036
        %v2110 = vunpack.c.l.b16 %v2037
        %v2111 = vunpack.c.l.b16 %v2038
        %v2112 = vunpack.c.l.b16 %v2039
        %v2113 = vunpack.c.l.b16 %v2040
        %v2114 = vunpack.c.l.b16 %v2041
        %v2115 = vunpack.c.l.b16 %v2042
        %v2116 = vunpack.c.l.b16 %v2043
        %v2117 = vunpack.c.l.b16 %v2044
        %v2118 = vunpack.c.l.b16 %v2045
        %v2119 = vunpack.c.l.b16 %v2046
        %v2120 = vunpack.c.l.b16 %v2047
        %v2121 = vunpack.c.l.b16 %v2048
        %v2122 = vunpack.c.l.b16 %v2049
        %v2123 = vunpack.c.l.b16 %v2050
        %v2124 = vunpack.c.l.b16 %v2051
        %v2125 = vpack.c.b16 %v2094, %v2093
        %v2126 = vpack.c.b16 %v2096, %v2095
        %v2127 = vpack.c.b16 %v2098, %v2097
        %v2128 = vpack.c.b16 %v2100, %v2099
        %v2129 = vpack.c.b16 %v2102, %v2101
        %v2130 = vpack.c.b16 %v2104, %v2103
        %v2131 = vpack.c.b16 %v2106, %v2105
        %v2132 = vpack.c.b16 %v2108, %v2107
        %v2133 = vpack.c.b16 %v2110, %v2109
        %v2134 = vpack.c.b16 %v2112, %v2111
        %v2135 = vpack.c.b16 %v2114, %v2113
        %v2136 = vpack.c.b16 %v2116, %v2115
        %v2137 = vpack.c.b16 %v2118, %v2117
        %v2138 = vpack.c.b16 %v2120, %v2119
        %v2139 = vpack.c.b16 %v2122, %v2121
        %v2140 = vpack.c.b16 %v2124, %v2123
        %2157 = vmatprep.subr.bf16.mxu0 0
        %2158 = vmatpush1.bf16.msra.mxu0 %v2125
        %2159 = vmatprep.subr.bf16.mxu0 0
        %2160 = vmatpush1.bf16.msra.mxu0 %v2126
        %2161 = vmatprep.subr.bf16.mxu0 0
        %2162 = vmatpush1.bf16.msra.mxu0 %v2127
        %2163 = vmatprep.subr.bf16.mxu0 0
        %2164 = vmatpush1.bf16.msra.mxu0 %v2128
        %2165 = vmatprep.subr.bf16.mxu0 0
        %2166 = vmatpush1.bf16.msra.mxu0 %v2129
        %2167 = vmatprep.subr.bf16.mxu0 0
        %2168 = vmatpush1.bf16.msra.mxu0 %v2130
        %2169 = vmatprep.subr.bf16.mxu0 0
        %2170 = vmatpush1.bf16.msra.mxu0 %v2131
        %2171 = vmatprep.subr.bf16.mxu0 0
        %2172 = vmatpush1.bf16.msra.mxu0 %v2132
        %2173 = vmatprep.subr.bf16.mxu0 0
        %2174 = vmatpush1.bf16.msra.mxu0 %v2133
        %2175 = vmatprep.subr.bf16.mxu0 0
        %2176 = vmatpush1.bf16.msra.mxu0 %v2134
        %2177 = vmatprep.subr.bf16.mxu0 0
        %2178 = vmatpush1.bf16.msra.mxu0 %v2135
        %2179 = vmatprep.subr.bf16.mxu0 0
        %2180 = vmatpush1.bf16.msra.mxu0 %v2136
        %2181 = vmatprep.subr.bf16.mxu0 0
        %2182 = vmatpush1.bf16.msra.mxu0 %v2137
        %2183 = vmatprep.subr.bf16.mxu0 0
        %2184 = vmatpush1.bf16.msra.mxu0 %v2138
        %2185 = vmatprep.subr.bf16.mxu0 0
        %2186 = vmatpush1.bf16.msra.mxu0 %v2139
        %2187 = vmatprep.subr.bf16.mxu0 0
        %2188 = vmatpush1.bf16.msra.mxu0 %v2140
        %2189 = vmatprep.mubr.bf16.mxu0 %v2054
        %2190 = vmatmul.mubr.bf16.gmra.mrb[0].mxu0 %v2053
        %v2191 = vpop.f32.mrb[0].mxu0
        %v2192 = vadd.f32 %v2059, %v2191
        %v2193 = vpop.f32.mrb[0].mxu0
        %v2194 = vpop.f32.mrb[0].mxu0
        %v2195 = vpop.f32.mrb[0].mxu0
        %2196 = vdwg.mxu0
        %v2197 = vadd.f32 %v1824, %v2192
        %s2198 = scalar_lea.vmem %s3, 1
        %v2199 = vld [vmem:[%s2198] sm:$0x1]
        %s2200 = scalar_lea.vmem %s4, 1
        %v2201 = vld [vmem:[%s2200] sm:$0x1]
        %2202 = vadd.xlane.f32.xlu0 %v2197
        %v2203 = vpop.xlane.xlu0 %2202
        %v2204 = vmul.f32 %v2203, %v1073
        %v2205 = vsub.f32 %v2197, %v2204
        %v2206 = vmul.f32 %v2205, %v2205
        %2207 = vadd.xlane.f32.xlu0 %v2206
        %v2208 = vpop.xlane.xlu0 %2207
        %v2209 = vmul.f32 %v2208, %v1073
        %v2210 = vadd.f32 %v2209, 1e-05
        %v2211 = vrsqrt.pop %v2210
        %v2212 = vmul.f32 %v2205, %v2211
        %v2214 = vlaneseq
        %v2215 = vshrl.u32 %v2214, 7
        %v2216 = vsub.s32 0, %v2215
        %v2217 = vrot.slane %v2199, %v2216
        %v2219 = vmul.f32 %v2212, %v2217
        %v2221 = vlaneseq
        %v2222 = vshrl.u32 %v2221, 7
        %v2223 = vsub.s32 0, %v2222
        %v2224 = vrot.slane %v2201, %v2223
        %v2226 = vadd.f32 %v2219, %v2224
        %s2227 = scalar_lea.vmem %s5, 192
        %v2228 = vld [vmem:[%s2227] sm:$0xff]
        %v2229 = vld [vmem:[%s2227 + $0x8] sm:$0xf]
        %v2230 = vld [vmem:[%s2227 + $0xc] sm:$0xff]
        %v2231 = vld [vmem:[%s2227 + $0x14] sm:$0xf]
        %v2232 = vld [vmem:[%s2227 + $0x18] sm:$0xff]
        %v2233 = vld [vmem:[%s2227 + $0x20] sm:$0xf]
        %v2234 = vld [vmem:[%s2227 + $0x24] sm:$0xff]
        %v2235 = vld [vmem:[%s2227 + $0x2c] sm:$0xf]
        %v2236 = vld [vmem:[%s2227 + $0x30] sm:$0xff]
        %v2237 = vld [vmem:[%s2227 + $0x38] sm:$0xf]
        %v2238 = vld [vmem:[%s2227 + $0x3c] sm:$0xff]
        %v2239 = vld [vmem:[%s2227 + $0x44] sm:$0xf]
        %v2240 = vld [vmem:[%s2227 + $0x48] sm:$0xff]
        %v2241 = vld [vmem:[%s2227 + $0x50] sm:$0xf]
        %v2242 = vld [vmem:[%s2227 + $0x54] sm:$0xff]
        %v2243 = vld [vmem:[%s2227 + $0x5c] sm:$0xf]
        %v2244 = vld [vmem:[%s2227 + $0x60] sm:$0xff]
        %v2245 = vld [vmem:[%s2227 + $0x68] sm:$0xf]
        %v2246 = vld [vmem:[%s2227 + $0x6c] sm:$0xff]
        %v2247 = vld [vmem:[%s2227 + $0x74] sm:$0xf]
        %v2248 = vld [vmem:[%s2227 + $0x78] sm:$0xff]
        %v2249 = vld [vmem:[%s2227 + $0x80] sm:$0xf]
        %v2250 = vld [vmem:[%s2227 + $0x84] sm:$0xff]
        %v2251 = vld [vmem:[%s2227 + $0x8c] sm:$0xf]
        %v2252 = vld [vmem:[%s2227 + $0x90] sm:$0xff]
        %v2253 = vld [vmem:[%s2227 + $0x98] sm:$0xf]
        %v2254 = vld [vmem:[%s2227 + $0x9c] sm:$0xff]
        %v2255 = vld [vmem:[%s2227 + $0xa4] sm:$0xf]
        %v2256 = vld [vmem:[%s2227 + $0xa8] sm:$0xff]
        %v2257 = vld [vmem:[%s2227 + $0xb0] sm:$0xf]
        %v2258 = vld [vmem:[%s2227 + $0xb4] sm:$0xff]
        %v2259 = vld [vmem:[%s2227 + $0xbc] sm:$0xf]
        %s2260 = scalar_lea.vmem %s6, 3
        %v2261 = vld [vmem:[%s2260] sm:$0x7]
        %v2262 = vpack.c.bf16 %v2226, %v2226
        %v2264 = vlaneseq
        %v2265 = vshrl.u32 %v2264, 7
        %v2266 = vsub.s32 0, %v2265
        %v2267 = vrot.slane %v2261, %v2266
        %v2268 = vlaneseq
        %v2269 = vshrl.u32 %v2268, 7
        %v2270 = vsub.s32 1, %v2269
        %v2271 = vrot.slane %v2261, %v2270
        %v2272 = vlaneseq
        %v2273 = vshrl.u32 %v2272, 7
        %v2274 = vsub.s32 2, %v2273
        %v2275 = vrot.slane %v2261, %v2274
        %v2311 = vunpack.c.l.b16 %v2228
        %v2312 = vunpack.c.h.b16 %v2228
        %v2313 = vunpack.c.l.b16 %v2229
        %v2314 = vunpack.c.l.b16 %v2230
        %v2315 = vunpack.c.h.b16 %v2230
        %v2316 = vunpack.c.l.b16 %v2231
        %v2317 = vunpack.c.l.b16 %v2232
        %v2318 = vunpack.c.h.b16 %v2232
        %v2319 = vunpack.c.l.b16 %v2233
        %v2320 = vunpack.c.l.b16 %v2234
        %v2321 = vunpack.c.h.b16 %v2234
        %v2322 = vunpack.c.l.b16 %v2235
        %v2323 = vunpack.c.l.b16 %v2236
        %v2324 = vunpack.c.h.b16 %v2236
        %v2325 = vunpack.c.l.b16 %v2237
        %v2326 = vunpack.c.l.b16 %v2238
        %v2327 = vunpack.c.h.b16 %v2238
        %v2328 = vunpack.c.l.b16 %v2239
        %v2329 = vunpack.c.l.b16 %v2240
        %v2330 = vunpack.c.h.b16 %v2240
        %v2331 = vunpack.c.l.b16 %v2241
        %v2332 = vunpack.c.l.b16 %v2242
        %v2333 = vunpack.c.h.b16 %v2242
        %v2334 = vunpack.c.l.b16 %v2243
        %v2335 = vunpack.c.l.b16 %v2244
        %v2336 = vunpack.c.h.b16 %v2244
        %v2337 = vunpack.c.l.b16 %v2245
        %v2338 = vunpack.c.l.b16 %v2246
        %v2339 = vunpack.c.h.b16 %v2246
        %v2340 = vunpack.c.l.b16 %v2247
        %v2341 = vunpack.c.l.b16 %v2248
        %v2342 = vunpack.c.h.b16 %v2248
        %v2343 = vunpack.c.l.b16 %v2249
        %v2344 = vunpack.c.l.b16 %v2250
        %v2345 = vunpack.c.h.b16 %v2250
        %v2346 = vunpack.c.l.b16 %v2251
        %v2347 = vunpack.c.l.b16 %v2252
        %v2348 = vunpack.c.h.b16 %v2252
        %v2349 = vunpack.c.l.b16 %v2253
        %v2350 = vunpack.c.l.b16 %v2254
        %v2351 = vunpack.c.h.b16 %v2254
        %v2352 = vunpack.c.l.b16 %v2255
        %v2353 = vunpack.c.l.b16 %v2256
        %v2354 = vunpack.c.h.b16 %v2256
        %v2355 = vunpack.c.l.b16 %v2257
        %v2356 = vunpack.c.l.b16 %v2258
        %v2357 = vunpack.c.h.b16 %v2258
        %v2358 = vunpack.c.l.b16 %v2259
        %v2359 = vpack.c.b16 %v2314, %v2311
        %v2360 = vpack.c.b16 %v2315, %v2312
        %v2361 = vpack.c.b16 %v2316, %v2313
        %v2362 = vpack.c.b16 %v2320, %v2317
        %v2363 = vpack.c.b16 %v2321, %v2318
        %v2364 = vpack.c.b16 %v2322, %v2319
        %v2365 = vpack.c.b16 %v2326, %v2323
        %v2366 = vpack.c.b16 %v2327, %v2324
        %v2367 = vpack.c.b16 %v2328, %v2325
        %v2368 = vpack.c.b16 %v2332, %v2329
        %v2369 = vpack.c.b16 %v2333, %v2330
        %v2370 = vpack.c.b16 %v2334, %v2331
        %v2371 = vpack.c.b16 %v2338, %v2335
        %v2372 = vpack.c.b16 %v2339, %v2336
        %v2373 = vpack.c.b16 %v2340, %v2337
        %v2374 = vpack.c.b16 %v2344, %v2341
        %v2375 = vpack.c.b16 %v2345, %v2342
        %v2376 = vpack.c.b16 %v2346, %v2343
        %v2377 = vpack.c.b16 %v2350, %v2347
        %v2378 = vpack.c.b16 %v2351, %v2348
        %v2379 = vpack.c.b16 %v2352, %v2349
        %v2380 = vpack.c.b16 %v2356, %v2353
        %v2381 = vpack.c.b16 %v2357, %v2354
        %v2382 = vpack.c.b16 %v2358, %v2355
        %2407 = vmatprep.subr.bf16.mxu0 %v2360
        %2408 = vmatpush1.bf16.msra.mxu0 %v2359
        %2409 = vmatprep.subr.bf16.mxu0 %v2363
        %2410 = vmatpush1.bf16.msra.mxu0 %v2362
        %2411 = vmatprep.subr.bf16.mxu0 %v2366
        %2412 = vmatpush1.bf16.msra.mxu0 %v2365
        %2413 = vmatprep.subr.bf16.mxu0 %v2369
        %2414 = vmatpush1.bf16.msra.mxu0 %v2368
        %2415 = vmatprep.subr.bf16.mxu0 %v2372
        %2416 = vmatpush1.bf16.msra.mxu0 %v2371
        %2417 = vmatprep.subr.bf16.mxu0 %v2375
        %2418 = vmatpush1.bf16.msra.mxu0 %v2374
        %2419 = vmatprep.subr.bf16.mxu0 %v2378
        %2420 = vmatpush1.bf16.msra.mxu0 %v2377
        %2421 = vmatprep.subr.bf16.mxu0 %v2381
        %2422 = vmatpush1.bf16.msra.mxu0 %v2380
        %2423 = vmatprep.subr.bf16.mxu0 0
        %2424 = vmatpush1.bf16.msra.mxu0 0
        %2425 = vmatprep.subr.bf16.mxu0 0
        %2426 = vmatpush1.bf16.msra.mxu0 0
        %2427 = vmatprep.subr.bf16.mxu0 0
        %2428 = vmatpush1.bf16.msra.mxu0 0
        %2429 = vmatprep.subr.bf16.mxu0 0
        %2430 = vmatpush1.bf16.msra.mxu0 0
        %2431 = vmatprep.subr.bf16.mxu0 0
        %2432 = vmatpush1.bf16.msra.mxu0 0
        %2433 = vmatprep.subr.bf16.mxu0 0
        %2434 = vmatpush1.bf16.msra.mxu0 0
        %2435 = vmatprep.subr.bf16.mxu0 0
        %2436 = vmatpush1.bf16.msra.mxu0 0
        %2437 = vmatprep.subr.bf16.mxu0 0
        %2438 = vmatpush1.bf16.msra.mxu0 0
        %2439 = vmatprep.mubr.bf16.mxu0 0
        %2440 = vmatmul.mubr.bf16.gmra.mrb[0].mxu0 %v2262
        %v2441 = vpop.f32.mrb[0].mxu0
        %v2442 = vadd.f32 %v2267, %v2441
        %v2443 = vpop.f32.mrb[0].mxu0
        %v2444 = vadd.f32 %v2271, %v2443
        %v2445 = vpop.f32.mrb[0].mxu0
        %v2446 = vpop.f32.mrb[0].mxu0
        %2447 = vdwg.mxu0
        %2448 = vmatprep.subr.bf16.mxu0 0
        %2449 = vmatpush1.bf16.msra.mxu0 %v2361
        %2450 = vmatprep.subr.bf16.mxu0 0
        %2451 = vmatpush1.bf16.msra.mxu0 %v2364
        %2452 = vmatprep.subr.bf16.mxu0 0
        %2453 = vmatpush1.bf16.msra.mxu0 %v2367
        %2454 = vmatprep.subr.bf16.mxu0 0
        %2455 = vmatpush1.bf16.msra.mxu0 %v2370
        %2456 = vmatprep.subr.bf16.mxu0 0
        %2457 = vmatpush1.bf16.msra.mxu0 %v2373
        %2458 = vmatprep.subr.bf16.mxu0 0
        %2459 = vmatpush1.bf16.msra.mxu0 %v2376
        %2460 = vmatprep.subr.bf16.mxu0 0
        %2461 = vmatpush1.bf16.msra.mxu0 %v2379
        %2462 = vmatprep.subr.bf16.mxu0 0
        %2463 = vmatpush1.bf16.msra.mxu0 %v2382
        %2464 = vmatprep.subr.bf16.mxu0 0
        %2465 = vmatpush1.bf16.msra.mxu0 0
        %2466 = vmatprep.subr.bf16.mxu0 0
        %2467 = vmatpush1.bf16.msra.mxu0 0
        %2468 = vmatprep.subr.bf16.mxu0 0
        %2469 = vmatpush1.bf16.msra.mxu0 0
        %2470 = vmatprep.subr.bf16.mxu0 0
        %2471 = vmatpush1.bf16.msra.mxu0 0
        %2472 = vmatprep.subr.bf16.mxu0 0
        %2473 = vmatpush1.bf16.msra.mxu0 0
        %2474 = vmatprep.subr.bf16.mxu0 0
        %2475 = vmatpush1.bf16.msra.mxu0 0
        %2476 = vmatprep.subr.bf16.mxu0 0
        %2477 = vmatpush1.bf16.msra.mxu0 0
        %2478 = vmatprep.subr.bf16.mxu0 0
        %2479 = vmatpush1.bf16.msra.mxu0 0
        %2480 = vmatprep.mubr.bf16.mxu0 0
        %2481 = vmatmul.mubr.bf16.gmra.mrb[0].mxu0 %v2262
        %v2482 = vpop.f32.mrb[0].mxu0
        %v2483 = vadd.f32 %v2275, %v2482
        %v2484 = vpop.f32.mrb[0].mxu0
        %v2485 = vpop.f32.mrb[0].mxu0
        %v2486 = vpop.f32.mrb[0].mxu0
        %2487 = vdwg.mxu0
        %v2488 = vpack.c.bf16 %v2442, %v2442
        %v2489 = vpack.c.bf16 %v2444, %v2444
        %v2491 = vsel %vm1358, %v2488, 0
        %v2494 = vsel %vm1358, %v2489, 0
        %2496 = vmatprep.subr.bf16.mxu0 0
        %2497 = vmatpush1.bf16.xpose.msra.mxu0 %v2494
        %2498 = vmatprep.subr.bf16.mxu0 0
        %2499 = vmatpush1.bf16.xpose.msra.mxu0 0
        %2500 = vmatprep.subr.bf16.mxu0 0
        %2501 = vmatpush1.bf16.xpose.msra.mxu0 0
        %2502 = vmatprep.subr.bf16.mxu0 0
        %2503 = vmatpush1.bf16.xpose.msra.mxu0 0
        %2504 = vmatprep.subr.bf16.mxu0 0
        %2505 = vmatpush1.bf16.xpose.msra.mxu0 0
        %2506 = vmatprep.subr.bf16.mxu0 0
        %2507 = vmatpush1.bf16.xpose.msra.mxu0 0
        %2508 = vmatprep.subr.bf16.mxu0 0
        %2509 = vmatpush1.bf16.xpose.msra.mxu0 0
        %2510 = vmatprep.subr.bf16.mxu0 0
        %2511 = vmatpush1.bf16.xpose.msra.mxu0 0
        %2512 = vmatprep.subr.bf16.mxu0 0
        %2513 = vmatpush1.bf16.xpose.msra.mxu0 0
        %2514 = vmatprep.subr.bf16.mxu0 0
        %2515 = vmatpush1.bf16.xpose.msra.mxu0 0
        %2516 = vmatprep.subr.bf16.mxu0 0
        %2517 = vmatpush1.bf16.xpose.msra.mxu0 0
        %2518 = vmatprep.subr.bf16.mxu0 0
        %2519 = vmatpush1.bf16.xpose.msra.mxu0 0
        %2520 = vmatprep.subr.bf16.mxu0 0
        %2521 = vmatpush1.bf16.xpose.msra.mxu0 0
        %2522 = vmatprep.subr.bf16.mxu0 0
        %2523 = vmatpush1.bf16.xpose.msra.mxu0 0
        %2524 = vmatprep.subr.bf16.mxu0 0
        %2525 = vmatpush1.bf16.xpose.msra.mxu0 0
        %2526 = vmatprep.subr.bf16.mxu0 0
        %2527 = vmatpush1.bf16.xpose.msra.mxu0 0
        %2528 = vmatprep.mubr.bf16.mxu0 0
        %2529 = vmatmul.mubr.bf16.gmra.mrb[0].mxu0 %v2491
        %v2530 = vpop.f32.mrb[0].mxu0
        %v2531 = vadd.f32 0.0, %v2530
        %v2532 = vpop.f32.mrb[0].mxu0
        %v2533 = vpop.f32.mrb[0].mxu0
        %v2534 = vpop.f32.mrb[0].mxu0
        %2535 = vdwg.mxu0
        %v2536 = vmul.f32 %v2531, 0.088388346
        %v2537 = vadd.f32 %v2536, %v1068
        %v2538 = vsel %vm1407, %v2537, -inf
        %2539 = vmax.xlane.f32.xlu0 %v2538
        %v2540 = vpop.xlane.xlu0 %2539
        %v2541 = vsub.f32 %v2537, %v2540
        %v2542 = vmul.f32 %v2541, 1.442695
        %v2543 = vpow.pop %v2542
        %v2544 = vsel %vm1407, %v2543, 0.0
        %2545 = vadd.xlane.f32.xlu0 %v2544
        %v2546 = vpop.xlane.xlu0 %2545
        %v2547 = vrcp.pop %v2546
        %v2548 = vmul.f32 %v2543, %v2547
        %v2549 = vpack.c.bf16 %v2548, %v2548
        %v2550 = vpack.c.bf16 %v2483, %v2483
        %v2552 = vsel %vm1407, %v2549, 0
        %v2555 = vsel %vm1424, %v2550, 0
        %2557 = vmatprep.subr.bf16.mxu0 0
        %2558 = vmatpush1.bf16.msra.mxu0 %v2555
        %2559 = vmatprep.subr.bf16.mxu0 0
        %2560 = vmatpush1.bf16.msra.mxu0 0
        %2561 = vmatprep.subr.bf16.mxu0 0
        %2562 = vmatpush1.bf16.msra.mxu0 0
        %2563 = vmatprep.subr.bf16.mxu0 0
        %2564 = vmatpush1.bf16.msra.mxu0 0
        %2565 = vmatprep.subr.bf16.mxu0 0
        %2566 = vmatpush1.bf16.msra.mxu0 0
        %2567 = vmatprep.subr.bf16.mxu0 0
        %2568 = vmatpush1.bf16.msra.mxu0 0
        %2569 = vmatprep.subr.bf16.mxu0 0
        %2570 = vmatpush1.bf16.msra.mxu0 0
        %2571 = vmatprep.subr.bf16.mxu0 0
        %2572 = vmatpush1.bf16.msra.mxu0 0
        %2573 = vmatprep.subr.bf16.mxu0 0
        %2574 = vmatpush1.bf16.msra.mxu0 0
        %2575 = vmatprep.subr.bf16.mxu0 0
        %2576 = vmatpush1.bf16.msra.mxu0 0
        %2577 = vmatprep.subr.bf16.mxu0 0
        %2578 = vmatpush1.bf16.msra.mxu0 0
        %2579 = vmatprep.subr.bf16.mxu0 0
        %2580 = vmatpush1.bf16.msra.mxu0 0
        %2581 = vmatprep.subr.bf16.mxu0 0
        %2582 = vmatpush1.bf16.msra.mxu0 0
        %2583 = vmatprep.subr.bf16.mxu0 0
        %2584 = vmatpush1.bf16.msra.mxu0 0
        %2585 = vmatprep.subr.bf16.mxu0 0
        %2586 = vmatpush1.bf16.msra.mxu0 0
        %2587 = vmatprep.subr.bf16.mxu0 0
        %2588 = vmatpush1.bf16.msra.mxu0 0
        %2589 = vmatprep.mubr.bf16.mxu0 0
        %2590 = vmatmul.mubr.bf16.gmra.mrb[0].mxu0 %v2552
        %v2591 = vpop.f32.mrb[0].mxu0
        %v2592 = vadd.f32 0.0, %v2591
        %v2593 = vpop.f32.mrb[0].mxu0
        %v2594 = vpop.f32.mrb[0].mxu0
        %v2595 = vpop.f32.mrb[0].mxu0
        %2596 = vdwg.mxu0
        %2598 = vrot.lane.b32.xlu0 %v2488, 96
        %v2599 = vpop.permute.xlu0 %2598
        %2601 = vrot.lane.b32.xlu0 %v2489, 96
        %v2602 = vpop.permute.xlu0 %2601
        %v2604 = vsel %vm1358, %v2599, 0
        %v2607 = vsel %vm1358, %v2602, 0
        %2609 = vmatprep.subr.bf16.mxu0 0
        %2610 = vmatpush1.bf16.xpose.msra.mxu0 %v2607
        %2611 = vmatprep.subr.bf16.mxu0 0
        %2612 = vmatpush1.bf16.xpose.msra.mxu0 0
        %2613 = vmatprep.subr.bf16.mxu0 0
        %2614 = vmatpush1.bf16.xpose.msra.mxu0 0
        %2615 = vmatprep.subr.bf16.mxu0 0
        %2616 = vmatpush1.bf16.xpose.msra.mxu0 0
        %2617 = vmatprep.subr.bf16.mxu0 0
        %2618 = vmatpush1.bf16.xpose.msra.mxu0 0
        %2619 = vmatprep.subr.bf16.mxu0 0
        %2620 = vmatpush1.bf16.xpose.msra.mxu0 0
        %2621 = vmatprep.subr.bf16.mxu0 0
        %2622 = vmatpush1.bf16.xpose.msra.mxu0 0
        %2623 = vmatprep.subr.bf16.mxu0 0
        %2624 = vmatpush1.bf16.xpose.msra.mxu0 0
        %2625 = vmatprep.subr.bf16.mxu0 0
        %2626 = vmatpush1.bf16.xpose.msra.mxu0 0
        %2627 = vmatprep.subr.bf16.mxu0 0
        %2628 = vmatpush1.bf16.xpose.msra.mxu0 0
        %2629 = vmatprep.subr.bf16.mxu0 0
        %2630 = vmatpush1.bf16.xpose.msra.mxu0 0
        %2631 = vmatprep.subr.bf16.mxu0 0
        %2632 = vmatpush1.bf16.xpose.msra.mxu0 0
        %2633 = vmatprep.subr.bf16.mxu0 0
        %2634 = vmatpush1.bf16.xpose.msra.mxu0 0
        %2635 = vmatprep.subr.bf16.mxu0 0
        %2636 = vmatpush1.bf16.xpose.msra.mxu0 0
        %2637 = vmatprep.subr.bf16.mxu0 0
        %2638 = vmatpush1.bf16.xpose.msra.mxu0 0
        %2639 = vmatprep.subr.bf16.mxu0 0
        %2640 = vmatpush1.bf16.xpose.msra.mxu0 0
        %2641 = vmatprep.mubr.bf16.mxu0 0
        %2642 = vmatmul.mubr.bf16.gmra.mrb[0].mxu0 %v2604
        %v2643 = vpop.f32.mrb[0].mxu0
        %v2644 = vadd.f32 0.0, %v2643
        %v2645 = vpop.f32.mrb[0].mxu0
        %v2646 = vpop.f32.mrb[0].mxu0
        %v2647 = vpop.f32.mrb[0].mxu0
        %2648 = vdwg.mxu0
        %v2649 = vmul.f32 %v2644, 0.088388346
        %v2650 = vadd.f32 %v2649, %v1068
        %v2651 = vsel %vm1407, %v2650, -inf
        %2652 = vmax.xlane.f32.xlu0 %v2651
        %v2653 = vpop.xlane.xlu0 %2652
        %v2654 = vsub.f32 %v2650, %v2653
        %v2655 = vmul.f32 %v2654, 1.442695
        %v2656 = vpow.pop %v2655
        %v2657 = vsel %vm1407, %v2656, 0.0
        %2658 = vadd.xlane.f32.xlu0 %v2657
        %v2659 = vpop.xlane.xlu0 %2658
        %v2660 = vrcp.pop %v2659
        %v2661 = vmul.f32 %v2656, %v2660
        %v2662 = vpack.c.bf16 %v2661, %v2661
        %2664 = vrot.lane.b32.xlu0 %v2550, 96
        %v2665 = vpop.permute.xlu0 %2664
        %v2667 = vsel %vm1407, %v2662, 0
        %v2670 = vsel %vm1424, %v2665, 0
        %2672 = vmatprep.subr.bf16.mxu0 0
        %2673 = vmatpush1.bf16.msra.mxu0 %v2670
        %2674 = vmatprep.subr.bf16.mxu0 0
        %2675 = vmatpush1.bf16.msra.mxu0 0
        %2676 = vmatprep.subr.bf16.mxu0 0
        %2677 = vmatpush1.bf16.msra.mxu0 0
        %2678 = vmatprep.subr.bf16.mxu0 0
        %2679 = vmatpush1.bf16.msra.mxu0 0
        %2680 = vmatprep.subr.bf16.mxu0 0
        %2681 = vmatpush1.bf16.msra.mxu0 0
        %2682 = vmatprep.subr.bf16.mxu0 0
        %2683 = vmatpush1.bf16.msra.mxu0 0
        %2684 = vmatprep.subr.bf16.mxu0 0
        %2685 = vmatpush1.bf16.msra.mxu0 0
        %2686 = vmatprep.subr.bf16.mxu0 0
        %2687 = vmatpush1.bf16.msra.mxu0 0
        %2688 = vmatprep.subr.bf16.mxu0 0
        %2689 = vmatpush1.bf16.msra.mxu0 0
        %2690 = vmatprep.subr.bf16.mxu0 0
        %2691 = vmatpush1.bf16.msra.mxu0 0
        %2692 = vmatprep.subr.bf16.mxu0 0
        %2693 = vmatpush1.bf16.msra.mxu0 0
        %2694 = vmatprep.subr.bf16.mxu0 0
        %2695 = vmatpush1.bf16.msra.mxu0 0
        %2696 = vmatprep.subr.bf16.mxu0 0
        %2697 = vmatpush1.bf16.msra.mxu0 0
        %2698 = vmatprep.subr.bf16.mxu0 0
        %2699 = vmatpush1.bf16.msra.mxu0 0
        %2700 = vmatprep.subr.bf16.mxu0 0
        %2701 = vmatpush1.bf16.msra.mxu0 0
        %2702 = vmatprep.subr.bf16.mxu0 0
        %2703 = vmatpush1.bf16.msra.mxu0 0
        %2704 = vmatprep.mubr.bf16.mxu0 0
        %2705 = vmatmul.mubr.bf16.gmra.mrb[0].mxu0 %v2667
        %v2706 = vpop.f32.mrb[0].mxu0
        %v2707 = vadd.f32 0.0, %v2706
        %v2708 = vpop.f32.mrb[0].mxu0
        %v2709 = vpop.f32.mrb[0].mxu0
        %v2710 = vpop.f32.mrb[0].mxu0
        %2711 = vdwg.mxu0
        %2712 = vrot.lane.b32.xlu0 %v2488, 64
        %v2713 = vpop.permute.xlu0 %2712
        %2714 = vrot.lane.b32.xlu0 %v2489, 64
        %v2715 = vpop.permute.xlu0 %2714
        %v2717 = vsel %vm1358, %v2713, 0
        %v2720 = vsel %vm1358, %v2715, 0
        %2722 = vmatprep.subr.bf16.mxu0 0
        %2723 = vmatpush1.bf16.xpose.msra.mxu0 %v2720
        %2724 = vmatprep.subr.bf16.mxu0 0
        %2725 = vmatpush1.bf16.xpose.msra.mxu0 0
        %2726 = vmatprep.subr.bf16.mxu0 0
        %2727 = vmatpush1.bf16.xpose.msra.mxu0 0
        %2728 = vmatprep.subr.bf16.mxu0 0
        %2729 = vmatpush1.bf16.xpose.msra.mxu0 0
        %2730 = vmatprep.subr.bf16.mxu0 0
        %2731 = vmatpush1.bf16.xpose.msra.mxu0 0
        %2732 = vmatprep.subr.bf16.mxu0 0
        %2733 = vmatpush1.bf16.xpose.msra.mxu0 0
        %2734 = vmatprep.subr.bf16.mxu0 0
        %2735 = vmatpush1.bf16.xpose.msra.mxu0 0
        %2736 = vmatprep.subr.bf16.mxu0 0
        %2737 = vmatpush1.bf16.xpose.msra.mxu0 0
        %2738 = vmatprep.subr.bf16.mxu0 0
        %2739 = vmatpush1.bf16.xpose.msra.mxu0 0
        %2740 = vmatprep.subr.bf16.mxu0 0
        %2741 = vmatpush1.bf16.xpose.msra.mxu0 0
        %2742 = vmatprep.subr.bf16.mxu0 0
        %2743 = vmatpush1.bf16.xpose.msra.mxu0 0
        %2744 = vmatprep.subr.bf16.mxu0 0
        %2745 = vmatpush1.bf16.xpose.msra.mxu0 0
        %2746 = vmatprep.subr.bf16.mxu0 0
        %2747 = vmatpush1.bf16.xpose.msra.mxu0 0
        %2748 = vmatprep.subr.bf16.mxu0 0
        %2749 = vmatpush1.bf16.xpose.msra.mxu0 0
        %2750 = vmatprep.subr.bf16.mxu0 0
        %2751 = vmatpush1.bf16.xpose.msra.mxu0 0
        %2752 = vmatprep.subr.bf16.mxu0 0
        %2753 = vmatpush1.bf16.xpose.msra.mxu0 0
        %2754 = vmatprep.mubr.bf16.mxu0 0
        %2755 = vmatmul.mubr.bf16.gmra.mrb[0].mxu0 %v2717
        %v2756 = vpop.f32.mrb[0].mxu0
        %v2757 = vadd.f32 0.0, %v2756
        %v2758 = vpop.f32.mrb[0].mxu0
        %v2759 = vpop.f32.mrb[0].mxu0
        %v2760 = vpop.f32.mrb[0].mxu0
        %2761 = vdwg.mxu0
        %v2762 = vmul.f32 %v2757, 0.088388346
        %v2763 = vadd.f32 %v2762, %v1068
        %v2764 = vsel %vm1407, %v2763, -inf
        %2765 = vmax.xlane.f32.xlu0 %v2764
        %v2766 = vpop.xlane.xlu0 %2765
        %v2767 = vsub.f32 %v2763, %v2766
        %v2768 = vmul.f32 %v2767, 1.442695
        %v2769 = vpow.pop %v2768
        %v2770 = vsel %vm1407, %v2769, 0.0
        %2771 = vadd.xlane.f32.xlu0 %v2770
        %v2772 = vpop.xlane.xlu0 %2771
        %v2773 = vrcp.pop %v2772
        %v2774 = vmul.f32 %v2769, %v2773
        %v2775 = vpack.c.bf16 %v2774, %v2774
        %2776 = vrot.lane.b32.xlu0 %v2550, 64
        %v2777 = vpop.permute.xlu0 %2776
        %v2779 = vsel %vm1407, %v2775, 0
        %v2782 = vsel %vm1424, %v2777, 0
        %2784 = vmatprep.subr.bf16.mxu0 0
        %2785 = vmatpush1.bf16.msra.mxu0 %v2782
        %2786 = vmatprep.subr.bf16.mxu0 0
        %2787 = vmatpush1.bf16.msra.mxu0 0
        %2788 = vmatprep.subr.bf16.mxu0 0
        %2789 = vmatpush1.bf16.msra.mxu0 0
        %2790 = vmatprep.subr.bf16.mxu0 0
        %2791 = vmatpush1.bf16.msra.mxu0 0
        %2792 = vmatprep.subr.bf16.mxu0 0
        %2793 = vmatpush1.bf16.msra.mxu0 0
        %2794 = vmatprep.subr.bf16.mxu0 0
        %2795 = vmatpush1.bf16.msra.mxu0 0
        %2796 = vmatprep.subr.bf16.mxu0 0
        %2797 = vmatpush1.bf16.msra.mxu0 0
        %2798 = vmatprep.subr.bf16.mxu0 0
        %2799 = vmatpush1.bf16.msra.mxu0 0
        %2800 = vmatprep.subr.bf16.mxu0 0
        %2801 = vmatpush1.bf16.msra.mxu0 0
        %2802 = vmatprep.subr.bf16.mxu0 0
        %2803 = vmatpush1.bf16.msra.mxu0 0
        %2804 = vmatprep.subr.bf16.mxu0 0
        %2805 = vmatpush1.bf16.msra.mxu0 0
        %2806 = vmatprep.subr.bf16.mxu0 0
        %2807 = vmatpush1.bf16.msra.mxu0 0
        %2808 = vmatprep.subr.bf16.mxu0 0
        %2809 = vmatpush1.bf16.msra.mxu0 0
        %2810 = vmatprep.subr.bf16.mxu0 0
        %2811 = vmatpush1.bf16.msra.mxu0 0
        %2812 = vmatprep.subr.bf16.mxu0 0
        %2813 = vmatpush1.bf16.msra.mxu0 0
        %2814 = vmatprep.subr.bf16.mxu0 0
        %2815 = vmatpush1.bf16.msra.mxu0 0
        %2816 = vmatprep.mubr.bf16.mxu0 0
        %2817 = vmatmul.mubr.bf16.gmra.mrb[0].mxu0 %v2779
        %v2818 = vpop.f32.mrb[0].mxu0
        %v2819 = vadd.f32 0.0, %v2818
        %v2820 = vpop.f32.mrb[0].mxu0
        %v2821 = vpop.f32.mrb[0].mxu0
        %v2822 = vpop.f32.mrb[0].mxu0
        %2823 = vdwg.mxu0
        %2824 = vrot.lane.b32.xlu0 %v2488, 32
        %v2825 = vpop.permute.xlu0 %2824
        %2826 = vrot.lane.b32.xlu0 %v2489, 32
        %v2827 = vpop.permute.xlu0 %2826
        %v2829 = vsel %vm1358, %v2825, 0
        %v2832 = vsel %vm1358, %v2827, 0
        %2834 = vmatprep.subr.bf16.mxu0 0
        %2835 = vmatpush1.bf16.xpose.msra.mxu0 %v2832
        %2836 = vmatprep.subr.bf16.mxu0 0
        %2837 = vmatpush1.bf16.xpose.msra.mxu0 0
        %2838 = vmatprep.subr.bf16.mxu0 0
        %2839 = vmatpush1.bf16.xpose.msra.mxu0 0
        %2840 = vmatprep.subr.bf16.mxu0 0
        %2841 = vmatpush1.bf16.xpose.msra.mxu0 0
        %2842 = vmatprep.subr.bf16.mxu0 0
        %2843 = vmatpush1.bf16.xpose.msra.mxu0 0
        %2844 = vmatprep.subr.bf16.mxu0 0
        %2845 = vmatpush1.bf16.xpose.msra.mxu0 0
        %2846 = vmatprep.subr.bf16.mxu0 0
        %2847 = vmatpush1.bf16.xpose.msra.mxu0 0
        %2848 = vmatprep.subr.bf16.mxu0 0
        %2849 = vmatpush1.bf16.xpose.msra.mxu0 0
        %2850 = vmatprep.subr.bf16.mxu0 0
        %2851 = vmatpush1.bf16.xpose.msra.mxu0 0
        %2852 = vmatprep.subr.bf16.mxu0 0
        %2853 = vmatpush1.bf16.xpose.msra.mxu0 0
        %2854 = vmatprep.subr.bf16.mxu0 0
        %2855 = vmatpush1.bf16.xpose.msra.mxu0 0
        %2856 = vmatprep.subr.bf16.mxu0 0
        %2857 = vmatpush1.bf16.xpose.msra.mxu0 0
        %2858 = vmatprep.subr.bf16.mxu0 0
        %2859 = vmatpush1.bf16.xpose.msra.mxu0 0
        %2860 = vmatprep.subr.bf16.mxu0 0
        %2861 = vmatpush1.bf16.xpose.msra.mxu0 0
        %2862 = vmatprep.subr.bf16.mxu0 0
        %2863 = vmatpush1.bf16.xpose.msra.mxu0 0
        %2864 = vmatprep.subr.bf16.mxu0 0
        %2865 = vmatpush1.bf16.xpose.msra.mxu0 0
        %2866 = vmatprep.mubr.bf16.mxu0 0
        %2867 = vmatmul.mubr.bf16.gmra.mrb[0].mxu0 %v2829
        %v2868 = vpop.f32.mrb[0].mxu0
        %v2869 = vadd.f32 0.0, %v2868
        %v2870 = vpop.f32.mrb[0].mxu0
        %v2871 = vpop.f32.mrb[0].mxu0
        %v2872 = vpop.f32.mrb[0].mxu0
        %2873 = vdwg.mxu0
        %v2874 = vmul.f32 %v2869, 0.088388346
        %v2875 = vadd.f32 %v2874, %v1068
        %v2876 = vsel %vm1407, %v2875, -inf
        %2877 = vmax.xlane.f32.xlu0 %v2876
        %v2878 = vpop.xlane.xlu0 %2877
        %v2879 = vsub.f32 %v2875, %v2878
        %v2880 = vmul.f32 %v2879, 1.442695
        %v2881 = vpow.pop %v2880
        %v2882 = vsel %vm1407, %v2881, 0.0
        %2883 = vadd.xlane.f32.xlu0 %v2882
        %v2884 = vpop.xlane.xlu0 %2883
        %v2885 = vrcp.pop %v2884
        %v2886 = vmul.f32 %v2881, %v2885
        %v2887 = vpack.c.bf16 %v2886, %v2886
        %2888 = vrot.lane.b32.xlu0 %v2550, 32
        %v2889 = vpop.permute.xlu0 %2888
        %v2891 = vsel %vm1407, %v2887, 0
        %v2894 = vsel %vm1424, %v2889, 0
        %2896 = vmatprep.subr.bf16.mxu0 0
        %2897 = vmatpush1.bf16.msra.mxu0 %v2894
        %2898 = vmatprep.subr.bf16.mxu0 0
        %2899 = vmatpush1.bf16.msra.mxu0 0
        %2900 = vmatprep.subr.bf16.mxu0 0
        %2901 = vmatpush1.bf16.msra.mxu0 0
        %2902 = vmatprep.subr.bf16.mxu0 0
        %2903 = vmatpush1.bf16.msra.mxu0 0
        %2904 = vmatprep.subr.bf16.mxu0 0
        %2905 = vmatpush1.bf16.msra.mxu0 0
        %2906 = vmatprep.subr.bf16.mxu0 0
        %2907 = vmatpush1.bf16.msra.mxu0 0
        %2908 = vmatprep.subr.bf16.mxu0 0
        %2909 = vmatpush1.bf16.msra.mxu0 0
        %2910 = vmatprep.subr.bf16.mxu0 0
        %2911 = vmatpush1.bf16.msra.mxu0 0
        %2912 = vmatprep.subr.bf16.mxu0 0
        %2913 = vmatpush1.bf16.msra.mxu0 0
        %2914 = vmatprep.subr.bf16.mxu0 0
        %2915 = vmatpush1.bf16.msra.mxu0 0
        %2916 = vmatprep.subr.bf16.mxu0 0
        %2917 = vmatpush1.bf16.msra.mxu0 0
        %2918 = vmatprep.subr.bf16.mxu0 0
        %2919 = vmatpush1.bf16.msra.mxu0 0
        %2920 = vmatprep.subr.bf16.mxu0 0
        %2921 = vmatpush1.bf16.msra.mxu0 0
        %2922 = vmatprep.subr.bf16.mxu0 0
        %2923 = vmatpush1.bf16.msra.mxu0 0
        %2924 = vmatprep.subr.bf16.mxu0 0
        %2925 = vmatpush1.bf16.msra.mxu0 0
        %2926 = vmatprep.subr.bf16.mxu0 0
        %2927 = vmatpush1.bf16.msra.mxu0 0
        %2928 = vmatprep.mubr.bf16.mxu0 0
        %2929 = vmatmul.mubr.bf16.gmra.mrb[0].mxu0 %v2891
        %v2930 = vpop.f32.mrb[0].mxu0
        %v2931 = vadd.f32 0.0, %v2930
        %v2932 = vpop.f32.mrb[0].mxu0
        %v2933 = vpop.f32.mrb[0].mxu0
        %v2934 = vpop.f32.mrb[0].mxu0
        %2935 = vdwg.mxu0
        %2937 = vrot.lane.b32.xlu0 %v2707, 32
        %v2938 = vpop.permute.xlu0 %2937
        %2941 = vrot.lane.b32.xlu0 %v2819, 64
        %v2942 = vpop.permute.xlu0 %2941
        %2945 = vrot.lane.b32.xlu0 %v2931, 96
        %v2946 = vpop.permute.xlu0 %2945
        %v2948 = vsel %vm1358, %v2592, %v2938
        %v2949 = vsel %vm1820, %v2948, %v2942
        %v2950 = vsel %vm1822, %v2949, %v2946
        %v2951 = vadd.f32 %v2197, %v2950
        %s2952 = scalar_lea.vmem %s7, 1
        %v2953 = vld [vmem:[%s2952] sm:$0x1]
        %s2954 = scalar_lea.vmem %s8, 1
        %v2955 = vld [vmem:[%s2954] sm:$0x1]
        %2956 = vadd.xlane.f32.xlu0 %v2951
        %v2957 = vpop.xlane.xlu0 %2956
        %v2958 = vmul.f32 %v2957, %v1073
        %v2959 = vsub.f32 %v2951, %v2958
        %v2960 = vmul.f32 %v2959, %v2959
        %2961 = vadd.xlane.f32.xlu0 %v2960
        %v2962 = vpop.xlane.xlu0 %2961
        %v2963 = vmul.f32 %v2962, %v1073
        %v2964 = vadd.f32 %v2963, 1e-05
        %v2965 = vrsqrt.pop %v2964
        %v2966 = vmul.f32 %v2959, %v2965
        %v2968 = vlaneseq
        %v2969 = vshrl.u32 %v2968, 7
        %v2970 = vsub.s32 0, %v2969
        %v2971 = vrot.slane %v2953, %v2970
        %v2973 = vmul.f32 %v2966, %v2971
        %v2975 = vlaneseq
        %v2976 = vshrl.u32 %v2975, 7
        %v2977 = vsub.s32 0, %v2976
        %v2978 = vrot.slane %v2955, %v2977
        %v2980 = vadd.f32 %v2973, %v2978
        %s2981 = scalar_lea.vmem %s9, 128
        %v2982 = vld [vmem:[%s2981] sm:$0xff]
        %v2983 = vld [vmem:[%s2981 + $0x8] sm:$0xff]
        %v2984 = vld [vmem:[%s2981 + $0x10] sm:$0xff]
        %v2985 = vld [vmem:[%s2981 + $0x18] sm:$0xff]
        %v2986 = vld [vmem:[%s2981 + $0x20] sm:$0xff]
        %v2987 = vld [vmem:[%s2981 + $0x28] sm:$0xff]
        %v2988 = vld [vmem:[%s2981 + $0x30] sm:$0xff]
        %v2989 = vld [vmem:[%s2981 + $0x38] sm:$0xff]
        %v2990 = vld [vmem:[%s2981 + $0x40] sm:$0xff]
        %v2991 = vld [vmem:[%s2981 + $0x48] sm:$0xff]
        %v2992 = vld [vmem:[%s2981 + $0x50] sm:$0xff]
        %v2993 = vld [vmem:[%s2981 + $0x58] sm:$0xff]
        %v2994 = vld [vmem:[%s2981 + $0x60] sm:$0xff]
        %v2995 = vld [vmem:[%s2981 + $0x68] sm:$0xff]
        %v2996 = vld [vmem:[%s2981 + $0x70] sm:$0xff]
        %v2997 = vld [vmem:[%s2981 + $0x78] sm:$0xff]
        %s2998 = scalar_lea.vmem %s10, 2
        %v2999 = vld [vmem:[%s2998] sm:$0x3]
        %v3000 = vpack.c.bf16 %v2980, %v2980
        %v3002 = vlaneseq
        %v3003 = vshrl.u32 %v3002, 7
        %v3004 = vsub.s32 0, %v3003
        %v3005 = vrot.slane %v2999, %v3004
        %v3006 = vlaneseq
        %v3007 = vshrl.u32 %v3006, 7
        %v3008 = vsub.s32 1, %v3007
        %v3009 = vrot.slane %v2999, %v3008
        %v3028 = vunpack.c.l.b16 %v2982
        %v3029 = vunpack.c.h.b16 %v2982
        %v3030 = vunpack.c.l.b16 %v2983
        %v3031 = vunpack.c.h.b16 %v2983
        %v3032 = vunpack.c.l.b16 %v2984
        %v3033 = vunpack.c.h.b16 %v2984
        %v3034 = vunpack.c.l.b16 %v2985
        %v3035 = vunpack.c.h.b16 %v2985
        %v3036 = vunpack.c.l.b16 %v2986
        %v3037 = vunpack.c.h.b16 %v2986
        %v3038 = vunpack.c.l.b16 %v2987
        %v3039 = vunpack.c.h.b16 %v2987
        %v3040 = vunpack.c.l.b16 %v2988
        %v3041 = vunpack.c.h.b16 %v2988
        %v3042 = vunpack.c.l.b16 %v2989
        %v3043 = vunpack.c.h.b16 %v2989
        %v3044 = vunpack.c.l.b16 %v2990
        %v3045 = vunpack.c.h.b16 %v2990
        %v3046 = vunpack.c.l.b16 %v2991
        %v3047 = vunpack.c.h.b16 %v2991
        %v3048 = vunpack.c.l.b16 %v2992
        %v3049 = vunpack.c.h.b16 %v2992
        %v3050 = vunpack.c.l.b16 %v2993
        %v3051 = vunpack.c.h.b16 %v2993
        %v3052 = vunpack.c.l.b16 %v2994
        %v3053 = vunpack.c.h.b16 %v2994
        %v3054 = vunpack.c.l.b16 %v2995
        %v3055 = vunpack.c.h.b16 %v2995
        %v3056 = vunpack.c.l.b16 %v2996
        %v3057 = vunpack.c.h.b16 %v2996
        %v3058 = vunpack.c.l.b16 %v2997
        %v3059 = vunpack.c.h.b16 %v2997
        %v3060 = vpack.c.b16 %v3030, %v3028
        %v3061 = vpack.c.b16 %v3031, %v3029
        %v3062 = vpack.c.b16 %v3034, %v3032
        %v3063 = vpack.c.b16 %v3035, %v3033
        %v3064 = vpack.c.b16 %v3038, %v3036
        %v3065 = vpack.c.b16 %v3039, %v3037
        %v3066 = vpack.c.b16 %v3042, %v3040
        %v3067 = vpack.c.b16 %v3043, %v3041
        %v3068 = vpack.c.b16 %v3046, %v3044
        %v3069 = vpack.c.b16 %v3047, %v3045
        %v3070 = vpack.c.b16 %v3050, %v3048
        %v3071 = vpack.c.b16 %v3051, %v3049
        %v3072 = vpack.c.b16 %v3054, %v3052
        %v3073 = vpack.c.b16 %v3055, %v3053
        %v3074 = vpack.c.b16 %v3058, %v3056
        %v3075 = vpack.c.b16 %v3059, %v3057
        %3092 = vmatprep.subr.bf16.mxu0 %v3061
        %3093 = vmatpush1.bf16.msra.mxu0 %v3060
        %3094 = vmatprep.subr.bf16.mxu0 %v3063
        %3095 = vmatpush1.bf16.msra.mxu0 %v3062
        %3096 = vmatprep.subr.bf16.mxu0 %v3065
        %3097 = vmatpush1.bf16.msra.mxu0 %v3064
        %3098 = vmatprep.subr.bf16.mxu0 %v3067
        %3099 = vmatpush1.bf16.msra.mxu0 %v3066
        %3100 = vmatprep.subr.bf16.mxu0 %v3069
        %3101 = vmatpush1.bf16.msra.mxu0 %v3068
        %3102 = vmatprep.subr.bf16.mxu0 %v3071
        %3103 = vmatpush1.bf16.msra.mxu0 %v3070
        %3104 = vmatprep.subr.bf16.mxu0 %v3073
        %3105 = vmatpush1.bf16.msra.mxu0 %v3072
        %3106 = vmatprep.subr.bf16.mxu0 %v3075
        %3107 = vmatpush1.bf16.msra.mxu0 %v3074
        %3108 = vmatprep.subr.bf16.mxu0 0
        %3109 = vmatpush1.bf16.msra.mxu0 0
        %3110 = vmatprep.subr.bf16.mxu0 0
        %3111 = vmatpush1.bf16.msra.mxu0 0
        %3112 = vmatprep.subr.bf16.mxu0 0
        %3113 = vmatpush1.bf16.msra.mxu0 0
        %3114 = vmatprep.subr.bf16.mxu0 0
        %3115 = vmatpush1.bf16.msra.mxu0 0
        %3116 = vmatprep.subr.bf16.mxu0 0
        %3117 = vmatpush1.bf16.msra.mxu0 0
        %3118 = vmatprep.subr.bf16.mxu0 0
        %3119 = vmatpush1.bf16.msra.mxu0 0
        %3120 = vmatprep.subr.bf16.mxu0 0
        %3121 = vmatpush1.bf16.msra.mxu0 0
        %3122 = vmatprep.subr.bf16.mxu0 0
        %3123 = vmatpush1.bf16.msra.mxu0 0
        %3124 = vmatprep.mubr.bf16.mxu0 0
        %3125 = vmatmul.mubr.bf16.gmra.mrb[0].mxu0 %v3000
        %v3126 = vpop.f32.mrb[0].mxu0
        %v3127 = vadd.f32 %v3005, %v3126
        %v3128 = vpop.f32.mrb[0].mxu0
        %v3129 = vadd.f32 %v3009, %v3128
        %v3130 = vpop.f32.mrb[0].mxu0
        %v3131 = vpop.f32.mrb[0].mxu0
        %3132 = vdwg.mxu0
        %v3133 = vmul.f32 %v3127, 0.5
        %v3134 = vmul.f32 %v3129, 0.5
        %v3135 = vmul.f32 %v3127, 0.044715
        %v3136 = vmul.f32 %v3129, 0.044715
        %v3137 = vmul.f32 %v3135, %v3127
        %v3138 = vmul.f32 %v3136, %v3129
        %v3139 = vmul.f32 %v3137, %v3127
        %v3140 = vmul.f32 %v3138, %v3129
        %v3141 = vadd.f32 %v3127, %v3139
        %v3142 = vadd.f32 %v3129, %v3140
        %v3143 = vmul.f32 %v3141, 0.7978846
        %v3144 = vmul.f32 %v3142, 0.7978846
        %v3145 = vtanh.pop %v3143
        %v3146 = vtanh.pop %v3144
        %v3147 = vadd.f32 %v3145, 1.0
        %v3148 = vadd.f32 %v3146, 1.0
        %v3149 = vmul.f32 %v3133, %v3147
        %v3150 = vmul.f32 %v3134, %v3148
        %s3151 = scalar_lea.vmem %s11, 128
        %v3152 = vld [vmem:[%s3151] sm:$0xf]
        %v3153 = vld [vmem:[%s3151 + $0x4] sm:$0xf]
        %v3154 = vld [vmem:[%s3151 + $0x8] sm:$0xf]
        %v3155 = vld [vmem:[%s3151 + $0xc] sm:$0xf]
        %v3156 = vld [vmem:[%s3151 + $0x10] sm:$0xf]
        %v3157 = vld [vmem:[%s3151 + $0x14] sm:$0xf]
        %v3158 = vld [vmem:[%s3151 + $0x18] sm:$0xf]
        %v3159 = vld [vmem:[%s3151 + $0x1c] sm:$0xf]
        %v3160 = vld [vmem:[%s3151 + $0x20] sm:$0xf]
        %v3161 = vld [vmem:[%s3151 + $0x24] sm:$0xf]
        %v3162 = vld [vmem:[%s3151 + $0x28] sm:$0xf]
        %v3163 = vld [vmem:[%s3151 + $0x2c] sm:$0xf]
        %v3164 = vld [vmem:[%s3151 + $0x30] sm:$0xf]
        %v3165 = vld [vmem:[%s3151 + $0x34] sm:$0xf]
        %v3166 = vld [vmem:[%s3151 + $0x38] sm:$0xf]
        %v3167 = vld [vmem:[%s3151 + $0x3c] sm:$0xf]
        %v3168 = vld [vmem:[%s3151 + $0x40] sm:$0xf]
        %v3169 = vld [vmem:[%s3151 + $0x44] sm:$0xf]
        %v3170 = vld [vmem:[%s3151 + $0x48] sm:$0xf]
        %v3171 = vld [vmem:[%s3151 + $0x4c] sm:$0xf]
        %v3172 = vld [vmem:[%s3151 + $0x50] sm:$0xf]
        %v3173 = vld [vmem:[%s3151 + $0x54] sm:$0xf]
        %v3174 = vld [vmem:[%s3151 + $0x58] sm:$0xf]
        %v3175 = vld [vmem:[%s3151 + $0x5c] sm:$0xf]
        %v3176 = vld [vmem:[%s3151 + $0x60] sm:$0xf]
        %v3177 = vld [vmem:[%s3151 + $0x64] sm:$0xf]
        %v3178 = vld [vmem:[%s3151 + $0x68] sm:$0xf]
        %v3179 = vld [vmem:[%s3151 + $0x6c] sm:$0xf]
        %v3180 = vld [vmem:[%s3151 + $0x70] sm:$0xf]
        %v3181 = vld [vmem:[%s3151 + $0x74] sm:$0xf]
        %v3182 = vld [vmem:[%s3151 + $0x78] sm:$0xf]
        %v3183 = vld [vmem:[%s3151 + $0x7c] sm:$0xf]
        %s3184 = scalar_lea.vmem %s12, 1
        %v3185 = vld [vmem:[%s3184] sm:$0x1]
        %v3186 = vpack.c.bf16 %v3149, %v3149
        %v3187 = vpack.c.bf16 %v3150, %v3150
        %v3189 = vlaneseq
        %v3190 = vshrl.u32 %v3189, 7
        %v3191 = vsub.s32 0, %v3190
        %v3192 = vrot.slane %v3185, %v3191
        %v3226 = vunpack.c.l.b16 %v3152
        %v3227 = vunpack.c.l.b16 %v3153
        %v3228 = vunpack.c.l.b16 %v3154
        %v3229 = vunpack.c.l.b16 %v3155
        %v3230 = vunpack.c.l.b16 %v3156
        %v3231 = vunpack.c.l.b16 %v3157
        %v3232 = vunpack.c.l.b16 %v3158
        %v3233 = vunpack.c.l.b16 %v3159
        %v3234 = vunpack.c.l.b16 %v3160
        %v3235 = vunpack.c.l.b16 %v3161
        %v3236 = vunpack.c.l.b16 %v3162
        %v3237 = vunpack.c.l.b16 %v3163
        %v3238 = vunpack.c.l.b16 %v3164
        %v3239 = vunpack.c.l.b16 %v3165
        %v3240 = vunpack.c.l.b16 %v3166
        %v3241 = vunpack.c.l.b16 %v3167
        %v3242 = vunpack.c.l.b16 %v3168
        %v3243 = vunpack.c.l.b16 %v3169
        %v3244 = vunpack.c.l.b16 %v3170
        %v3245 = vunpack.c.l.b16 %v3171
        %v3246 = vunpack.c.l.b16 %v3172
        %v3247 = vunpack.c.l.b16 %v3173
        %v3248 = vunpack.c.l.b16 %v3174
        %v3249 = vunpack.c.l.b16 %v3175
        %v3250 = vunpack.c.l.b16 %v3176
        %v3251 = vunpack.c.l.b16 %v3177
        %v3252 = vunpack.c.l.b16 %v3178
        %v3253 = vunpack.c.l.b16 %v3179
        %v3254 = vunpack.c.l.b16 %v3180
        %v3255 = vunpack.c.l.b16 %v3181
        %v3256 = vunpack.c.l.b16 %v3182
        %v3257 = vunpack.c.l.b16 %v3183
        %v3258 = vpack.c.b16 %v3227, %v3226
        %v3259 = vpack.c.b16 %v3229, %v3228
        %v3260 = vpack.c.b16 %v3231, %v3230
        %v3261 = vpack.c.b16 %v3233, %v3232
        %v3262 = vpack.c.b16 %v3235, %v3234
        %v3263 = vpack.c.b16 %v3237, %v3236
        %v3264 = vpack.c.b16 %v3239, %v3238
        %v3265 = vpack.c.b16 %v3241, %v3240
        %v3266 = vpack.c.b16 %v3243, %v3242
        %v3267 = vpack.c.b16 %v3245, %v3244
        %v3268 = vpack.c.b16 %v3247, %v3246
        %v3269 = vpack.c.b16 %v3249, %v3248
        %v3270 = vpack.c.b16 %v3251, %v3250
        %v3271 = vpack.c.b16 %v3253, %v3252
        %v3272 = vpack.c.b16 %v3255, %v3254
        %v3273 = vpack.c.b16 %v3257, %v3256
        %3290 = vmatprep.subr.bf16.mxu0 0
        %3291 = vmatpush1.bf16.msra.mxu0 %v3258
        %3292 = vmatprep.subr.bf16.mxu0 0
        %3293 = vmatpush1.bf16.msra.mxu0 %v3259
        %3294 = vmatprep.subr.bf16.mxu0 0
        %3295 = vmatpush1.bf16.msra.mxu0 %v3260
        %3296 = vmatprep.subr.bf16.mxu0 0
        %3297 = vmatpush1.bf16.msra.mxu0 %v3261
        %3298 = vmatprep.subr.bf16.mxu0 0
        %3299 = vmatpush1.bf16.msra.mxu0 %v3262
        %3300 = vmatprep.subr.bf16.mxu0 0
        %3301 = vmatpush1.bf16.msra.mxu0 %v3263
        %3302 = vmatprep.subr.bf16.mxu0 0
        %3303 = vmatpush1.bf16.msra.mxu0 %v3264
        %3304 = vmatprep.subr.bf16.mxu0 0
        %3305 = vmatpush1.bf16.msra.mxu0 %v3265
        %3306 = vmatprep.subr.bf16.mxu0 0
        %3307 = vmatpush1.bf16.msra.mxu0 %v3266
        %3308 = vmatprep.subr.bf16.mxu0 0
        %3309 = vmatpush1.bf16.msra.mxu0 %v3267
        %3310 = vmatprep.subr.bf16.mxu0 0
        %3311 = vmatpush1.bf16.msra.mxu0 %v3268
        %3312 = vmatprep.subr.bf16.mxu0 0
        %3313 = vmatpush1.bf16.msra.mxu0 %v3269
        %3314 = vmatprep.subr.bf16.mxu0 0
        %3315 = vmatpush1.bf16.msra.mxu0 %v3270
        %3316 = vmatprep.subr.bf16.mxu0 0
        %3317 = vmatpush1.bf16.msra.mxu0 %v3271
        %3318 = vmatprep.subr.bf16.mxu0 0
        %3319 = vmatpush1.bf16.msra.mxu0 %v3272
        %3320 = vmatprep.subr.bf16.mxu0 0
        %3321 = vmatpush1.bf16.msra.mxu0 %v3273
        %3322 = vmatprep.mubr.bf16.mxu0 %v3187
        %3323 = vmatmul.mubr.bf16.gmra.mrb[0].mxu0 %v3186
        %v3324 = vpop.f32.mrb[0].mxu0
        %v3325 = vadd.f32 %v3192, %v3324
        %v3326 = vpop.f32.mrb[0].mxu0
        %v3327 = vpop.f32.mrb[0].mxu0
        %v3328 = vpop.f32.mrb[0].mxu0
        %3329 = vdwg.mxu0
        %v3330 = vadd.f32 %v2951, %v3325
        %v3331 = vld [vmem:[%s13] sm:$0x1]
        %v3332 = vld [vmem:[%s14] sm:$0x1]
        %3333 = vadd.xlane.f32.xlu0 %v3330
        %v3334 = vpop.xlane.xlu0 %3333
        %v3335 = vmul.f32 %v3334, %v1073
        %v3336 = vsub.f32 %v3330, %v3335
        %v3337 = vmul.f32 %v3336, %v3336
        %3338 = vadd.xlane.f32.xlu0 %v3337
        %v3339 = vpop.xlane.xlu0 %3338
        %v3340 = vmul.f32 %v3339, %v1073
        %v3341 = vadd.f32 %v3340, 1e-05
        %v3342 = vrsqrt.pop %v3341
        %v3343 = vmul.f32 %v3336, %v3342
        %v3345 = vlaneseq
        %v3346 = vshrl.u32 %v3345, 7
        %v3347 = vsub.s32 0, %v3346
        %v3348 = vrot.slane %v3331, %v3347
        %v3350 = vmul.f32 %v3343, %v3348
        %v3352 = vlaneseq
        %v3353 = vshrl.u32 %v3352, 7
        %v3354 = vsub.s32 0, %v3353
        %v3355 = vrot.slane %v3332, %v3354
        %v3357 = vadd.f32 %v3350, %v3355
        %v3358 = vld [vmem:[%s15] sm:$0xf]
        %v3359 = vld [vmem:[%s15 + $0x4] sm:$0xf]
        %v3360 = vld [vmem:[%s15 + $0x8] sm:$0xf]
        %v3361 = vld [vmem:[%s15 + $0xc] sm:$0xf]
        %v3362 = vld [vmem:[%s15 + $0x10] sm:$0xf]
        %v3363 = vld [vmem:[%s15 + $0x14] sm:$0xf]
        %v3364 = vld [vmem:[%s15 + $0x18] sm:$0xf]
        %v3365 = vld [vmem:[%s15 + $0x1c] sm:$0xf]
        %v3366 = vld [vmem:[%s15 + $0x20] sm:$0xf]
        %v3367 = vld [vmem:[%s15 + $0x24] sm:$0xf]
        %v3368 = vld [vmem:[%s15 + $0x28] sm:$0xf]
        %v3369 = vld [vmem:[%s15 + $0x2c] sm:$0xf]
        %v3370 = vld [vmem:[%s15 + $0x30] sm:$0xf]
        %v3371 = vld [vmem:[%s15 + $0x34] sm:$0xf]
        %v3372 = vld [vmem:[%s15 + $0x38] sm:$0xf]
        %v3373 = vld [vmem:[%s15 + $0x3c] sm:$0xf]
        %v3374 = vld [vmem:[%s16] sm:$0x1]
        %v3375 = vpack.c.bf16 %v3357, %v3357
        %v3392 = vunpack.c.l.b16 %v3358
        %v3393 = vunpack.c.l.b16 %v3359
        %v3394 = vunpack.c.l.b16 %v3360
        %v3395 = vunpack.c.l.b16 %v3361
        %v3396 = vunpack.c.l.b16 %v3362
        %v3397 = vunpack.c.l.b16 %v3363
        %v3398 = vunpack.c.l.b16 %v3364
        %v3399 = vunpack.c.l.b16 %v3365
        %v3400 = vunpack.c.l.b16 %v3366
        %v3401 = vunpack.c.l.b16 %v3367
        %v3402 = vunpack.c.l.b16 %v3368
        %v3403 = vunpack.c.l.b16 %v3369
        %v3404 = vunpack.c.l.b16 %v3370
        %v3405 = vunpack.c.l.b16 %v3371
        %v3406 = vunpack.c.l.b16 %v3372
        %v3407 = vunpack.c.l.b16 %v3373
        %v3408 = vpack.c.b16 %v3393, %v3392
        %v3409 = vpack.c.b16 %v3395, %v3394
        %v3410 = vpack.c.b16 %v3397, %v3396
        %v3411 = vpack.c.b16 %v3399, %v3398
        %v3412 = vpack.c.b16 %v3401, %v3400
        %v3413 = vpack.c.b16 %v3403, %v3402
        %v3414 = vpack.c.b16 %v3405, %v3404
        %v3415 = vpack.c.b16 %v3407, %v3406
        %3424 = vmatprep.subr.bf16.mxu0 0
        %3425 = vmatpush1.bf16.msra.mxu0 %v3408
        %3426 = vmatprep.subr.bf16.mxu0 0
        %3427 = vmatpush1.bf16.msra.mxu0 %v3409
        %3428 = vmatprep.subr.bf16.mxu0 0
        %3429 = vmatpush1.bf16.msra.mxu0 %v3410
        %3430 = vmatprep.subr.bf16.mxu0 0
        %3431 = vmatpush1.bf16.msra.mxu0 %v3411
        %3432 = vmatprep.subr.bf16.mxu0 0
        %3433 = vmatpush1.bf16.msra.mxu0 %v3412
        %3434 = vmatprep.subr.bf16.mxu0 0
        %3435 = vmatpush1.bf16.msra.mxu0 %v3413
        %3436 = vmatprep.subr.bf16.mxu0 0
        %3437 = vmatpush1.bf16.msra.mxu0 %v3414
        %3438 = vmatprep.subr.bf16.mxu0 0
        %3439 = vmatpush1.bf16.msra.mxu0 %v3415
        %3440 = vmatprep.subr.bf16.mxu0 0
        %3441 = vmatpush1.bf16.msra.mxu0 0
        %3442 = vmatprep.subr.bf16.mxu0 0
        %3443 = vmatpush1.bf16.msra.mxu0 0
        %3444 = vmatprep.subr.bf16.mxu0 0
        %3445 = vmatpush1.bf16.msra.mxu0 0
        %3446 = vmatprep.subr.bf16.mxu0 0
        %3447 = vmatpush1.bf16.msra.mxu0 0
        %3448 = vmatprep.subr.bf16.mxu0 0
        %3449 = vmatpush1.bf16.msra.mxu0 0
        %3450 = vmatprep.subr.bf16.mxu0 0
        %3451 = vmatpush1.bf16.msra.mxu0 0
        %3452 = vmatprep.subr.bf16.mxu0 0
        %3453 = vmatpush1.bf16.msra.mxu0 0
        %3454 = vmatprep.subr.bf16.mxu0 0
        %3455 = vmatpush1.bf16.msra.mxu0 0
        %3456 = vmatprep.mubr.bf16.mxu0 0
        %3457 = vmatmul.mubr.bf16.gmra.mrb[0].mxu0 %v3375
        %v3458 = vpop.f32.mrb[0].mxu0
        %v3459 = vadd.f32 %v3374, %v3458
        %v3460 = vpop.f32.mrb[0].mxu0
        %v3461 = vpop.f32.mrb[0].mxu0
        %v3462 = vpop.f32.mrb[0].mxu0
        %3463 = vdwg.mxu0
        %3464 = vst [vmem:[%s540] sm:$0x1] %v3459
        %s3465 = sand.u32 %s401, 1
        %s3466 = scalar_lea.sflag [#allocation3], %s3465
        %s3467 = sand.u32 %s401, 1
        %s3468 = scalar_lea.vmem [#allocation2], %s3467
        // Predicated region
        $region89: #{vit_forward.1} parent=87 // pred_check
          %p3469 = pneg %p411
        $region90: #{vit_forward.1} parent=87 // pred_check_branch
          %3471 = sbr.rel (%p3469) target = $region92
        $region91: #{vit_forward.1} parent=87 // pred_region
          %s3473 = ssub.s32 16, 16
          %3474 = vsyncadd %s3466, %s3473
          %s3475 = smul.addr %s31, 16
          %s3476 = scalar_lea.hbm %s17, %s3475
          %s3478 = sshll.u32 %s3468, 4
          %s3479 = int_to_ptr.vmem [resolvable:$true] %s3478
          %3481 = dma.vmem_to_hbm [thread:$0]  %s3479, 16, %s3476, %s3466
        $region92: #{vit_forward.1} parent=87 // pred_fallthru
          _
      $region88: #{vit_forward.1} parent=5 // pred_fallthru
        _
      %p3482 = scmp.le.s32.totalorder 2, %s26
      // Predicated region
      $region93: #{vit_forward.1} parent=5 // pred_check
        %p3483 = pneg %p3482
      $region94: #{vit_forward.1} parent=5 // pred_check_branch
        %3485 = sbr.rel (%p3483) target = $region96
      $region95: #{vit_forward.1} parent=5 // pred_region
        %s3486 = ssub.s32 %s26, 2
        // Predicated region
        $region97: #{vit_forward.1} parent=95 // pred_check
          %p3487 = pneg %p417
        $region98: #{vit_forward.1} parent=95 // pred_check_branch
          %3489 = sbr.rel (%p3487) target = $region100
        $region99: #{vit_forward.1} parent=95 // pred_region
          %s3490 = sand.u32 %s402, 1
          %s3491 = scalar_lea.sflag [#allocation3], %s3490
          %s3492 = sand.u32 %s402, 1
          %s3493 = scalar_lea.vmem [#allocation2], %s3492
          %3494 = dma.done %s3491, 16
        $region100: #{vit_forward.1} parent=95 // pred_fallthru
          _
      $region96: #{vit_forward.1} parent=5 // pred_fallthru
        _
    $region6: #{vit_forward.1} parent=1 // loop_footer
      %s30 = sadd.s32 1, %s26
    $region7: #{vit_forward.1} parent=1 // loop_footer_branch
      %25 = sbr.rel target = $region3
    $region8: #{vit_forward.1} parent=1 // loop_exit
      _
    %3495 = vsyncpa [#allocation3], 1
    %s3496 = scalar_lea.sflag [#allocation3], 1
    %3497 = vsyncpa %s3496, 1

</llo_original>
